<compile_context>
chip_gen: v7x
topology: tpu7x:2x2x1
jax: 0.10.0
libtpu: 0.0.40
codegen_flags: <defaults>
</compile_context>

<pallas_src>
import functools

import jax
import jax.numpy as jnp
import numpy as np
from jax.experimental import pallas as pl
from jax.experimental.pallas import tpu as pltpu


def _round_up(x, m):
    return ((x + m - 1) // m) * m


# ----------------------------- Pallas kernel --------------------------------
def hier_head_kernel(pooled_ref, wf_ref, bf_ref, w2_ref, b2_ref, lab_ref,
                     vis_ref, bbox_ref, score_ref, prob_ref, acc_ref,
                     *, n_labels):
    """One (row tile, K tile) grid step of the _HierRCNN head.

    grid = (row_tiles, k_tiles); K (the feature dim of pooled_feat) is the
    reduction ("arbitrary") axis.  acc_ref is a (TR, H + B4P) f32 accumulator
    that persists across the K steps of a row tile.
    """
    k = pl.program_id(1)
    nk = pl.num_programs(1)
    H = w2_ref.shape[0]
    TR, LPAD = score_ref.shape

    @pl.when(k == 0)
    def _():
        acc_ref[...] = jnp.zeros_like(acc_ref)

    # In-place ReLU of pooled_feat (order_embedding's first nn.ReLU(inplace=True)):
    # both Linear1 and RCNN_bbox_pred see the ReLU'd features, as in the module.
    x = jnp.maximum(pooled_ref[...], 0)                               # (TR, TK) bf16
    # Fused [order_embedding.Linear1 | RCNN_bbox_pred] matmul: bf16 MXU, f32 acc.
    acc_ref[...] += jnp.dot(x, wf_ref[...], preferred_element_type=jnp.float32)

    @pl.when(k == nk - 1)
    def _():
        z = acc_ref[...] + bf_ref[...]                                # (TR, H+B4P) f32
        h = jnp.maximum(z[:, :H], 0.0)                                # (TR, H)
        bbox_ref[...] = z[:, H:]                                      # lane-dense store

        # order_embedding.Linear2 (Dropout is identity at inference)
        vis = jnp.dot(h.astype(jnp.bfloat16), w2_ref[...],
                      preferred_element_type=jnp.float32) + b2_ref[...]  # (TR, E) f32
        vis_ref[...] = vis

        # _OrderSimilarity: score[i, j] = -|| ReLU(lab[j] - vis[i]) ||_2.
        # Per-label (TR, E) slabs keep the live set bounded (no (TR, L, E)
        # monolith); the full (TR, LPAD) score is assembled in registers with
        # padded columns = -1e30, then stored once (single lane-dense vst).
        lab = lab_ref[...]                                            # (LPAD, E)
        col = jax.lax.broadcasted_iota(jnp.int32, (TR, LPAD), 1)
        score = jnp.full((TR, LPAD), -1e30, jnp.float32)
        # TODO(synk): for large label sets switch to a lax.fori_loop(unroll=True)
        # over label chunks instead of a fully unrolled static loop.
        for j in range(n_labels):
            sub = jnp.maximum(lab[j:j + 1, :] - vis, 0.0)             # (TR, E)
            d_j = jnp.sqrt(jnp.sum(sub * sub, axis=-1, keepdims=True))  # (TR, 1)
            score = jnp.where(col == j, -d_j, score)
        score_ref[...] = score                                        # one dense store

        # softmax over labels, computed on the in-register score (f32)
        m = jnp.max(score, axis=-1, keepdims=True)
        e = jnp.exp(score - m)
        s = jnp.sum(e, axis=-1, keepdims=True)
        prob_ref[...] = e / s        # exact divide: rows sum to 1 (PyTorch parity)


# --------------------------- one-time weight prep ----------------------------
def prepare_head_params(w1, b1, w2, b2, wb, bb, label_vecs, *, k_tile=512):
    """Pad / fuse / cast the head weights once, hoisted out of the per-forward
    path (at production D = HID = 4096 redoing this per forward is ~100 MiB of
    extra HBM traffic)."""
    f32, bf16 = jnp.float32, jnp.bfloat16
    D, H = w1.shape
    E = w2.shape[1]
    B4 = wb.shape[1]
    L = label_vecs.shape[0]
    assert H % 128 == 0, "hidden dim must be lane-aligned for the fused-matmul split"

    B4P = _round_up(B4, 128)
    LPAD = _round_up(L, 128)
    TK = min(k_tile, _round_up(D, 128))
    KP = _round_up(D, TK)

    wb_p = jnp.pad(wb, ((0, 0), (0, B4P - B4)))
    bb_p = jnp.pad(bb, ((0, 0), (0, B4P - B4)))
    w_fused = jnp.pad(jnp.concatenate([w1, wb_p], axis=1),
                      ((0, KP - D), (0, 0))).astype(bf16)              # (KP, H+B4P)
    b_fused = jnp.concatenate([b1, bb_p], axis=1).astype(f32)          # (1, H+B4P)
    lab_p = jnp.pad(label_vecs.astype(f32), ((0, LPAD - L), (0, 0)))   # (LPAD, E)

    return dict(w_fused=w_fused, b_fused=b_fused,
                w2=w2.astype(bf16), b2=b2.astype(f32), lab=lab_p,
                D=D, KP=KP, TK=TK, H=H, E=E, L=L, LPAD=LPAD, B4=B4, B4P=B4P)


# ------------------------------ head wrapper ---------------------------------
def hier_head(pooled_feat, fp, *, row_tile=128):
    """Row/K-tiled Pallas call.  pooled_feat: (R, D) bf16 (cast fused upstream).
    Small weights (W2, biases, labels) stay resident; pooled rows, the fused
    weight K-blocks and the four outputs are pipelined over the grid."""
    f32 = jnp.float32
    R, D = pooled_feat.shape
    assert D == fp["D"]
    H, E, L = fp["H"], fp["E"], fp["L"]
    LPAD, B4, B4P = fp["LPAD"], fp["B4"], fp["B4P"]
    TK, KP = fp["TK"], fp["KP"]
    NF = H + B4P

    # TODO(synk): raise row_tile to 256 on v6e/v7x (256-wide MXU M side); 128 is
    # the safe default for v5e.
    TR = row_tile if R >= row_tile else _round_up(R, 8)
    RP = _round_up(R, TR)

    pooled_p = pooled_feat
    if RP != R or KP != D:
        pooled_p = jnp.pad(pooled_feat, ((0, RP - R), (0, KP - D)))

    grid = (RP // TR, KP // TK)

    out_shapes = (
        jax.ShapeDtypeStruct((RP, E), f32),      # vis_embedding
        jax.ShapeDtypeStruct((RP, B4P), f32),    # bbox_pred (lane padded)
        jax.ShapeDtypeStruct((RP, LPAD), f32),   # cls_score (lane padded)
        jax.ShapeDtypeStruct((RP, LPAD), f32),   # cls_prob  (lane padded)
    )

    row_spec = lambda cols: pl.BlockSpec((TR, cols), lambda i, k: (i, 0))
    const_spec = lambda shape: pl.BlockSpec(shape, lambda i, k: (0, 0))

    # Explicit VMEM budget: double-buffered streamed blocks + resident weights
    # + the f32 accumulator, with headroom for internal scratch.
    streamed = 2 * (TR * TK * 2 + TK * NF * 2
                    + TR * E * 4 + TR * B4P * 4 + 2 * TR * LPAD * 4)
    resident = 2 * (NF * 4 + H * E * 2 + E * 4 + LPAD * E * 4) + TR * NF * 4
    vmem_limit = int(min(100 << 20, max(32 << 20, streamed + resident + (16 << 20))))

    kernel = functools.partial(hier_head_kernel, n_labels=L)

    vis, bbox, score, prob = pl.pallas_call(
        kernel,
        out_shape=out_shapes,
        grid=grid,
        in_specs=[
            pl.BlockSpec((TR, TK), lambda i, k: (i, k)),   # pooled rows (bf16)
            pl.BlockSpec((TK, NF), lambda i, k: (k, 0)),   # fused [W1|W_bbox], streamed over K
            const_spec((1, NF)),     # fused bias (f32, resident)
            const_spec((H, E)),      # W2 (bf16, resident)
            const_spec((1, E)),      # b2
            const_spec((LPAD, E)),   # padded label vectors
        ],
        out_specs=[row_spec(E), row_spec(B4P), row_spec(LPAD), row_spec(LPAD)],
        scratch_shapes=[pltpu.VMEM((TR, NF), f32)],        # K-reduction accumulator
        compiler_params=pltpu.CompilerParams(
            dimension_semantics=("parallel", "arbitrary"),  # R shards across TCs
            vmem_limit_bytes=vmem_limit),
    )(pooled_p, fp["w_fused"], fp["b_fused"], fp["w2"], fp["b2"], fp["lab"])

    return vis[:R], bbox[:R, :B4], score[:R, :L], prob[:R, :L]


# --------------------------- module wrapper (glue) ---------------------------
def hier_rcnn_forward(im_data, im_info, gt_boxes, num_boxes, params, head_params,
                      rois_per_img):
    """Inference-mode forward (self.training == False)."""
    batch_size = im_data.shape[0]

    # TODO(synk): RCNN_base backbone + _RPN + RoI pooling/align/crop + _head_to_tail
    # have no clean Pallas equivalent here; stand in with a deterministic projection
    # of the flattened image so the head kernel receives an (R, D) pooled feature of
    # the right shape.  The bf16 cast is fused into this producer (no standalone
    # wrapper cast pass over pooled_feat).
    flat = im_data.reshape(batch_size, -1)                            # (B, C*H*W)
    img_feat = flat @ params["w_proj"]                                # (B, D)
    pooled_feat = ((img_feat[:, None, :] + params["roi_offsets"][None, :, :])
                   .reshape(batch_size * rois_per_img, -1)
                   .astype(jnp.bfloat16))                             # (R, D) bf16

    # TODO(synk): rois would come from the RPN; emit deterministic dummy boxes.
    rois = jnp.tile(jnp.array([0.0, 1.0, 1.0, 8.0, 8.0], jnp.float32),
                    (batch_size, rois_per_img, 1))

    vis_embedding, bbox_pred, cls_score, cls_prob = hier_head(pooled_feat, head_params)

    # inference: no proposal-target / gather / losses
    cls_prob = cls_prob.reshape(batch_size, rois_per_img, -1)
    bbox_pred = bbox_pred.reshape(batch_size, rois_per_img, -1)

    rpn_loss_cls = 0.0
    rpn_loss_bbox = 0.0
    RCNN_loss_cls = 0.0
    RCNN_loss_bbox = 0.0
    rois_label = None
    return (rois, cls_prob, bbox_pred, rpn_loss_cls, rpn_loss_bbox,
            RCNN_loss_cls, RCNN_loss_bbox, rois_label, cls_score, vis_embedding)


# ------------------------------- reference -----------------------------------
def reference_head(pooled_bf16, p):
    """Pure-JAX reference with the same bf16-operand / f32-accumulate matmuls."""
    bf16, f32 = jnp.bfloat16, jnp.float32
    x = jnp.maximum(pooled_bf16, 0).astype(bf16)
    h = jnp.maximum(
        jnp.dot(x, p["w1"].astype(bf16), preferred_element_type=f32) + p["b1"], 0.0)
    vis = jnp.dot(h.astype(bf16), p["w2"].astype(bf16),
                  preferred_element_type=f32) + p["b2"]
    bbox = jnp.dot(x, p["wb"].astype(bf16), preferred_element_type=f32) + p["bb"]
    sub = jnp.maximum(p["label_vecs"][None, :, :] - vis[:, None, :], 0.0)
    score = -jnp.sqrt(jnp.sum(sub * sub, axis=-1))
    prob = jax.nn.softmax(score, axis=-1)
    return vis, bbox, score, prob


# --------------------------------- main ---------------------------------------
if __name__ == "__main__":
    # small, module-consistent shapes
    B, C, Himg, Wimg = 2, 4, 16, 16        # im_data (NCHW)
    rois_per_img = 128
    R = B * rois_per_img                   # total rois (-> 2 row tiles of 128)
    D = 256                                # stand-in for the 4096 head dim
    HID = 256                              # order_embedding hidden (4096 -> 4096)
    E = 128                                # cfg.HIER.EMBEDDING_LENGTH stand-in
    L = 8                                  # number of hierarchy labels / classes
    class_agnostic = False
    B4 = 4 if class_agnostic else 4 * L

    key = jax.random.PRNGKey(0)
    keys = jax.random.split(key, 12)

    im_data = jax.random.normal(keys[0], (B, C, Himg, Wimg), jnp.float32)
    im_info = jnp.tile(jnp.array([Himg, Wimg, 1.0], jnp.float32), (B, 1))
    gt_boxes = jax.random.uniform(keys[1], (B, 4, 5), jnp.float32) * 8.0
    num_boxes = jnp.full((B,), 4, jnp.int32)

    params = {
        # deterministic "normal_init"-style weights (mean 0, std 0.01 / 0.001)
        "w1": 0.01 * jax.random.normal(keys[2], (D, HID), jnp.float32),
        "b1": jnp.zeros((1, HID), jnp.float32),
        "w2": 0.01 * jax.random.normal(keys[3], (HID, E), jnp.float32),
        "b2": jnp.zeros((1, E), jnp.float32),
        "wb": 0.001 * jax.random.normal(keys[4], (D, B4), jnp.float32),
        "bb": jnp.zeros((1, B4), jnp.float32),
        # stand-in for data/pretrained_model/label_vec_vrd.h5 (synthetic, deterministic)
        "label_vecs": jnp.abs(jax.random.normal(keys[5], (L, E), jnp.float32)),
        # glue params for the backbone stand-in
        "w_proj": 0.05 * jax.random.normal(keys[6], (C * Himg * Wimg, D), jnp.float32),
        "roi_offsets": 0.1 * jax.random.normal(keys[7], (rois_per_img, D), jnp.float32),
    }

    # One-time weight prep (hoisted out of the forward).  k_tile=128 forces a
    # 2-step K reduction at these small test shapes so the accumulator path is
    # actually exercised (production would use the default 512).
    head_params = prepare_head_params(
        params["w1"], params["b1"], params["w2"], params["b2"],
        params["wb"], params["bb"], params["label_vecs"], k_tile=128)

    outs = hier_rcnn_forward(im_data, im_info, gt_boxes, num_boxes, params,
                             head_params, rois_per_img)
    outs = jax.block_until_ready(outs)
    (rois, cls_prob, bbox_pred, _, _, _, _, _, cls_score, vis_embedding) = outs

    # correctness check against a pure-JAX reference of the same head
    flat = im_data.reshape(B, -1)
    pooled_ref = ((flat @ params["w_proj"])[:, None, :]
                  + params["roi_offsets"][None]).reshape(R, D).astype(jnp.bfloat16)
    vis_r, bbox_r, score_r, prob_r = reference_head(pooled_ref, params)

    np.testing.assert_allclose(np.asarray(vis_embedding), np.asarray(vis_r),
                               rtol=1e-2, atol=1e-3)
    np.testing.assert_allclose(np.asarray(bbox_pred.reshape(R, -1)),
                               np.asarray(bbox_r), rtol=1e-2, atol=1e-3)
    np.testing.assert_allclose(np.asarray(cls_score), np.asarray(score_r),
                               rtol=1e-2, atol=1e-3)
    np.testing.assert_allclose(np.asarray(cls_prob.reshape(R, -1)),
                               np.asarray(prob_r), rtol=1e-2, atol=1e-3)

    assert cls_prob.shape == (B, rois_per_img, L)
    assert bbox_pred.shape == (B, rois_per_img, B4)
    print("KERNEL_OK")
</pallas_src>

<mosaic_0001>
module attributes {stable_mosaic.version = 11 : i64} {
  func.func @hier_head_kernel(%arg0: i32, %arg1: i32, %arg2: memref<128x128xbf16, #tpu.memory_space<vmem>>, %arg3: memref<128x384xbf16, #tpu.memory_space<vmem>>, %arg4: memref<1x384xf32, #tpu.memory_space<vmem>>, %arg5: memref<256x128xbf16, #tpu.memory_space<vmem>>, %arg6: memref<1x128xf32, #tpu.memory_space<vmem>>, %arg7: memref<128x128xf32, #tpu.memory_space<vmem>>, %arg8: memref<128x128xf32, #tpu.memory_space<vmem>>, %arg9: memref<128x128xf32, #tpu.memory_space<vmem>>, %arg10: memref<128x128xf32, #tpu.memory_space<vmem>>, %arg11: memref<128x128xf32, #tpu.memory_space<vmem>>, %arg12: memref<128x384xf32, #tpu.memory_space<vmem>>) attributes {dimension_semantics = [#tpu.dimension_semantics<parallel>, #tpu.dimension_semantics<arbitrary>], iteration_bounds = array<i64: 2, 2>, scalar_prefetch = 0 : i64, scratch_operands = 1 : i64, tpu.core_type = #tpu.core_type<tc>, window_params = [{transform_indices = @transform_0, window_bounds = array<i64: 128, 128>}, {transform_indices = @transform_1, window_bounds = array<i64: 128, 384>}, {pipeline_mode = #tpu.pipeline_mode<synchronous>, transform_indices = @transform_2, window_bounds = array<i64: 1, 384>}, {pipeline_mode = #tpu.pipeline_mode<synchronous>, transform_indices = @transform_3, window_bounds = array<i64: 256, 128>}, {pipeline_mode = #tpu.pipeline_mode<synchronous>, transform_indices = @transform_4, window_bounds = array<i64: 1, 128>}, {pipeline_mode = #tpu.pipeline_mode<synchronous>, transform_indices = @transform_5, window_bounds = array<i64: 128, 128>}, {transform_indices = @transform_6, window_bounds = array<i64: 128, 128>}, {transform_indices = @transform_7, window_bounds = array<i64: 128, 128>}, {transform_indices = @transform_8, window_bounds = array<i64: 128, 128>}, {transform_indices = @transform_9, window_bounds = array<i64: 128, 128>}]} {
    %c0_i32 = arith.constant 0 : i32
    %0 = arith.cmpi eq, %arg1, %c0_i32 : i32
    %1 = arith.extui %0 : i1 to i32
    %c0_i32_0 = arith.constant 0 : i32
    %2 = arith.cmpi ne, %1, %c0_i32_0 : i32
    scf.if %2 {
      %cst_10 = arith.constant 0.000000e+00 : f32
      %14 = vector.broadcast %cst_10 : f32 to vector<128x384xf32>
      %c0_11 = arith.constant 0 : index
      %c0_12 = arith.constant 0 : index
      %15 = vector.load %arg12[%c0_11, %c0_12] : memref<128x384xf32, #tpu.memory_space<vmem>>, vector<128x384xf32>
      tpu.vector_store %arg12[%c0_11, %c0_12], %14 {strides = array<i32>} : memref<128x384xf32, #tpu.memory_space<vmem>>, vector<128x384xf32>,
    } else {
    }
    %c0 = arith.constant 0 : index
    %c0_1 = arith.constant 0 : index
    %3 = vector.load %arg2[%c0, %c0_1] : memref<128x128xbf16, #tpu.memory_space<vmem>>, vector<128x128xbf16>
    %cst = arith.constant 0.000000e+00 : bf16
    %4 = vector.broadcast %cst : bf16 to vector<128x128xbf16>
    %5 = arith.maximumf %3, %4 : vector<128x128xbf16>
    %c0_2 = arith.constant 0 : index
    %c0_3 = arith.constant 0 : index
    %6 = vector.load %arg12[%c0_2, %c0_3] : memref<128x384xf32, #tpu.memory_space<vmem>>, vector<128x384xf32>
    %c0_4 = arith.constant 0 : index
    %c0_5 = arith.constant 0 : index
    %7 = vector.load %arg3[%c0_4, %c0_5] : memref<128x384xbf16, #tpu.memory_space<vmem>>, vector<128x384xbf16>
    %cst_6 = arith.constant dense<0.000000e+00> : vector<128x384xf32>
    %8 = tpu.matmul %5, %7, %cst_6 {dimension_numbers = #tpu.dot_dimension_numbers<[1], [0], [0], [1], [0, 0, 1, 1], [], []>} : vector<128x128xbf16>, vector<128x384xbf16>, vector<128x384xf32> -> vector<128x384xf32>
    %9 = arith.addf %6, %8 : vector<128x384xf32>
    %c0_7 = arith.constant 0 : index
    %c0_8 = arith.constant 0 : index
    %10 = vector.load %arg12[%c0_7, %c0_8] : memref<128x384xf32, #tpu.memory_space<vmem>>, vector<128x384xf32>
    tpu.vector_store %arg12[%c0_7, %c0_8], %9 {strides = array<i32>} : memref<128x384xf32, #tpu.memory_space<vmem>>, vector<128x384xf32>,
    %c1_i32 = arith.constant 1 : i32
    %11 = arith.cmpi eq, %arg1, %c1_i32 : i32
    %12 = arith.extui %11 : i1 to i32
    %c0_i32_9 = arith.constant 0 : i32
    %13 = arith.cmpi ne, %12, %c0_i32_9 : i32
    scf.if %13 {
      %c0_10 = arith.constant 0 : index
      %c0_11 = arith.constant 0 : index
      %14 = vector.load %arg12[%c0_10, %c0_11] : memref<128x384xf32, #tpu.memory_space<vmem>>, vector<128x384xf32>
      %c0_12 = arith.constant 0 : index
      %c0_13 = arith.constant 0 : index
      %15 = vector.load %arg4[%c0_12, %c0_13] : memref<1x384xf32, #tpu.memory_space<vmem>>, vector<1x384xf32>
      %16 = vector.broadcast %15 : vector<1x384xf32> to vector<128x384xf32>
      %17 = arith.addf %14, %16 : vector<128x384xf32>
      %18 = vector.extract_strided_slice %17 {offsets = [0, 0], sizes = [128, 256], strides = [1, 1]} : vector<128x384xf32> to vector<128x256xf32>
      %cst_14 = arith.constant 0.000000e+00 : f32
      %19 = vector.broadcast %cst_14 : f32 to vector<128x256xf32>
      %20 = arith.maximumf %18, %19 : vector<128x256xf32>
      %21 = vector.extract_strided_slice %17 {offsets = [0, 256], sizes = [128, 128], strides = [1, 1]} : vector<128x384xf32> to vector<128x128xf32>
      %c0_15 = arith.constant 0 : index
      %c0_16 = arith.constant 0 : index
      %22 = vector.load %arg9[%c0_15, %c0_16] : memref<128x128xf32, #tpu.memory_space<vmem>>, vector<128x128xf32>
      tpu.vector_store %arg9[%c0_15, %c0_16], %21 {strides = array<i32>} : memref<128x128xf32, #tpu.memory_space<vmem>>, vector<128x128xf32>,
      %23 = arith.truncf %20 : vector<128x256xf32> to vector<128x256xbf16>
      %c0_17 = arith.constant 0 : index
      %c0_18 = arith.constant 0 : index
      %24 = vector.load %arg5[%c0_17, %c0_18] : memref<256x128xbf16, #tpu.memory_space<vmem>>, vector<256x128xbf16>
      %cst_19 = arith.constant dense<0.000000e+00> : vector<128x128xf32>
      %25 = tpu.matmul %23, %24, %cst_19 {dimension_numbers = #tpu.dot_dimension_numbers<[1], [0], [0], [1], [0, 0, 1, 1], [], []>} : vector<128x256xbf16>, vector<256x128xbf16>, vector<128x128xf32> -> vector<128x128xf32>
      %c0_20 = arith.constant 0 : index
      %c0_21 = arith.constant 0 : index
      %26 = vector.load %arg6[%c0_20, %c0_21] : memref<1x128xf32, #tpu.memory_space<vmem>>, vector<1x128xf32>
      %27 = vector.broadcast %26 : vector<1x128xf32> to vector<128x128xf32>
      %28 = arith.addf %25, %27 : vector<128x128xf32>
      %c0_22 = arith.constant 0 : index
      %c0_23 = arith.constant 0 : index
      %29 = vector.load %arg8[%c0_22, %c0_23] : memref<128x128xf32, #tpu.memory_space<vmem>>, vector<128x128xf32>
      tpu.vector_store %arg8[%c0_22, %c0_23], %28 {strides = array<i32>} : memref<128x128xf32, #tpu.memory_space<vmem>>, vector<128x128xf32>,
      %c0_24 = arith.constant 0 : index
      %c0_25 = arith.constant 0 : index
      %30 = vector.load %arg7[%c0_24, %c0_25] : memref<128x128xf32, #tpu.memory_space<vmem>>, vector<128x128xf32>
      %31 = tpu.iota {dimensions = array<i32: 1>} : vector<128x128xi32>
      %cst_26 = arith.constant -1.000000e+30 : f32
      %32 = vector.broadcast %cst_26 : f32 to vector<128x128xf32>
      %33 = vector.extract_strided_slice %30 {offsets = [0, 0], sizes = [1, 128], strides = [1, 1]} : vector<128x128xf32> to vector<1x128xf32>
      %34 = vector.broadcast %33 : vector<1x128xf32> to vector<128x128xf32>
      %35 = arith.subf %34, %28 : vector<128x128xf32>
      %cst_27 = arith.constant 0.000000e+00 : f32
      %36 = vector.broadcast %cst_27 : f32 to vector<128x128xf32>
      %37 = arith.maximumf %35, %36 : vector<128x128xf32>
      %38 = arith.mulf %37, %37 : vector<128x128xf32>
      %cst_28 = arith.constant dense<0.000000e+00> : vector<128xf32>
      %39 = vector.multi_reduction <add>, %38, %cst_28 [1] : vector<128x128xf32> to vector<128xf32>
      %40 = vector.shape_cast %39 : vector<128xf32> to vector<128x1xf32>
      %41 = math.sqrt %40 : vector<128x1xf32>
      %c0_i32_29 = arith.constant 0 : i32
      %42 = vector.broadcast %c0_i32_29 : i32 to vector<128x128xi32>
      %43 = arith.cmpi eq, %31, %42 : vector<128x128xi32>
      %cst_30 = arith.constant 0.000000e+00 : f32
      %44 = vector.broadcast %cst_30 : f32 to vector<128x1xf32>
      %45 = arith.subf %44, %41 : vector<128x1xf32>
      %46 = vector.shape_cast %45 : vector<128x1xf32> to vector<128x1xf32>
      %47 = vector.broadcast %46 : vector<128x1xf32> to vector<128x128xf32>
      %48 = arith.select %43, %47, %32 : vector<128x128xi1>, vector<128x128xf32>
      %49 = vector.extract_strided_slice %30 {offsets = [1, 0], sizes = [1, 128], strides = [1, 1]} : vector<128x128xf32> to vector<1x128xf32>
      %50 = vector.broadcast %49 : vector<1x128xf32> to vector<128x128xf32>
      %51 = arith.subf %50, %28 : vector<128x128xf32>
      %cst_31 = arith.constant 0.000000e+00 : f32
      %52 = vector.broadcast %cst_31 : f32 to vector<128x128xf32>
      %53 = arith.maximumf %51, %52 : vector<128x128xf32>
      %54 = arith.mulf %53, %53 : vector<128x128xf32>
      %cst_32 = arith.constant dense<0.000000e+00> : vector<128xf32>
      %55 = vector.multi_reduction <add>, %54, %cst_32 [1] : vector<128x128xf32> to vector<128xf32>
      %56 = vector.shape_cast %55 : vector<128xf32> to vector<128x1xf32>
      %57 = math.sqrt %56 : vector<128x1xf32>
      %c1_i32_33 = arith.constant 1 : i32
      %58 = vector.broadcast %c1_i32_33 : i32 to vector<128x128xi32>
      %59 = arith.cmpi eq, %31, %58 : vector<128x128xi32>
      %cst_34 = arith.constant 0.000000e+00 : f32
      %60 = vector.broadcast %cst_34 : f32 to vector<128x1xf32>
      %61 = arith.subf %60, %57 : vector<128x1xf32>
      %62 = vector.shape_cast %61 : vector<128x1xf32> to vector<128x1xf32>
      %63 = vector.broadcast %62 : vector<128x1xf32> to vector<128x128xf32>
      %64 = arith.select %59, %63, %48 : vector<128x128xi1>, vector<128x128xf32>
      %65 = vector.extract_strided_slice %30 {offsets = [2, 0], sizes = [1, 128], strides = [1, 1]} : vector<128x128xf32> to vector<1x128xf32>
      %66 = vector.broadcast %65 : vector<1x128xf32> to vector<128x128xf32>
      %67 = arith.subf %66, %28 : vector<128x128xf32>
      %cst_35 = arith.constant 0.000000e+00 : f32
      %68 = vector.broadcast %cst_35 : f32 to vector<128x128xf32>
      %69 = arith.maximumf %67, %68 : vector<128x128xf32>
      %70 = arith.mulf %69, %69 : vector<128x128xf32>
      %cst_36 = arith.constant dense<0.000000e+00> : vector<128xf32>
      %71 = vector.multi_reduction <add>, %70, %cst_36 [1] : vector<128x128xf32> to vector<128xf32>
      %72 = vector.shape_cast %71 : vector<128xf32> to vector<128x1xf32>
      %73 = math.sqrt %72 : vector<128x1xf32>
      %c2_i32 = arith.constant 2 : i32
      %74 = vector.broadcast %c2_i32 : i32 to vector<128x128xi32>
      %75 = arith.cmpi eq, %31, %74 : vector<128x128xi32>
      %cst_37 = arith.constant 0.000000e+00 : f32
      %76 = vector.broadcast %cst_37 : f32 to vector<128x1xf32>
      %77 = arith.subf %76, %73 : vector<128x1xf32>
      %78 = vector.shape_cast %77 : vector<128x1xf32> to vector<128x1xf32>
      %79 = vector.broadcast %78 : vector<128x1xf32> to vector<128x128xf32>
      %80 = arith.select %75, %79, %64 : vector<128x128xi1>, vector<128x128xf32>
      %81 = vector.extract_strided_slice %30 {offsets = [3, 0], sizes = [1, 128], strides = [1, 1]} : vector<128x128xf32> to vector<1x128xf32>
      %82 = vector.broadcast %81 : vector<1x128xf32> to vector<128x128xf32>
      %83 = arith.subf %82, %28 : vector<128x128xf32>
      %cst_38 = arith.constant 0.000000e+00 : f32
      %84 = vector.broadcast %cst_38 : f32 to vector<128x128xf32>
      %85 = arith.maximumf %83, %84 : vector<128x128xf32>
      %86 = arith.mulf %85, %85 : vector<128x128xf32>
      %cst_39 = arith.constant dense<0.000000e+00> : vector<128xf32>
      %87 = vector.multi_reduction <add>, %86, %cst_39 [1] : vector<128x128xf32> to vector<128xf32>
      %88 = vector.shape_cast %87 : vector<128xf32> to vector<128x1xf32>
      %89 = math.sqrt %88 : vector<128x1xf32>
      %c3_i32 = arith.constant 3 : i32
      %90 = vector.broadcast %c3_i32 : i32 to vector<128x128xi32>
      %91 = arith.cmpi eq, %31, %90 : vector<128x128xi32>
      %cst_40 = arith.constant 0.000000e+00 : f32
      %92 = vector.broadcast %cst_40 : f32 to vector<128x1xf32>
      %93 = arith.subf %92, %89 : vector<128x1xf32>
      %94 = vector.shape_cast %93 : vector<128x1xf32> to vector<128x1xf32>
      %95 = vector.broadcast %94 : vector<128x1xf32> to vector<128x128xf32>
      %96 = arith.select %91, %95, %80 : vector<128x128xi1>, vector<128x128xf32>
      %97 = vector.extract_strided_slice %30 {offsets = [4, 0], sizes = [1, 128], strides = [1, 1]} : vector<128x128xf32> to vector<1x128xf32>
      %98 = vector.broadcast %97 : vector<1x128xf32> to vector<128x128xf32>
      %99 = arith.subf %98, %28 : vector<128x128xf32>
      %cst_41 = arith.constant 0.000000e+00 : f32
      %100 = vector.broadcast %cst_41 : f32 to vector<128x128xf32>
      %101 = arith.maximumf %99, %100 : vector<128x128xf32>
      %102 = arith.mulf %101, %101 : vector<128x128xf32>
      %cst_42 = arith.constant dense<0.000000e+00> : vector<128xf32>
      %103 = vector.multi_reduction <add>, %102, %cst_42 [1] : vector<128x128xf32> to vector<128xf32>
      %104 = vector.shape_cast %103 : vector<128xf32> to vector<128x1xf32>
      %105 = math.sqrt %104 : vector<128x1xf32>
      %c4_i32 = arith.constant 4 : i32
      %106 = vector.broadcast %c4_i32 : i32 to vector<128x128xi32>
      %107 = arith.cmpi eq, %31, %106 : vector<128x128xi32>
      %cst_43 = arith.constant 0.000000e+00 : f32
      %108 = vector.broadcast %cst_43 : f32 to vector<128x1xf32>
      %109 = arith.subf %108, %105 : vector<128x1xf32>
      %110 = vector.shape_cast %109 : vector<128x1xf32> to vector<128x1xf32>
      %111 = vector.broadcast %110 : vector<128x1xf32> to vector<128x128xf32>
      %112 = arith.select %107, %111, %96 : vector<128x128xi1>, vector<128x128xf32>
      %113 = vector.extract_strided_slice %30 {offsets = [5, 0], sizes = [1, 128], strides = [1, 1]} : vector<128x128xf32> to vector<1x128xf32>
      %114 = vector.broadcast %113 : vector<1x128xf32> to vector<128x128xf32>
      %115 = arith.subf %114, %28 : vector<128x128xf32>
      %cst_44 = arith.constant 0.000000e+00 : f32
      %116 = vector.broadcast %cst_44 : f32 to vector<128x128xf32>
      %117 = arith.maximumf %115, %116 : vector<128x128xf32>
      %118 = arith.mulf %117, %117 : vector<128x128xf32>
      %cst_45 = arith.constant dense<0.000000e+00> : vector<128xf32>
      %119 = vector.multi_reduction <add>, %118, %cst_45 [1] : vector<128x128xf32> to vector<128xf32>
      %120 = vector.shape_cast %119 : vector<128xf32> to vector<128x1xf32>
      %121 = math.sqrt %120 : vector<128x1xf32>
      %c5_i32 = arith.constant 5 : i32
      %122 = vector.broadcast %c5_i32 : i32 to vector<128x128xi32>
      %123 = arith.cmpi eq, %31, %122 : vector<128x128xi32>
      %cst_46 = arith.constant 0.000000e+00 : f32
      %124 = vector.broadcast %cst_46 : f32 to vector<128x1xf32>
      %125 = arith.subf %124, %121 : vector<128x1xf32>
      %126 = vector.shape_cast %125 : vector<128x1xf32> to vector<128x1xf32>
      %127 = vector.broadcast %126 : vector<128x1xf32> to vector<128x128xf32>
      %128 = arith.select %123, %127, %112 : vector<128x128xi1>, vector<128x128xf32>
      %129 = vector.extract_strided_slice %30 {offsets = [6, 0], sizes = [1, 128], strides = [1, 1]} : vector<128x128xf32> to vector<1x128xf32>
      %130 = vector.broadcast %129 : vector<1x128xf32> to vector<128x128xf32>
      %131 = arith.subf %130, %28 : vector<128x128xf32>
      %cst_47 = arith.constant 0.000000e+00 : f32
      %132 = vector.broadcast %cst_47 : f32 to vector<128x128xf32>
      %133 = arith.maximumf %131, %132 : vector<128x128xf32>
      %134 = arith.mulf %133, %133 : vector<128x128xf32>
      %cst_48 = arith.constant dense<0.000000e+00> : vector<128xf32>
      %135 = vector.multi_reduction <add>, %134, %cst_48 [1] : vector<128x128xf32> to vector<128xf32>
      %136 = vector.shape_cast %135 : vector<128xf32> to vector<128x1xf32>
      %137 = math.sqrt %136 : vector<128x1xf32>
      %c6_i32 = arith.constant 6 : i32
      %138 = vector.broadcast %c6_i32 : i32 to vector<128x128xi32>
      %139 = arith.cmpi eq, %31, %138 : vector<128x128xi32>
      %cst_49 = arith.constant 0.000000e+00 : f32
      %140 = vector.broadcast %cst_49 : f32 to vector<128x1xf32>
      %141 = arith.subf %140, %137 : vector<128x1xf32>
      %142 = vector.shape_cast %141 : vector<128x1xf32> to vector<128x1xf32>
      %143 = vector.broadcast %142 : vector<128x1xf32> to vector<128x128xf32>
      %144 = arith.select %139, %143, %128 : vector<128x128xi1>, vector<128x128xf32>
      %145 = vector.extract_strided_slice %30 {offsets = [7, 0], sizes = [1, 128], strides = [1, 1]} : vector<128x128xf32> to vector<1x128xf32>
      %146 = vector.broadcast %145 : vector<1x128xf32> to vector<128x128xf32>
      %147 = arith.subf %146, %28 : vector<128x128xf32>
      %cst_50 = arith.constant 0.000000e+00 : f32
      %148 = vector.broadcast %cst_50 : f32 to vector<128x128xf32>
      %149 = arith.maximumf %147, %148 : vector<128x128xf32>
      %150 = arith.mulf %149, %149 : vector<128x128xf32>
      %cst_51 = arith.constant dense<0.000000e+00> : vector<128xf32>
      %151 = vector.multi_reduction <add>, %150, %cst_51 [1] : vector<128x128xf32> to vector<128xf32>
      %152 = vector.shape_cast %151 : vector<128xf32> to vector<128x1xf32>
      %153 = math.sqrt %152 : vector<128x1xf32>
      %c7_i32 = arith.constant 7 : i32
      %154 = vector.broadcast %c7_i32 : i32 to vector<128x128xi32>
      %155 = arith.cmpi eq, %31, %154 : vector<128x128xi32>
      %cst_52 = arith.constant 0.000000e+00 : f32
      %156 = vector.broadcast %cst_52 : f32 to vector<128x1xf32>
      %157 = arith.subf %156, %153 : vector<128x1xf32>
      %158 = vector.shape_cast %157 : vector<128x1xf32> to vector<128x1xf32>
      %159 = vector.broadcast %158 : vector<128x1xf32> to vector<128x128xf32>
      %160 = arith.select %155, %159, %144 : vector<128x128xi1>, vector<128x128xf32>
      %c0_53 = arith.constant 0 : index
      %c0_54 = arith.constant 0 : index
      %161 = vector.load %arg10[%c0_53, %c0_54] : memref<128x128xf32, #tpu.memory_space<vmem>>, vector<128x128xf32>
      tpu.vector_store %arg10[%c0_53, %c0_54], %160 {strides = array<i32>} : memref<128x128xf32, #tpu.memory_space<vmem>>, vector<128x128xf32>,
      %cst_55 = arith.constant dense<0xFF800000> : vector<128xf32>
      %162 = vector.multi_reduction <maximumf>, %160, %cst_55 [1] : vector<128x128xf32> to vector<128xf32>
      %163 = vector.shape_cast %162 : vector<128xf32> to vector<128x1xf32>
      %164 = vector.broadcast %163 : vector<128x1xf32> to vector<128x128xf32>
      %165 = arith.subf %160, %164 : vector<128x128xf32>
      %166 = math.exp %165 : vector<128x128xf32>
      %cst_56 = arith.constant dense<0.000000e+00> : vector<128xf32>
      %167 = vector.multi_reduction <add>, %166, %cst_56 [1] : vector<128x128xf32> to vector<128xf32>
      %168 = vector.shape_cast %167 : vector<128xf32> to vector<128x1xf32>
      %169 = vector.broadcast %168 : vector<128x1xf32> to vector<128x128xf32>
      %170 = arith.divf %166, %169 : vector<128x128xf32>
      %c0_57 = arith.constant 0 : index
      %c0_58 = arith.constant 0 : index
      %171 = vector.load %arg11[%c0_57, %c0_58] : memref<128x128xf32, #tpu.memory_space<vmem>>, vector<128x128xf32>
      tpu.vector_store %arg11[%c0_57, %c0_58], %170 {strides = array<i32>} : memref<128x128xf32, #tpu.memory_space<vmem>>, vector<128x128xf32>,
    } else {
    }
    return
  }
  func.func @transform_0(%arg0: i32, %arg1: i32) -> (i32, i32) {
    %c0_i32 = arith.constant 0 : i32
    return %arg0, %arg1 : i32, i32
  }
  func.func @transform_1(%arg0: i32, %arg1: i32) -> (i32, i32) {
    %c0_i32 = arith.constant 0 : i32
    %c0_i32_0 = arith.constant 0 : i32
    return %arg1, %c0_i32 : i32, i32
  }
  func.func @transform_2(%arg0: i32, %arg1: i32) -> (i32, i32) {
    %c0_i32 = arith.constant 0 : i32
    %c0_i32_0 = arith.constant 0 : i32
    %c0_i32_1 = arith.constant 0 : i32
    return %c0_i32, %c0_i32_0 : i32, i32
  }
  func.func @transform_3(%arg0: i32, %arg1: i32) -> (i32, i32) {
    %c0_i32 = arith.constant 0 : i32
    %c0_i32_0 = arith.constant 0 : i32
    %c0_i32_1 = arith.constant 0 : i32
    return %c0_i32, %c0_i32_0 : i32, i32
  }
  func.func @transform_4(%arg0: i32, %arg1: i32) -> (i32, i32) {
    %c0_i32 = arith.constant 0 : i32
    %c0_i32_0 = arith.constant 0 : i32
    %c0_i32_1 = arith.constant 0 : i32
    return %c0_i32, %c0_i32_0 : i32, i32
  }
  func.func @transform_5(%arg0: i32, %arg1: i32) -> (i32, i32) {
    %c0_i32 = arith.constant 0 : i32
    %c0_i32_0 = arith.constant 0 : i32
    %c0_i32_1 = arith.constant 0 : i32
    return %c0_i32, %c0_i32_0 : i32, i32
  }
  func.func @transform_6(%arg0: i32, %arg1: i32) -> (i32, i32) {
    %c0_i32 = arith.constant 0 : i32
    %c0_i32_0 = arith.constant 0 : i32
    return %arg0, %c0_i32 : i32, i32
  }
  func.func @transform_7(%arg0: i32, %arg1: i32) -> (i32, i32) {
    %c0_i32 = arith.constant 0 : i32
    %c0_i32_0 = arith.constant 0 : i32
    return %arg0, %c0_i32 : i32, i32
  }
  func.func @transform_8(%arg0: i32, %arg1: i32) -> (i32, i32) {
    %c0_i32 = arith.constant 0 : i32
    %c0_i32_0 = arith.constant 0 : i32
    return %arg0, %c0_i32 : i32, i32
  }
  func.func @transform_9(%arg0: i32, %arg1: i32) -> (i32, i32) {
    %c0_i32 = arith.constant 0 : i32
    %c0_i32_0 = arith.constant 0 : i32
    return %arg0, %c0_i32 : i32, i32
  }
}

</mosaic_0001>

<llo_original>
// kernel: tpu_custom_call.1
$region0: #{tpu_custom_call.1}
  #allocation0 [shape = 'u32[]', space=smem, size = 0x4, offset = 0x4, fixed_abs, tag = 'smem constant byte address 0x4 - core index']
  #allocation1 [shape = 'u32[144,128]{1,0:T(1,128)}', space=vmem, size = 0x12000, scoped, tag = 'internal scratch']
  #allocation2 [shape = 'f32[128,384]{1,0:T(8,128)}', space=vmem, size = 0x30000, scoped, tag = 'scratch operand']
  %s0 = inlined_call_operand.hbm [shape: bf16[256,256], index: 0, kind: input, shape index: {}]
  %s1 = inlined_call_operand.hbm [shape: bf16[256,384], index: 1, kind: input, shape index: {}]
  %s2 = inlined_call_operand.vmem [shape: f32[1,384], index: 2, kind: input, shape index: {}]
  %s3 = inlined_call_operand.hbm [shape: bf16[256,128], index: 3, kind: input, shape index: {}]
  %s4 = inlined_call_operand.vmem [shape: f32[1,128], index: 4, kind: input, shape index: {}]
  %s5 = inlined_call_operand.hbm [shape: f32[128,128], index: 5, kind: input, shape index: {}]
  %s6 = inlined_call_operand.hbm [shape: f32[256,128], index: 6, kind: output, shape index: {0}]
  %s7 = inlined_call_operand.hbm [shape: f32[256,128], index: 7, kind: output, shape index: {1}]
  %s8 = inlined_call_operand.hbm [shape: f32[256,128], index: 8, kind: output, shape index: {2}]
  %s9 = inlined_call_operand.hbm [shape: f32[256,128], index: 9, kind: output, shape index: {3}]
  %10 = xla_tuple %s6, %s7, %s8, %s9
  %s11 = sld [smem:[#allocation0]]
  $region105: #{tpu_custom_call.1} parent=0
    _
  %s13 = ssub.s32 1, %s11
  %s14 = scalar_select 0, %s13, %s11
  $region1: #{tpu_custom_call.1} parent=0
    #allocation3 [shape = 'u8[65536]{0}', space=vmem, size = 0x10000, scoped, tag = 'input window, operand 0']
    #allocation4 [shape = 's32[2]{0}', space=sflag, size = 0x8, scoped, tag = 'scoped memory for tpu_custom_call.1']
    #allocation5 [shape = 's32[2]{0}', space=sflag, size = 0x8, scoped, tag = 'scoped memory for tpu_custom_call.1']
    #allocation6 [shape = 'u8[196608]{0}', space=vmem, size = 0x30000, scoped, tag = 'input window, operand 1']
    #allocation7 [shape = 's32[2]{0}', space=sflag, size = 0x8, scoped, tag = 'scoped memory for tpu_custom_call.1']
    #allocation8 [shape = 'u8[65536]{0}', space=vmem, size = 0x10000, scoped, tag = 'input window, operand 3, single buffered']
    #allocation9 [shape = 'u8[65536]{0}', space=vmem, size = 0x10000, scoped, tag = 'input window, operand 5, single buffered']
    #allocation10 [shape = 's32[1]{0}', space=sflag, size = 0x4, scoped, tag = 'scoped memory for tpu_custom_call.1']
    #allocation11 [shape = 'u8[131072]{0}', space=vmem, size = 0x20000, scoped, tag = 'output window, operand 0']
    #allocation12 [shape = 'u8[131072]{0}', space=vmem, size = 0x20000, scoped, tag = 'output window, operand 1']
    #allocation13 [shape = 's32[2]{0}', space=sflag, size = 0x8, scoped, tag = 'scoped memory for tpu_custom_call.1']
    #allocation14 [shape = 'u8[131072]{0}', space=vmem, size = 0x20000, scoped, tag = 'output window, operand 2']
    #allocation15 [shape = 'u8[131072]{0}', space=vmem, size = 0x20000, scoped, tag = 'output window, operand 3']
    #allocation16 [shape = 's32[2]{0}', space=sflag, size = 0x8, scoped, tag = 'scoped memory for tpu_custom_call.1']
    %15 = vsyncpa [#allocation4], 0
    %s16 = scalar_lea.sflag [#allocation4], 1
    %17 = vsyncpa %s16, 0
    %18 = vsyncpa [#allocation7], 0
    %s19 = scalar_lea.sflag [#allocation7], 1
    %20 = vsyncpa %s19, 0
    %21 = vsyncpa [#allocation10], 0
    %22 = vsyncpa [#allocation5], 0
    %s23 = scalar_lea.sflag [#allocation5], 1
    %24 = vsyncpa %s23, 0
    %25 = vsyncpa [#allocation13], 0
    %s26 = scalar_lea.sflag [#allocation13], 1
    %27 = vsyncpa %s26, 0
    %28 = vsyncpa [#allocation16], 0
    %s29 = scalar_lea.sflag [#allocation16], 1
    %30 = vsyncpa %s29, 0
    loop: start=0, step=1, limit=6
    $region2: #{tpu_custom_call.1} parent=1 // loop_pre_header
      _
    $region3: #{tpu_custom_call.1} parent=1 // loop_header
      %s32 = sphi 0, %s36
      %p33 = scmp.ge.s32.totalorder %s32, 6
      %s39 = sphi 0, %s51
      %s40 = sphi 0, %s47
      %s41 = sphi 0, %s39
      %s42 = sphi 0, %s40
      %s43 = sphi 0, %s41
      %s44 = sphi 0, %s42
      %s56 = sphi 0, %s58
      %s59 = sphi 0, %s56
      %s60 = sphi 0, %s59
      %s76 = sphi 0, %s60
      %s82 = sphi 0, %s84
      %s85 = sphi 0, %s82
      %s86 = sphi 0, %s85
      %s102 = sphi 0, %s86
      %s106 = sphi 0, %s106
      %s108 = sphi 0, %s106
      %s109 = sphi 0, %s108
      %s123 = sphi 0, %s109
      %s127 = sphi 0, %s127
      %s129 = sphi 0, %s127
      %s130 = sphi 0, %s129
      %s144 = sphi 0, %s130
      %s148 = sphi 0, %s148
      %s150 = sphi 0, %s148
      %s151 = sphi 0, %s150
      %s165 = sphi 0, %s151
      %s169 = sphi 0, %s169
      %s171 = sphi 0, %s169
      %s172 = sphi 0, %s171
      %s186 = sphi 0, %s172
      %s192 = sphi 0, %s194
      %s195 = sphi 0, %s192
      %s196 = sphi 0, %s195
      %s212 = sphi 0, %s196
      %s218 = sphi 0, %s220
      %s221 = sphi 0, %s218
      %s222 = sphi 0, %s221
      %s238 = sphi 0, %s222
      %s244 = sphi 0, %s246
      %s247 = sphi 0, %s244
      %s248 = sphi 0, %s247
      %s264 = sphi 0, %s248
      %s270 = sphi 0, %s272
      %s273 = sphi 0, %s270
      %s274 = sphi 0, %s273
      %s290 = sphi 0, %s274
    $region4: #{tpu_custom_call.1} parent=1 // loop_header_branch
      %35 = sbr.rel (%p33) target = $region8
    $region5: #{tpu_custom_call.1} parent=1 // loop_body
      %s37 = ssub.s32 %s32, 1
      %s38 = ssub.s32 %s32, 2
      %s45 = sadd.s32 1, %s40
      %p46 = scmp.ge.s32.totalorder %s45, 2
      %s47 = scalar_select %p46, 0, %s45
      %s48 = sadd.s32 1, %s39
      %s49 = scalar_select %p46, %s48, %s39
      %p50 = scmp.ge.s32.totalorder %s49, 2
      %s51 = scalar_select %p50, 0, %s49
      %s52 = ssub.s32 %s39, %s51
      %s53 = ssub.s32 %s40, %s47
      %s54 = sor.u32 %s52, %s53
      %p55 = scmp.eq.s32.totalorder %s54, 0
      %s57 = sadd.s32 %s56, 1
      %s58 = scalar_select %p55, %s56, %s57
      %p61 = pneg %p55
      %p62 = scmp.eq.s32.totalorder %s32, 3
      %p63 = por %p61, %p62
      %p64 = scmp.ne.s32.totalorder %s56, %s59
      %p65 = scmp.eq.s32.totalorder %s32, 0
      %p66 = por %p64, %p65
      %p67 = scmp.ne.s32.totalorder %s56, %s59
      %p68 = scmp.eq.s32.totalorder %s37, 3
      %p69 = por %p67, %p68
      %p70 = scmp.ne.s32.totalorder %s59, %s60
      %p71 = scmp.eq.s32.totalorder %s37, 0
      %p72 = por %p70, %p71
      %p73 = scmp.ne.s32.totalorder %s59, %s60
      %p74 = scmp.eq.s32.totalorder %s38, 3
      %p75 = por %p73, %p74
      %p77 = scmp.ne.s32.totalorder %s60, %s76
      %p78 = scmp.eq.s32.totalorder %s38, 0
      %p79 = por %p77, %p78
      %s80 = ssub.s32 %s40, %s47
      %p81 = scmp.eq.s32.totalorder %s80, 0
      %s83 = sadd.s32 %s82, 1
      %s84 = scalar_select %p81, %s82, %s83
      %p87 = pneg %p81
      %p88 = scmp.eq.s32.totalorder %s32, 3
      %p89 = por %p87, %p88
      %p90 = scmp.ne.s32.totalorder %s82, %s85
      %p91 = scmp.eq.s32.totalorder %s32, 0
      %p92 = por %p90, %p91
      %p93 = scmp.ne.s32.totalorder %s82, %s85
      %p94 = scmp.eq.s32.totalorder %s37, 3
      %p95 = por %p93, %p94
      %p96 = scmp.ne.s32.totalorder %s85, %s86
      %p97 = scmp.eq.s32.totalorder %s37, 0
      %p98 = por %p96, %p97
      %p99 = scmp.ne.s32.totalorder %s85, %s86
      %p100 = scmp.eq.s32.totalorder %s38, 3
      %p101 = por %p99, %p100
      %p103 = scmp.ne.s32.totalorder %s86, %s102
      %p104 = scmp.eq.s32.totalorder %s38, 0
      %p105 = por %p103, %p104
      %s107 = sadd.s32 %s106, 1
      %p110 = scmp.eq.s32.totalorder %s32, 3
      %p111 = scmp.ne.s32.totalorder %s106, %s108
      %p112 = scmp.eq.s32.totalorder %s32, 0
      %p113 = por %p111, %p112
      %p114 = scmp.ne.s32.totalorder %s106, %s108
      %p115 = scmp.eq.s32.totalorder %s37, 3
      %p116 = por %p114, %p115
      %p117 = scmp.ne.s32.totalorder %s108, %s109
      %p118 = scmp.eq.s32.totalorder %s37, 0
      %p119 = por %p117, %p118
      %p120 = scmp.ne.s32.totalorder %s108, %s109
      %p121 = scmp.eq.s32.totalorder %s38, 3
      %p122 = por %p120, %p121
      %p124 = scmp.ne.s32.totalorder %s109, %s123
      %p125 = scmp.eq.s32.totalorder %s38, 0
      %p126 = por %p124, %p125
      %s128 = sadd.s32 %s127, 1
      %p131 = scmp.eq.s32.totalorder %s32, 3
      %p132 = scmp.ne.s32.totalorder %s127, %s129
      %p133 = scmp.eq.s32.totalorder %s32, 0
      %p134 = por %p132, %p133
      %p135 = scmp.ne.s32.totalorder %s127, %s129
      %p136 = scmp.eq.s32.totalorder %s37, 3
      %p137 = por %p135, %p136
      %p138 = scmp.ne.s32.totalorder %s129, %s130
      %p139 = scmp.eq.s32.totalorder %s37, 0
      %p140 = por %p138, %p139
      %p141 = scmp.ne.s32.totalorder %s129, %s130
      %p142 = scmp.eq.s32.totalorder %s38, 3
      %p143 = por %p141, %p142
      %p145 = scmp.ne.s32.totalorder %s130, %s144
      %p146 = scmp.eq.s32.totalorder %s38, 0
      %p147 = por %p145, %p146
      %s149 = sadd.s32 %s148, 1
      %p152 = scmp.eq.s32.totalorder %s32, 3
      %p153 = scmp.ne.s32.totalorder %s148, %s150
      %p154 = scmp.eq.s32.totalorder %s32, 0
      %p155 = por %p153, %p154
      %p156 = scmp.ne.s32.totalorder %s148, %s150
      %p157 = scmp.eq.s32.totalorder %s37, 3
      %p158 = por %p156, %p157
      %p159 = scmp.ne.s32.totalorder %s150, %s151
      %p160 = scmp.eq.s32.totalorder %s37, 0
      %p161 = por %p159, %p160
      %p162 = scmp.ne.s32.totalorder %s150, %s151
      %p163 = scmp.eq.s32.totalorder %s38, 3
      %p164 = por %p162, %p163
      %p166 = scmp.ne.s32.totalorder %s151, %s165
      %p167 = scmp.eq.s32.totalorder %s38, 0
      %p168 = por %p166, %p167
      %s170 = sadd.s32 %s169, 1
      %p173 = scmp.eq.s32.totalorder %s32, 3
      %p174 = scmp.ne.s32.totalorder %s169, %s171
      %p175 = scmp.eq.s32.totalorder %s32, 0
      %p176 = por %p174, %p175
      %p177 = scmp.ne.s32.totalorder %s169, %s171
      %p178 = scmp.eq.s32.totalorder %s37, 3
      %p179 = por %p177, %p178
      %p180 = scmp.ne.s32.totalorder %s171, %s172
      %p181 = scmp.eq.s32.totalorder %s37, 0
      %p182 = por %p180, %p181
      %p183 = scmp.ne.s32.totalorder %s171, %s172
      %p184 = scmp.eq.s32.totalorder %s38, 3
      %p185 = por %p183, %p184
      %p187 = scmp.ne.s32.totalorder %s172, %s186
      %p188 = scmp.eq.s32.totalorder %s38, 0
      %p189 = por %p187, %p188
      %s190 = ssub.s32 %s39, %s51
      %p191 = scmp.eq.s32.totalorder %s190, 0
      %s193 = sadd.s32 %s192, 1
      %s194 = scalar_select %p191, %s192, %s193
      %p197 = pneg %p191
      %p198 = scmp.eq.s32.totalorder %s32, 3
      %p199 = por %p197, %p198
      %p200 = scmp.ne.s32.totalorder %s192, %s195
      %p201 = scmp.eq.s32.totalorder %s32, 0
      %p202 = por %p200, %p201
      %p203 = scmp.ne.s32.totalorder %s192, %s195
      %p204 = scmp.eq.s32.totalorder %s37, 3
      %p205 = por %p203, %p204
      %p206 = scmp.ne.s32.totalorder %s195, %s196
      %p207 = scmp.eq.s32.totalorder %s37, 0
      %p208 = por %p206, %p207
      %p209 = scmp.ne.s32.totalorder %s195, %s196
      %p210 = scmp.eq.s32.totalorder %s38, 3
      %p211 = por %p209, %p210
      %p213 = scmp.ne.s32.totalorder %s196, %s212
      %p214 = scmp.eq.s32.totalorder %s38, 0
      %p215 = por %p213, %p214
      %s216 = ssub.s32 %s39, %s51
      %p217 = scmp.eq.s32.totalorder %s216, 0
      %s219 = sadd.s32 %s218, 1
      %s220 = scalar_select %p217, %s218, %s219
      %p223 = pneg %p217
      %p224 = scmp.eq.s32.totalorder %s32, 3
      %p225 = por %p223, %p224
      %p226 = scmp.ne.s32.totalorder %s218, %s221
      %p227 = scmp.eq.s32.totalorder %s32, 0
      %p228 = por %p226, %p227
      %p229 = scmp.ne.s32.totalorder %s218, %s221
      %p230 = scmp.eq.s32.totalorder %s37, 3
      %p231 = por %p229, %p230
      %p232 = scmp.ne.s32.totalorder %s221, %s222
      %p233 = scmp.eq.s32.totalorder %s37, 0
      %p234 = por %p232, %p233
      %p235 = scmp.ne.s32.totalorder %s221, %s222
      %p236 = scmp.eq.s32.totalorder %s38, 3
      %p237 = por %p235, %p236
      %p239 = scmp.ne.s32.totalorder %s222, %s238
      %p240 = scmp.eq.s32.totalorder %s38, 0
      %p241 = por %p239, %p240
      %s242 = ssub.s32 %s39, %s51
      %p243 = scmp.eq.s32.totalorder %s242, 0
      %s245 = sadd.s32 %s244, 1
      %s246 = scalar_select %p243, %s244, %s245
      %p249 = pneg %p243
      %p250 = scmp.eq.s32.totalorder %s32, 3
      %p251 = por %p249, %p250
      %p252 = scmp.ne.s32.totalorder %s244, %s247
      %p253 = scmp.eq.s32.totalorder %s32, 0
      %p254 = por %p252, %p253
      %p255 = scmp.ne.s32.totalorder %s244, %s247
      %p256 = scmp.eq.s32.totalorder %s37, 3
      %p257 = por %p255, %p256
      %p258 = scmp.ne.s32.totalorder %s247, %s248
      %p259 = scmp.eq.s32.totalorder %s37, 0
      %p260 = por %p258, %p259
      %p261 = scmp.ne.s32.totalorder %s247, %s248
      %p262 = scmp.eq.s32.totalorder %s38, 3
      %p263 = por %p261, %p262
      %p265 = scmp.ne.s32.totalorder %s248, %s264
      %p266 = scmp.eq.s32.totalorder %s38, 0
      %p267 = por %p265, %p266
      %s268 = ssub.s32 %s39, %s51
      %p269 = scmp.eq.s32.totalorder %s268, 0
      %s271 = sadd.s32 %s270, 1
      %s272 = scalar_select %p269, %s270, %s271
      %p275 = pneg %p269
      %p276 = scmp.eq.s32.totalorder %s32, 3
      %p277 = por %p275, %p276
      %p278 = scmp.ne.s32.totalorder %s270, %s273
      %p279 = scmp.eq.s32.totalorder %s32, 0
      %p280 = por %p278, %p279
      %p281 = scmp.ne.s32.totalorder %s270, %s273
      %p282 = scmp.eq.s32.totalorder %s37, 3
      %p283 = por %p281, %p282
      %p284 = scmp.ne.s32.totalorder %s273, %s274
      %p285 = scmp.eq.s32.totalorder %s37, 0
      %p286 = por %p284, %p285
      %p287 = scmp.ne.s32.totalorder %s273, %s274
      %p288 = scmp.eq.s32.totalorder %s38, 3
      %p289 = por %p287, %p288
      %p291 = scmp.ne.s32.totalorder %s274, %s290
      %p292 = scmp.eq.s32.totalorder %s38, 0
      %p293 = por %p291, %p292
      %p294 = scmp.le.s32.totalorder 1, %s32
      %p295 = scmp.lt.s32.totalorder %s32, 5
      %p296 = pnand %p294, %p295
      %p297 = pneg %p296
      // Predicated region
      $region9: #{tpu_custom_call.1} parent=5 // pred_check
        _
      $region10: #{tpu_custom_call.1} parent=5 // pred_check_branch
        %299 = sbr.rel (%p296) target = $region12
      $region11: #{tpu_custom_call.1} parent=5 // pred_region
        %s300 = ssub.s32 %s32, 1
        // Predicated region
        $region13: #{tpu_custom_call.1} parent=11 // pred_check
          %p301 = pneg %p119
        $region14: #{tpu_custom_call.1} parent=11 // pred_check_branch
          %303 = sbr.rel (%p301) target = $region16
        $region15: #{tpu_custom_call.1} parent=11 // pred_region
          _
        $region16: #{tpu_custom_call.1} parent=11 // pred_fallthru
          _
        // Predicated region
        $region17: #{tpu_custom_call.1} parent=11 // pred_check
          %p304 = pneg %p140
        $region18: #{tpu_custom_call.1} parent=11 // pred_check_branch
          %306 = sbr.rel (%p304) target = $region20
        $region19: #{tpu_custom_call.1} parent=11 // pred_region
          %s308 = ssub.s32 2048, 2048
          %309 = vsyncadd [#allocation7], %s308
          %s310 = sshll.u32 [#allocation8], 4
          %s311 = int_to_ptr.vmem [resolvable:$true] %s310
          %316 = dma.hbm_to_vmem [thread:$0]  %s3, 2048, %s311, [#allocation7], 64, 64, 4
        $region20: #{tpu_custom_call.1} parent=11 // pred_fallthru
          _
        // Predicated region
        $region21: #{tpu_custom_call.1} parent=11 // pred_check
          %p317 = pneg %p161
        $region22: #{tpu_custom_call.1} parent=11 // pred_check_branch
          %319 = sbr.rel (%p317) target = $region24
        $region23: #{tpu_custom_call.1} parent=11 // pred_region
          _
        $region24: #{tpu_custom_call.1} parent=11 // pred_fallthru
          _
        // Predicated region
        $region25: #{tpu_custom_call.1} parent=11 // pred_check
          %p320 = pneg %p182
        $region26: #{tpu_custom_call.1} parent=11 // pred_check_branch
          %322 = sbr.rel (%p320) target = $region28
        $region27: #{tpu_custom_call.1} parent=11 // pred_region
          %s324 = ssub.s32 2048, 2048
          %325 = vsyncadd [#allocation10], %s324
          %s326 = sshll.u32 [#allocation9], 4
          %s327 = int_to_ptr.vmem [resolvable:$true] %s326
          %332 = dma.hbm_to_vmem [thread:$0]  %s5, 2048, %s327, [#allocation10], 128, 128, 8
        $region28: #{tpu_custom_call.1} parent=11 // pred_fallthru
          _
      $region12: #{tpu_custom_call.1} parent=5 // pred_fallthru
        _
      %p333 = scmp.lt.s32.totalorder %s32, 4
      // Predicated region
      $region29: #{tpu_custom_call.1} parent=5 // pred_check
        %p334 = pneg %p333
      $region30: #{tpu_custom_call.1} parent=5 // pred_check_branch
        %336 = sbr.rel (%p334) target = $region32
      $region31: #{tpu_custom_call.1} parent=5 // pred_region
        // Predicated region
        $region33: #{tpu_custom_call.1} parent=31 // pred_check
          %p337 = pneg %p66
        $region34: #{tpu_custom_call.1} parent=31 // pred_check_branch
          %339 = sbr.rel (%p337) target = $region36
        $region35: #{tpu_custom_call.1} parent=31 // pred_region
          %s340 = sand.u32 %s56, 1
          %s341 = scalar_lea.sflag [#allocation4], %s340
          %s342 = sand.u32 %s56, 1
          %s343 = smul.addr %s342, 64
          %s344 = scalar_lea.vmem [#allocation3], %s343
          %s345 = smul.u32 16, %s39
          %s347 = ssub.s32 1024, 1024
          %348 = vsyncadd %s341, %s347
          %s349 = smul.addr %s345, 2
          %s350 = sadd.s32 %s40, %s349
          %s351 = smul.addr %s350, 64
          %s352 = scalar_lea.hbm %s0, %s351
          %s353 = sshll.u32 %s344, 4
          %s354 = int_to_ptr.vmem [resolvable:$true] %s353
          %359 = dma.hbm_to_vmem [thread:$0]  %s352, 1024, %s354, %s341, 128, 64, 4
        $region36: #{tpu_custom_call.1} parent=31 // pred_fallthru
          _
        // Predicated region
        $region37: #{tpu_custom_call.1} parent=31 // pred_check
          %p360 = pneg %p92
        $region38: #{tpu_custom_call.1} parent=31 // pred_check_branch
          %362 = sbr.rel (%p360) target = $region40
        $region39: #{tpu_custom_call.1} parent=31 // pred_region
          %s363 = sand.u32 %s32, 1
          %s364 = scalar_lea.sflag [#allocation7], %s363
          %s365 = sand.u32 %s82, 1
          %s366 = smul.addr %s365, 192
          %s367 = scalar_lea.vmem [#allocation6], %s366
          %s368 = smul.u32 16, %s40
          %s370 = ssub.s32 3072, 3072
          %371 = vsyncadd %s364, %s370
          %s372 = smul.addr %s368, 3
          %s373 = smul.addr %s372, 64
          %s374 = scalar_lea.hbm %s1, %s373
          %s375 = sshll.u32 %s367, 4
          %s376 = int_to_ptr.vmem [resolvable:$true] %s375
          %381 = dma.hbm_to_vmem [thread:$0]  %s374, 3072, %s376, %s364, 192, 192, 12
        $region40: #{tpu_custom_call.1} parent=31 // pred_fallthru
          _
      $region32: #{tpu_custom_call.1} parent=5 // pred_fallthru
        _
      %p382 = scmp.le.s32.totalorder 1, %s32
      %p383 = scmp.lt.s32.totalorder %s32, 5
      %p384 = pnand %p382, %p383
      %p385 = pneg %p384
      // Predicated region
      $region41: #{tpu_custom_call.1} parent=5 // pred_check
        _
      $region42: #{tpu_custom_call.1} parent=5 // pred_check_branch
        %387 = sbr.rel (%p384) target = $region44
      $region43: #{tpu_custom_call.1} parent=5 // pred_region
        %s388 = ssub.s32 %s32, 1
        %s389 = sand.u32 %s59, 1
        %s390 = scalar_lea.sflag [#allocation4], %s389
        %s391 = sand.u32 %s59, 1
        %s392 = smul.addr %s391, 64
        %s393 = scalar_lea.vmem [#allocation3], %s392
        // Predicated region
        $region45: #{tpu_custom_call.1} parent=43 // pred_check
          %p394 = pneg %p72
        $region46: #{tpu_custom_call.1} parent=43 // pred_check_branch
          %396 = sbr.rel (%p394) target = $region48
        $region47: #{tpu_custom_call.1} parent=43 // pred_region
          %397 = dma.done %s390, 1024
        $region48: #{tpu_custom_call.1} parent=43 // pred_fallthru
          _
        %s398 = sand.u32 %s37, 1
        %s399 = scalar_lea.sflag [#allocation7], %s398
        %s400 = sand.u32 %s85, 1
        %s401 = smul.addr %s400, 192
        %s402 = scalar_lea.vmem [#allocation6], %s401
        // Predicated region
        $region49: #{tpu_custom_call.1} parent=43 // pred_check
          %p403 = pneg %p98
        $region50: #{tpu_custom_call.1} parent=43 // pred_check_branch
          %405 = sbr.rel (%p403) target = $region52
        $region51: #{tpu_custom_call.1} parent=43 // pred_region
          %406 = dma.done %s399, 3072
        $region52: #{tpu_custom_call.1} parent=43 // pred_fallthru
          _
        // Predicated region
        $region53: #{tpu_custom_call.1} parent=43 // pred_check
          %p407 = pneg %p140
        $region54: #{tpu_custom_call.1} parent=43 // pred_check_branch
          %409 = sbr.rel (%p407) target = $region56
        $region55: #{tpu_custom_call.1} parent=43 // pred_region
          %410 = dma.done [#allocation7], 2048
        $region56: #{tpu_custom_call.1} parent=43 // pred_fallthru
          _
        // Predicated region
        $region57: #{tpu_custom_call.1} parent=43 // pred_check
          %p411 = pneg %p182
        $region58: #{tpu_custom_call.1} parent=43 // pred_check_branch
          %413 = sbr.rel (%p411) target = $region60
        $region59: #{tpu_custom_call.1} parent=43 // pred_region
          %414 = dma.done [#allocation10], 2048
        $region60: #{tpu_custom_call.1} parent=43 // pred_fallthru
          _
        %s415 = sand.u32 %s59, 1
        %s416 = scalar_lea.sflag [#allocation4], %s415
        %s417 = sand.u32 %s59, 1
        %s418 = smul.addr %s417, 64
        %s419 = scalar_lea.vmem [#allocation3], %s418
        %p420 = pneg %p72
        %p421 = pneg %p69
        %s422 = sand.u32 %s37, 1
        %s423 = scalar_lea.sflag [#allocation7], %s422
        %s424 = sand.u32 %s85, 1
        %s425 = smul.addr %s424, 192
        %s426 = scalar_lea.vmem [#allocation6], %s425
        %p427 = pneg %p98
        %p428 = pneg %p95
        %p429 = pneg %p119
        %p430 = pneg %p116
        %p431 = pneg %p140
        %p432 = pneg %p137
        %p433 = pneg %p161
        %p434 = pneg %p158
        %p435 = pneg %p182
        %p436 = pneg %p179
        %p437 = pneg %p208
        %p438 = pneg %p205
        %s439 = sand.u32 %s195, 1
        %s440 = scalar_lea.sflag [#allocation5], %s439
        %s441 = sand.u32 %s195, 1
        %s442 = smul.addr %s441, 128
        %s443 = scalar_lea.vmem [#allocation11], %s442
        %p444 = pneg %p234
        %p445 = pneg %p231
        %s446 = sand.u32 %s37, 1
        %s447 = scalar_lea.sflag [#allocation13], %s446
        %s448 = sand.u32 %s221, 1
        %s449 = smul.addr %s448, 128
        %s450 = scalar_lea.vmem [#allocation12], %s449
        %p451 = pneg %p260
        %p452 = pneg %p257
        %s453 = sand.u32 %s37, 1
        %s454 = scalar_lea.sflag [#allocation13], %s453
        %s455 = sand.u32 %s247, 1
        %s456 = smul.addr %s455, 128
        %s457 = scalar_lea.vmem [#allocation14], %s456
        %p458 = pneg %p286
        %p459 = pneg %p283
        %s460 = sand.u32 %s273, 1
        %s461 = scalar_lea.sflag [#allocation16], %s460
        %s462 = sand.u32 %s273, 1
        %s463 = smul.addr %s462, 128
        %s464 = scalar_lea.vmem [#allocation15], %s463
        %s465 = smul.u32 16, %s41
        %s466 = smul.u32 16, %s42
        %s467 = smul.u32 16, %s41
        %s468 = smul.u32 16, %s41
        %s469 = smul.u32 16, %s41
        %s470 = smul.u32 16, %s41
        %p472 = scmp.eq.s32.totalorder %s42, 0
        // Predicated region
        $region61: #{tpu_custom_call.1} parent=43 // pred_check
          %p473 = pneg %p472
        $region62: #{tpu_custom_call.1} parent=43 // pred_check_branch
          %475 = sbr.rel (%p473) target = $region64
        $region63: #{tpu_custom_call.1} parent=43 // pred_region
          %476 = vst [vmem:[#allocation2] sm:$0xff] 0.0
          %477 = vst [vmem:[#allocation2 + $0x8] sm:$0xff] 0.0
          %478 = vst [vmem:[#allocation2 + $0x10] sm:$0xff] 0.0
          %479 = vst [vmem:[#allocation2 + $0x18] sm:$0xff] 0.0
          %480 = vst [vmem:[#allocation2 + $0x20] sm:$0xff] 0.0
          %481 = vst [vmem:[#allocation2 + $0x28] sm:$0xff] 0.0
          %482 = vst [vmem:[#allocation2 + $0x30] sm:$0xff] 0.0
          %483 = vst [vmem:[#allocation2 + $0x38] sm:$0xff] 0.0
          %484 = vst [vmem:[#allocation2 + $0x40] sm:$0xff] 0.0
          %485 = vst [vmem:[#allocation2 + $0x48] sm:$0xff] 0.0
          %486 = vst [vmem:[#allocation2 + $0x50] sm:$0xff] 0.0
          %487 = vst [vmem:[#allocation2 + $0x58] sm:$0xff] 0.0
          %488 = vst [vmem:[#allocation2 + $0x60] sm:$0xff] 0.0
          %489 = vst [vmem:[#allocation2 + $0x68] sm:$0xff] 0.0
          %490 = vst [vmem:[#allocation2 + $0x70] sm:$0xff] 0.0
          %491 = vst [vmem:[#allocation2 + $0x78] sm:$0xff] 0.0
          %492 = vst [vmem:[#allocation2 + $0x80] sm:$0xff] 0.0
          %493 = vst [vmem:[#allocation2 + $0x88] sm:$0xff] 0.0
          %494 = vst [vmem:[#allocation2 + $0x90] sm:$0xff] 0.0
          %495 = vst [vmem:[#allocation2 + $0x98] sm:$0xff] 0.0
          %496 = vst [vmem:[#allocation2 + $0xa0] sm:$0xff] 0.0
          %497 = vst [vmem:[#allocation2 + $0xa8] sm:$0xff] 0.0
          %498 = vst [vmem:[#allocation2 + $0xb0] sm:$0xff] 0.0
          %499 = vst [vmem:[#allocation2 + $0xb8] sm:$0xff] 0.0
          %500 = vst [vmem:[#allocation2 + $0xc0] sm:$0xff] 0.0
          %501 = vst [vmem:[#allocation2 + $0xc8] sm:$0xff] 0.0
          %502 = vst [vmem:[#allocation2 + $0xd0] sm:$0xff] 0.0
          %503 = vst [vmem:[#allocation2 + $0xd8] sm:$0xff] 0.0
          %504 = vst [vmem:[#allocation2 + $0xe0] sm:$0xff] 0.0
          %505 = vst [vmem:[#allocation2 + $0xe8] sm:$0xff] 0.0
          %506 = vst [vmem:[#allocation2 + $0xf0] sm:$0xff] 0.0
          %507 = vst [vmem:[#allocation2 + $0xf8] sm:$0xff] 0.0
          %508 = vst [vmem:[#allocation2 + $0x100] sm:$0xff] 0.0
          %509 = vst [vmem:[#allocation2 + $0x108] sm:$0xff] 0.0
          %510 = vst [vmem:[#allocation2 + $0x110] sm:$0xff] 0.0
          %511 = vst [vmem:[#allocation2 + $0x118] sm:$0xff] 0.0
          %512 = vst [vmem:[#allocation2 + $0x120] sm:$0xff] 0.0
          %513 = vst [vmem:[#allocation2 + $0x128] sm:$0xff] 0.0
          %514 = vst [vmem:[#allocation2 + $0x130] sm:$0xff] 0.0
          %515 = vst [vmem:[#allocation2 + $0x138] sm:$0xff] 0.0
          %516 = vst [vmem:[#allocation2 + $0x140] sm:$0xff] 0.0
          %517 = vst [vmem:[#allocation2 + $0x148] sm:$0xff] 0.0
          %518 = vst [vmem:[#allocation2 + $0x150] sm:$0xff] 0.0
          %519 = vst [vmem:[#allocation2 + $0x158] sm:$0xff] 0.0
          %520 = vst [vmem:[#allocation2 + $0x160] sm:$0xff] 0.0
          %521 = vst [vmem:[#allocation2 + $0x168] sm:$0xff] 0.0
          %522 = vst [vmem:[#allocation2 + $0x170] sm:$0xff] 0.0
          %523 = vst [vmem:[#allocation2 + $0x178] sm:$0xff] 0.0
        $region64: #{tpu_custom_call.1} parent=43 // pred_fallthru
          _
        %v524 = vld [vmem:[%s393] sm:$0xf]
        %v525 = vld [vmem:[%s393 + $0x4] sm:$0xf]
        %v526 = vld [vmem:[%s393 + $0x8] sm:$0xf]
        %v527 = vld [vmem:[%s393 + $0xc] sm:$0xf]
        %v528 = vld [vmem:[%s393 + $0x10] sm:$0xf]
        %v529 = vld [vmem:[%s393 + $0x14] sm:$0xf]
        %v530 = vld [vmem:[%s393 + $0x18] sm:$0xf]
        %v531 = vld [vmem:[%s393 + $0x1c] sm:$0xf]
        %v532 = vld [vmem:[%s393 + $0x20] sm:$0xf]
        %v533 = vld [vmem:[%s393 + $0x24] sm:$0xf]
        %v534 = vld [vmem:[%s393 + $0x28] sm:$0xf]
        %v535 = vld [vmem:[%s393 + $0x2c] sm:$0xf]
        %v536 = vld [vmem:[%s393 + $0x30] sm:$0xf]
        %v537 = vld [vmem:[%s393 + $0x34] sm:$0xf]
        %v538 = vld [vmem:[%s393 + $0x38] sm:$0xf]
        %v539 = vld [vmem:[%s393 + $0x3c] sm:$0xf]
        %v540 = vmax.bf16 %v524, 0
        %v541 = vmax.bf16 %v525, 0
        %v542 = vmax.bf16 %v526, 0
        %v543 = vmax.bf16 %v527, 0
        %v544 = vmax.bf16 %v528, 0
        %v545 = vmax.bf16 %v529, 0
        %v546 = vmax.bf16 %v530, 0
        %v547 = vmax.bf16 %v531, 0
        %v548 = vmax.bf16 %v532, 0
        %v549 = vmax.bf16 %v533, 0
        %v550 = vmax.bf16 %v534, 0
        %v551 = vmax.bf16 %v535, 0
        %v552 = vmax.bf16 %v536, 0
        %v553 = vmax.bf16 %v537, 0
        %v554 = vmax.bf16 %v538, 0
        %v555 = vmax.bf16 %v539, 0
        %v556 = vld [vmem:[#allocation2] sm:$0xff]
        %v557 = vld [vmem:[#allocation2 + $0x8] sm:$0xff]
        %v558 = vld [vmem:[#allocation2 + $0x10] sm:$0xff]
        %v559 = vld [vmem:[#allocation2 + $0x18] sm:$0xff]
        %v560 = vld [vmem:[#allocation2 + $0x20] sm:$0xff]
        %v561 = vld [vmem:[#allocation2 + $0x28] sm:$0xff]
        %v562 = vld [vmem:[#allocation2 + $0x30] sm:$0xff]
        %v563 = vld [vmem:[#allocation2 + $0x38] sm:$0xff]
        %v564 = vld [vmem:[#allocation2 + $0x40] sm:$0xff]
        %v565 = vld [vmem:[#allocation2 + $0x48] sm:$0xff]
        %v566 = vld [vmem:[#allocation2 + $0x50] sm:$0xff]
        %v567 = vld [vmem:[#allocation2 + $0x58] sm:$0xff]
        %v568 = vld [vmem:[#allocation2 + $0x60] sm:$0xff]
        %v569 = vld [vmem:[#allocation2 + $0x68] sm:$0xff]
        %v570 = vld [vmem:[#allocation2 + $0x70] sm:$0xff]
        %v571 = vld [vmem:[#allocation2 + $0x78] sm:$0xff]
        %v572 = vld [vmem:[#allocation2 + $0x80] sm:$0xff]
        %v573 = vld [vmem:[#allocation2 + $0x88] sm:$0xff]
        %v574 = vld [vmem:[#allocation2 + $0x90] sm:$0xff]
        %v575 = vld [vmem:[#allocation2 + $0x98] sm:$0xff]
        %v576 = vld [vmem:[#allocation2 + $0xa0] sm:$0xff]
        %v577 = vld [vmem:[#allocation2 + $0xa8] sm:$0xff]
        %v578 = vld [vmem:[#allocation2 + $0xb0] sm:$0xff]
        %v579 = vld [vmem:[#allocation2 + $0xb8] sm:$0xff]
        %v580 = vld [vmem:[#allocation2 + $0xc0] sm:$0xff]
        %v581 = vld [vmem:[#allocation2 + $0xc8] sm:$0xff]
        %v582 = vld [vmem:[#allocation2 + $0xd0] sm:$0xff]
        %v583 = vld [vmem:[#allocation2 + $0xd8] sm:$0xff]
        %v584 = vld [vmem:[#allocation2 + $0xe0] sm:$0xff]
        %v585 = vld [vmem:[#allocation2 + $0xe8] sm:$0xff]
        %v586 = vld [vmem:[#allocation2 + $0xf0] sm:$0xff]
        %v587 = vld [vmem:[#allocation2 + $0xf8] sm:$0xff]
        %v588 = vld [vmem:[#allocation2 + $0x100] sm:$0xff]
        %v589 = vld [vmem:[#allocation2 + $0x108] sm:$0xff]
        %v590 = vld [vmem:[#allocation2 + $0x110] sm:$0xff]
        %v591 = vld [vmem:[#allocation2 + $0x118] sm:$0xff]
        %v592 = vld [vmem:[#allocation2 + $0x120] sm:$0xff]
        %v593 = vld [vmem:[#allocation2 + $0x128] sm:$0xff]
        %v594 = vld [vmem:[#allocation2 + $0x130] sm:$0xff]
        %v595 = vld [vmem:[#allocation2 + $0x138] sm:$0xff]
        %v596 = vld [vmem:[#allocation2 + $0x140] sm:$0xff]
        %v597 = vld [vmem:[#allocation2 + $0x148] sm:$0xff]
        %v598 = vld [vmem:[#allocation2 + $0x150] sm:$0xff]
        %v599 = vld [vmem:[#allocation2 + $0x158] sm:$0xff]
        %v600 = vld [vmem:[#allocation2 + $0x160] sm:$0xff]
        %v601 = vld [vmem:[#allocation2 + $0x168] sm:$0xff]
        %v602 = vld [vmem:[#allocation2 + $0x170] sm:$0xff]
        %v603 = vld [vmem:[#allocation2 + $0x178] sm:$0xff]
        %v604 = vld [vmem:[%s402] sm:$0xff]
        %v605 = vld [vmem:[%s402 + $0x8] sm:$0xf]
        %v606 = vld [vmem:[%s402 + $0xc] sm:$0xff]
        %v607 = vld [vmem:[%s402 + $0x14] sm:$0xf]
        %v608 = vld [vmem:[%s402 + $0x18] sm:$0xff]
        %v609 = vld [vmem:[%s402 + $0x20] sm:$0xf]
        %v610 = vld [vmem:[%s402 + $0x24] sm:$0xff]
        %v611 = vld [vmem:[%s402 + $0x2c] sm:$0xf]
        %v612 = vld [vmem:[%s402 + $0x30] sm:$0xff]
        %v613 = vld [vmem:[%s402 + $0x38] sm:$0xf]
        %v614 = vld [vmem:[%s402 + $0x3c] sm:$0xff]
        %v615 = vld [vmem:[%s402 + $0x44] sm:$0xf]
        %v616 = vld [vmem:[%s402 + $0x48] sm:$0xff]
        %v617 = vld [vmem:[%s402 + $0x50] sm:$0xf]
        %v618 = vld [vmem:[%s402 + $0x54] sm:$0xff]
        %v619 = vld [vmem:[%s402 + $0x5c] sm:$0xf]
        %v620 = vld [vmem:[%s402 + $0x60] sm:$0xff]
        %v621 = vld [vmem:[%s402 + $0x68] sm:$0xf]
        %v622 = vld [vmem:[%s402 + $0x6c] sm:$0xff]
        %v623 = vld [vmem:[%s402 + $0x74] sm:$0xf]
        %v624 = vld [vmem:[%s402 + $0x78] sm:$0xff]
        %v625 = vld [vmem:[%s402 + $0x80] sm:$0xf]
        %v626 = vld [vmem:[%s402 + $0x84] sm:$0xff]
        %v627 = vld [vmem:[%s402 + $0x8c] sm:$0xf]
        %v628 = vld [vmem:[%s402 + $0x90] sm:$0xff]
        %v629 = vld [vmem:[%s402 + $0x98] sm:$0xf]
        %v630 = vld [vmem:[%s402 + $0x9c] sm:$0xff]
        %v631 = vld [vmem:[%s402 + $0xa4] sm:$0xf]
        %v632 = vld [vmem:[%s402 + $0xa8] sm:$0xff]
        %v633 = vld [vmem:[%s402 + $0xb0] sm:$0xf]
        %v634 = vld [vmem:[%s402 + $0xb4] sm:$0xff]
        %v635 = vld [vmem:[%s402 + $0xbc] sm:$0xf]
        %v652 = vunpack.c.l.b16 %v540
        %v653 = vunpack.c.l.b16 %v541
        %v654 = vunpack.c.l.b16 %v542
        %v655 = vunpack.c.l.b16 %v543
        %v656 = vunpack.c.l.b16 %v544
        %v657 = vunpack.c.l.b16 %v545
        %v658 = vunpack.c.l.b16 %v546
        %v659 = vunpack.c.l.b16 %v547
        %v660 = vunpack.c.l.b16 %v548
        %v661 = vunpack.c.l.b16 %v549
        %v662 = vunpack.c.l.b16 %v550
        %v663 = vunpack.c.l.b16 %v551
        %v664 = vunpack.c.l.b16 %v552
        %v665 = vunpack.c.l.b16 %v553
        %v666 = vunpack.c.l.b16 %v554
        %v667 = vunpack.c.l.b16 %v555
        %v668 = vpack.c.b16 %v653, %v652
        %v669 = vpack.c.b16 %v655, %v654
        %v670 = vpack.c.b16 %v657, %v656
        %v671 = vpack.c.b16 %v659, %v658
        %v672 = vpack.c.b16 %v661, %v660
        %v673 = vpack.c.b16 %v663, %v662
        %v674 = vpack.c.b16 %v665, %v664
        %v675 = vpack.c.b16 %v667, %v666
        %v716 = vunpack.c.l.b16 %v604
        %v717 = vunpack.c.h.b16 %v604
        %v718 = vunpack.c.l.b16 %v605
        %v719 = vunpack.c.l.b16 %v606
        %v720 = vunpack.c.h.b16 %v606
        %v721 = vunpack.c.l.b16 %v607
        %v722 = vunpack.c.l.b16 %v608
        %v723 = vunpack.c.h.b16 %v608
        %v724 = vunpack.c.l.b16 %v609
        %v725 = vunpack.c.l.b16 %v610
        %v726 = vunpack.c.h.b16 %v610
        %v727 = vunpack.c.l.b16 %v611
        %v728 = vunpack.c.l.b16 %v612
        %v729 = vunpack.c.h.b16 %v612
        %v730 = vunpack.c.l.b16 %v613
        %v731 = vunpack.c.l.b16 %v614
        %v732 = vunpack.c.h.b16 %v614
        %v733 = vunpack.c.l.b16 %v615
        %v734 = vunpack.c.l.b16 %v616
        %v735 = vunpack.c.h.b16 %v616
        %v736 = vunpack.c.l.b16 %v617
        %v737 = vunpack.c.l.b16 %v618
        %v738 = vunpack.c.h.b16 %v618
        %v739 = vunpack.c.l.b16 %v619
        %v740 = vunpack.c.l.b16 %v620
        %v741 = vunpack.c.h.b16 %v620
        %v742 = vunpack.c.l.b16 %v621
        %v743 = vunpack.c.l.b16 %v622
        %v744 = vunpack.c.h.b16 %v622
        %v745 = vunpack.c.l.b16 %v623
        %v746 = vunpack.c.l.b16 %v624
        %v747 = vunpack.c.h.b16 %v624
        %v748 = vunpack.c.l.b16 %v625
        %v749 = vunpack.c.l.b16 %v626
        %v750 = vunpack.c.h.b16 %v626
        %v751 = vunpack.c.l.b16 %v627
        %v752 = vunpack.c.l.b16 %v628
        %v753 = vunpack.c.h.b16 %v628
        %v754 = vunpack.c.l.b16 %v629
        %v755 = vunpack.c.l.b16 %v630
        %v756 = vunpack.c.h.b16 %v630
        %v757 = vunpack.c.l.b16 %v631
        %v758 = vunpack.c.l.b16 %v632
        %v759 = vunpack.c.h.b16 %v632
        %v760 = vunpack.c.l.b16 %v633
        %v761 = vunpack.c.l.b16 %v634
        %v762 = vunpack.c.h.b16 %v634
        %v763 = vunpack.c.l.b16 %v635
        %v764 = vpack.c.b16 %v719, %v716
        %v765 = vpack.c.b16 %v720, %v717
        %v766 = vpack.c.b16 %v721, %v718
        %v767 = vpack.c.b16 %v725, %v722
        %v768 = vpack.c.b16 %v726, %v723
        %v769 = vpack.c.b16 %v727, %v724
        %v770 = vpack.c.b16 %v731, %v728
        %v771 = vpack.c.b16 %v732, %v729
        %v772 = vpack.c.b16 %v733, %v730
        %v773 = vpack.c.b16 %v737, %v734
        %v774 = vpack.c.b16 %v738, %v735
        %v775 = vpack.c.b16 %v739, %v736
        %v776 = vpack.c.b16 %v743, %v740
        %v777 = vpack.c.b16 %v744, %v741
        %v778 = vpack.c.b16 %v745, %v742
        %v779 = vpack.c.b16 %v749, %v746
        %v780 = vpack.c.b16 %v750, %v747
        %v781 = vpack.c.b16 %v751, %v748
        %v782 = vpack.c.b16 %v755, %v752
        %v783 = vpack.c.b16 %v756, %v753
        %v784 = vpack.c.b16 %v757, %v754
        %v785 = vpack.c.b16 %v761, %v758
        %v786 = vpack.c.b16 %v762, %v759
        %v787 = vpack.c.b16 %v763, %v760
        %812 = vmatprep.subr.bf16.mxu0 %v765
        %813 = vmatpush1.bf16.msra.mxu0 %v764
        %814 = vmatprep.subr.bf16.mxu0 %v768
        %815 = vmatpush1.bf16.msra.mxu0 %v767
        %816 = vmatprep.subr.bf16.mxu0 %v771
        %817 = vmatpush1.bf16.msra.mxu0 %v770
        %818 = vmatprep.subr.bf16.mxu0 %v774
        %819 = vmatpush1.bf16.msra.mxu0 %v773
        %820 = vmatprep.subr.bf16.mxu0 %v777
        %821 = vmatpush1.bf16.msra.mxu0 %v776
        %822 = vmatprep.subr.bf16.mxu0 %v780
        %823 = vmatpush1.bf16.msra.mxu0 %v779
        %824 = vmatprep.subr.bf16.mxu0 %v783
        %825 = vmatpush1.bf16.msra.mxu0 %v782
        %826 = vmatprep.subr.bf16.mxu0 %v786
        %827 = vmatpush1.bf16.msra.mxu0 %v785
        %828 = vmatprep.subr.bf16.mxu0 0
        %829 = vmatpush1.bf16.msra.mxu0 0
        %830 = vmatprep.subr.bf16.mxu0 0
        %831 = vmatpush1.bf16.msra.mxu0 0
        %832 = vmatprep.subr.bf16.mxu0 0
        %833 = vmatpush1.bf16.msra.mxu0 0
        %834 = vmatprep.subr.bf16.mxu0 0
        %835 = vmatpush1.bf16.msra.mxu0 0
        %836 = vmatprep.subr.bf16.mxu0 0
        %837 = vmatpush1.bf16.msra.mxu0 0
        %838 = vmatprep.subr.bf16.mxu0 0
        %839 = vmatpush1.bf16.msra.mxu0 0
        %840 = vmatprep.subr.bf16.mxu0 0
        %841 = vmatpush1.bf16.msra.mxu0 0
        %842 = vmatprep.subr.bf16.mxu0 0
        %843 = vmatpush1.bf16.msra.mxu0 0
        %844 = vmatprep.mubr.bf16.mxu0 0
        %845 = vmatmul.mubr.bf16.gmra.mrb[0].mxu0 %v668
        %v846 = vpop.f32.mrb[0].mxu0
        %v847 = vadd.f32 0.0, %v846
        %v848 = vpop.f32.mrb[0].mxu0
        %v849 = vadd.f32 0.0, %v848
        %v850 = vpop.f32.mrb[0].mxu0
        %v851 = vadd.f32 0.0, %v850
        %v852 = vpop.f32.mrb[0].mxu0
        %v853 = vadd.f32 0.0, %v852
        %854 = vmatprep.mubr.bf16.mxu0 0
        %855 = vmatmul.mubr.bf16.gmra.mrb[0].mxu0 %v669
        %v856 = vpop.f32.mrb[0].mxu0
        %v857 = vadd.f32 0.0, %v856
        %v858 = vpop.f32.mrb[0].mxu0
        %v859 = vadd.f32 0.0, %v858
        %v860 = vpop.f32.mrb[0].mxu0
        %v861 = vadd.f32 0.0, %v860
        %v862 = vpop.f32.mrb[0].mxu0
        %v863 = vadd.f32 0.0, %v862
        %864 = vmatprep.mubr.bf16.mxu0 0
        %865 = vmatmul.mubr.bf16.gmra.mrb[0].mxu0 %v670
        %v866 = vpop.f32.mrb[0].mxu0
        %v867 = vadd.f32 0.0, %v866
        %v868 = vpop.f32.mrb[0].mxu0
        %v869 = vadd.f32 0.0, %v868
        %v870 = vpop.f32.mrb[0].mxu0
        %v871 = vadd.f32 0.0, %v870
        %v872 = vpop.f32.mrb[0].mxu0
        %v873 = vadd.f32 0.0, %v872
        %874 = vmatprep.mubr.bf16.mxu0 0
        %875 = vmatmul.mubr.bf16.gmra.mrb[0].mxu0 %v671
        %v876 = vpop.f32.mrb[0].mxu0
        %v877 = vadd.f32 0.0, %v876
        %v878 = vpop.f32.mrb[0].mxu0
        %v879 = vadd.f32 0.0, %v878
        %v880 = vpop.f32.mrb[0].mxu0
        %v881 = vadd.f32 0.0, %v880
        %v882 = vpop.f32.mrb[0].mxu0
        %v883 = vadd.f32 0.0, %v882
        %884 = vmatprep.mubr.bf16.mxu0 0
        %885 = vmatmul.mubr.bf16.gmra.mrb[0].mxu0 %v672
        %v886 = vpop.f32.mrb[0].mxu0
        %v887 = vadd.f32 0.0, %v886
        %v888 = vpop.f32.mrb[0].mxu0
        %v889 = vadd.f32 0.0, %v888
        %v890 = vpop.f32.mrb[0].mxu0
        %v891 = vadd.f32 0.0, %v890
        %v892 = vpop.f32.mrb[0].mxu0
        %v893 = vadd.f32 0.0, %v892
        %894 = vmatprep.mubr.bf16.mxu0 0
        %895 = vmatmul.mubr.bf16.gmra.mrb[0].mxu0 %v673
        %v896 = vpop.f32.mrb[0].mxu0
        %v897 = vadd.f32 0.0, %v896
        %v898 = vpop.f32.mrb[0].mxu0
        %v899 = vadd.f32 0.0, %v898
        %v900 = vpop.f32.mrb[0].mxu0
        %v901 = vadd.f32 0.0, %v900
        %v902 = vpop.f32.mrb[0].mxu0
        %v903 = vadd.f32 0.0, %v902
        %904 = vmatprep.mubr.bf16.mxu0 0
        %905 = vmatmul.mubr.bf16.gmra.mrb[0].mxu0 %v674
        %v906 = vpop.f32.mrb[0].mxu0
        %v907 = vadd.f32 0.0, %v906
        %v908 = vpop.f32.mrb[0].mxu0
        %v909 = vadd.f32 0.0, %v908
        %v910 = vpop.f32.mrb[0].mxu0
        %v911 = vadd.f32 0.0, %v910
        %v912 = vpop.f32.mrb[0].mxu0
        %v913 = vadd.f32 0.0, %v912
        %914 = vmatprep.mubr.bf16.mxu0 0
        %915 = vmatmul.mubr.bf16.gmra.mrb[0].mxu0 %v675
        %v916 = vpop.f32.mrb[0].mxu0
        %v917 = vadd.f32 0.0, %v916
        %v918 = vpop.f32.mrb[0].mxu0
        %v919 = vadd.f32 0.0, %v918
        %v920 = vpop.f32.mrb[0].mxu0
        %v921 = vadd.f32 0.0, %v920
        %v922 = vpop.f32.mrb[0].mxu0
        %v923 = vadd.f32 0.0, %v922
        %924 = vdwg.mxu0
        %925 = vmatprep.subr.bf16.mxu0 0
        %926 = vmatpush1.bf16.msra.mxu0 %v766
        %927 = vmatprep.subr.bf16.mxu0 0
        %928 = vmatpush1.bf16.msra.mxu0 %v769
        %929 = vmatprep.subr.bf16.mxu0 0
        %930 = vmatpush1.bf16.msra.mxu0 %v772
        %931 = vmatprep.subr.bf16.mxu0 0
        %932 = vmatpush1.bf16.msra.mxu0 %v775
        %933 = vmatprep.subr.bf16.mxu0 0
        %934 = vmatpush1.bf16.msra.mxu0 %v778
        %935 = vmatprep.subr.bf16.mxu0 0
        %936 = vmatpush1.bf16.msra.mxu0 %v781
        %937 = vmatprep.subr.bf16.mxu0 0
        %938 = vmatpush1.bf16.msra.mxu0 %v784
        %939 = vmatprep.subr.bf16.mxu0 0
        %940 = vmatpush1.bf16.msra.mxu0 %v787
        %941 = vmatprep.subr.bf16.mxu0 0
        %942 = vmatpush1.bf16.msra.mxu0 0
        %943 = vmatprep.subr.bf16.mxu0 0
        %944 = vmatpush1.bf16.msra.mxu0 0
        %945 = vmatprep.subr.bf16.mxu0 0
        %946 = vmatpush1.bf16.msra.mxu0 0
        %947 = vmatprep.subr.bf16.mxu0 0
        %948 = vmatpush1.bf16.msra.mxu0 0
        %949 = vmatprep.subr.bf16.mxu0 0
        %950 = vmatpush1.bf16.msra.mxu0 0
        %951 = vmatprep.subr.bf16.mxu0 0
        %952 = vmatpush1.bf16.msra.mxu0 0
        %953 = vmatprep.subr.bf16.mxu0 0
        %954 = vmatpush1.bf16.msra.mxu0 0
        %955 = vmatprep.subr.bf16.mxu0 0
        %956 = vmatpush1.bf16.msra.mxu0 0
        %957 = vmatprep.mubr.bf16.mxu0 0
        %958 = vmatmul.mubr.bf16.gmra.mrb[0].mxu0 %v668
        %v959 = vpop.f32.mrb[0].mxu0
        %v960 = vadd.f32 0.0, %v959
        %v961 = vpop.f32.mrb[0].mxu0
        %v962 = vpop.f32.mrb[0].mxu0
        %v963 = vadd.f32 0.0, %v962
        %v964 = vpop.f32.mrb[0].mxu0
        %965 = vmatprep.mubr.bf16.mxu0 0
        %966 = vmatmul.mubr.bf16.gmra.mrb[0].mxu0 %v669
        %v967 = vpop.f32.mrb[0].mxu0
        %v968 = vadd.f32 0.0, %v967
        %v969 = vpop.f32.mrb[0].mxu0
        %v970 = vpop.f32.mrb[0].mxu0
        %v971 = vadd.f32 0.0, %v970
        %v972 = vpop.f32.mrb[0].mxu0
        %973 = vmatprep.mubr.bf16.mxu0 0
        %974 = vmatmul.mubr.bf16.gmra.mrb[0].mxu0 %v670
        %v975 = vpop.f32.mrb[0].mxu0
        %v976 = vadd.f32 0.0, %v975
        %v977 = vpop.f32.mrb[0].mxu0
        %v978 = vpop.f32.mrb[0].mxu0
        %v979 = vadd.f32 0.0, %v978
        %v980 = vpop.f32.mrb[0].mxu0
        %981 = vmatprep.mubr.bf16.mxu0 0
        %982 = vmatmul.mubr.bf16.gmra.mrb[0].mxu0 %v671
        %v983 = vpop.f32.mrb[0].mxu0
        %v984 = vadd.f32 0.0, %v983
        %v985 = vpop.f32.mrb[0].mxu0
        %v986 = vpop.f32.mrb[0].mxu0
        %v987 = vadd.f32 0.0, %v986
        %v988 = vpop.f32.mrb[0].mxu0
        %989 = vmatprep.mubr.bf16.mxu0 0
        %990 = vmatmul.mubr.bf16.gmra.mrb[0].mxu0 %v672
        %v991 = vpop.f32.mrb[0].mxu0
        %v992 = vadd.f32 0.0, %v991
        %v993 = vpop.f32.mrb[0].mxu0
        %v994 = vpop.f32.mrb[0].mxu0
        %v995 = vadd.f32 0.0, %v994
        %v996 = vpop.f32.mrb[0].mxu0
        %997 = vmatprep.mubr.bf16.mxu0 0
        %998 = vmatmul.mubr.bf16.gmra.mrb[0].mxu0 %v673
        %v999 = vpop.f32.mrb[0].mxu0
        %v1000 = vadd.f32 0.0, %v999
        %v1001 = vpop.f32.mrb[0].mxu0
        %v1002 = vpop.f32.mrb[0].mxu0
        %v1003 = vadd.f32 0.0, %v1002
        %v1004 = vpop.f32.mrb[0].mxu0
        %1005 = vmatprep.mubr.bf16.mxu0 0
        %1006 = vmatmul.mubr.bf16.gmra.mrb[0].mxu0 %v674
        %v1007 = vpop.f32.mrb[0].mxu0
        %v1008 = vadd.f32 0.0, %v1007
        %v1009 = vpop.f32.mrb[0].mxu0
        %v1010 = vpop.f32.mrb[0].mxu0
        %v1011 = vadd.f32 0.0, %v1010
        %v1012 = vpop.f32.mrb[0].mxu0
        %1013 = vmatprep.mubr.bf16.mxu0 0
        %1014 = vmatmul.mubr.bf16.gmra.mrb[0].mxu0 %v675
        %v1015 = vpop.f32.mrb[0].mxu0
        %v1016 = vadd.f32 0.0, %v1015
        %v1017 = vpop.f32.mrb[0].mxu0
        %v1018 = vpop.f32.mrb[0].mxu0
        %v1019 = vadd.f32 0.0, %v1018
        %v1020 = vpop.f32.mrb[0].mxu0
        %1021 = vdwg.mxu0
        %v1022 = vadd.f32 %v556, %v847
        %v1023 = vadd.f32 %v557, %v849
        %v1024 = vadd.f32 %v558, %v960
        %v1025 = vadd.f32 %v559, %v851
        %v1026 = vadd.f32 %v560, %v853
        %v1027 = vadd.f32 %v561, %v963
        %v1028 = vadd.f32 %v562, %v857
        %v1029 = vadd.f32 %v563, %v859
        %v1030 = vadd.f32 %v564, %v968
        %v1031 = vadd.f32 %v565, %v861
        %v1032 = vadd.f32 %v566, %v863
        %v1033 = vadd.f32 %v567, %v971
        %v1034 = vadd.f32 %v568, %v867
        %v1035 = vadd.f32 %v569, %v869
        %v1036 = vadd.f32 %v570, %v976
        %v1037 = vadd.f32 %v571, %v871
        %v1038 = vadd.f32 %v572, %v873
        %v1039 = vadd.f32 %v573, %v979
        %v1040 = vadd.f32 %v574, %v877
        %v1041 = vadd.f32 %v575, %v879
        %v1042 = vadd.f32 %v576, %v984
        %v1043 = vadd.f32 %v577, %v881
        %v1044 = vadd.f32 %v578, %v883
        %v1045 = vadd.f32 %v579, %v987
        %v1046 = vadd.f32 %v580, %v887
        %v1047 = vadd.f32 %v581, %v889
        %v1048 = vadd.f32 %v582, %v992
        %v1049 = vadd.f32 %v583, %v891
        %v1050 = vadd.f32 %v584, %v893
        %v1051 = vadd.f32 %v585, %v995
        %v1052 = vadd.f32 %v586, %v897
        %v1053 = vadd.f32 %v587, %v899
        %v1054 = vadd.f32 %v588, %v1000
        %v1055 = vadd.f32 %v589, %v901
        %v1056 = vadd.f32 %v590, %v903
        %v1057 = vadd.f32 %v591, %v1003
        %v1058 = vadd.f32 %v592, %v907
        %v1059 = vadd.f32 %v593, %v909
        %v1060 = vadd.f32 %v594, %v1008
        %v1061 = vadd.f32 %v595, %v911
        %v1062 = vadd.f32 %v596, %v913
        %v1063 = vadd.f32 %v597, %v1011
        %v1064 = vadd.f32 %v598, %v917
        %v1065 = vadd.f32 %v599, %v919
        %v1066 = vadd.f32 %v600, %v1016
        %v1067 = vadd.f32 %v601, %v921
        %v1068 = vadd.f32 %v602, %v923
        %v1069 = vadd.f32 %v603, %v1019
        %1070 = vst [vmem:[#allocation2] sm:$0xff] %v1022
        %1071 = vst [vmem:[#allocation2 + $0x8] sm:$0xff] %v1023
        %1072 = vst [vmem:[#allocation2 + $0x10] sm:$0xff] %v1024
        %1073 = vst [vmem:[#allocation2 + $0x18] sm:$0xff] %v1025
        %1074 = vst [vmem:[#allocation2 + $0x20] sm:$0xff] %v1026
        %1075 = vst [vmem:[#allocation2 + $0x28] sm:$0xff] %v1027
        %1076 = vst [vmem:[#allocation2 + $0x30] sm:$0xff] %v1028
        %1077 = vst [vmem:[#allocation2 + $0x38] sm:$0xff] %v1029
        %1078 = vst [vmem:[#allocation2 + $0x40] sm:$0xff] %v1030
        %1079 = vst [vmem:[#allocation2 + $0x48] sm:$0xff] %v1031
        %1080 = vst [vmem:[#allocation2 + $0x50] sm:$0xff] %v1032
        %1081 = vst [vmem:[#allocation2 + $0x58] sm:$0xff] %v1033
        %1082 = vst [vmem:[#allocation2 + $0x60] sm:$0xff] %v1034
        %1083 = vst [vmem:[#allocation2 + $0x68] sm:$0xff] %v1035
        %1084 = vst [vmem:[#allocation2 + $0x70] sm:$0xff] %v1036
        %1085 = vst [vmem:[#allocation2 + $0x78] sm:$0xff] %v1037
        %1086 = vst [vmem:[#allocation2 + $0x80] sm:$0xff] %v1038
        %1087 = vst [vmem:[#allocation2 + $0x88] sm:$0xff] %v1039
        %1088 = vst [vmem:[#allocation2 + $0x90] sm:$0xff] %v1040
        %1089 = vst [vmem:[#allocation2 + $0x98] sm:$0xff] %v1041
        %1090 = vst [vmem:[#allocation2 + $0xa0] sm:$0xff] %v1042
        %1091 = vst [vmem:[#allocation2 + $0xa8] sm:$0xff] %v1043
        %1092 = vst [vmem:[#allocation2 + $0xb0] sm:$0xff] %v1044
        %1093 = vst [vmem:[#allocation2 + $0xb8] sm:$0xff] %v1045
        %1094 = vst [vmem:[#allocation2 + $0xc0] sm:$0xff] %v1046
        %1095 = vst [vmem:[#allocation2 + $0xc8] sm:$0xff] %v1047
        %1096 = vst [vmem:[#allocation2 + $0xd0] sm:$0xff] %v1048
        %1097 = vst [vmem:[#allocation2 + $0xd8] sm:$0xff] %v1049
        %1098 = vst [vmem:[#allocation2 + $0xe0] sm:$0xff] %v1050
        %1099 = vst [vmem:[#allocation2 + $0xe8] sm:$0xff] %v1051
        %1100 = vst [vmem:[#allocation2 + $0xf0] sm:$0xff] %v1052
        %1101 = vst [vmem:[#allocation2 + $0xf8] sm:$0xff] %v1053
        %1102 = vst [vmem:[#allocation2 + $0x100] sm:$0xff] %v1054
        %1103 = vst [vmem:[#allocation2 + $0x108] sm:$0xff] %v1055
        %1104 = vst [vmem:[#allocation2 + $0x110] sm:$0xff] %v1056
        %1105 = vst [vmem:[#allocation2 + $0x118] sm:$0xff] %v1057
        %1106 = vst [vmem:[#allocation2 + $0x120] sm:$0xff] %v1058
        %1107 = vst [vmem:[#allocation2 + $0x128] sm:$0xff] %v1059
        %1108 = vst [vmem:[#allocation2 + $0x130] sm:$0xff] %v1060
        %1109 = vst [vmem:[#allocation2 + $0x138] sm:$0xff] %v1061
        %1110 = vst [vmem:[#allocation2 + $0x140] sm:$0xff] %v1062
        %1111 = vst [vmem:[#allocation2 + $0x148] sm:$0xff] %v1063
        %1112 = vst [vmem:[#allocation2 + $0x150] sm:$0xff] %v1064
        %1113 = vst [vmem:[#allocation2 + $0x158] sm:$0xff] %v1065
        %1114 = vst [vmem:[#allocation2 + $0x160] sm:$0xff] %v1066
        %1115 = vst [vmem:[#allocation2 + $0x168] sm:$0xff] %v1067
        %1116 = vst [vmem:[#allocation2 + $0x170] sm:$0xff] %v1068
        %1117 = vst [vmem:[#allocation2 + $0x178] sm:$0xff] %v1069
        %p1118 = scmp.eq.s32.totalorder %s42, 1
        // Predicated region
        $region65: #{tpu_custom_call.1} parent=43 // pred_check
          %p1119 = pneg %p1118
        $region66: #{tpu_custom_call.1} parent=43 // pred_check_branch
          %1121 = sbr.rel (%p1119) target = $region68
        $region67: #{tpu_custom_call.1} parent=43 // pred_region
          %v1122 = vld [vmem:[#allocation2] sm:$0xff]
          %v1123 = vld [vmem:[#allocation2 + $0x8] sm:$0xff]
          %v1124 = vld [vmem:[#allocation2 + $0x10] sm:$0xff]
          %v1125 = vld [vmem:[#allocation2 + $0x18] sm:$0xff]
          %v1126 = vld [vmem:[#allocation2 + $0x20] sm:$0xff]
          %v1127 = vld [vmem:[#allocation2 + $0x28] sm:$0xff]
          %v1128 = vld [vmem:[#allocation2 + $0x30] sm:$0xff]
          %v1129 = vld [vmem:[#allocation2 + $0x38] sm:$0xff]
          %v1130 = vld [vmem:[#allocation2 + $0x40] sm:$0xff]
          %v1131 = vld [vmem:[#allocation2 + $0x48] sm:$0xff]
          %v1132 = vld [vmem:[#allocation2 + $0x50] sm:$0xff]
          %v1133 = vld [vmem:[#allocation2 + $0x58] sm:$0xff]
          %v1134 = vld [vmem:[#allocation2 + $0x60] sm:$0xff]
          %v1135 = vld [vmem:[#allocation2 + $0x68] sm:$0xff]
          %v1136 = vld [vmem:[#allocation2 + $0x70] sm:$0xff]
          %v1137 = vld [vmem:[#allocation2 + $0x78] sm:$0xff]
          %v1138 = vld [vmem:[#allocation2 + $0x80] sm:$0xff]
          %v1139 = vld [vmem:[#allocation2 + $0x88] sm:$0xff]
          %v1140 = vld [vmem:[#allocation2 + $0x90] sm:$0xff]
          %v1141 = vld [vmem:[#allocation2 + $0x98] sm:$0xff]
          %v1142 = vld [vmem:[#allocation2 + $0xa0] sm:$0xff]
          %v1143 = vld [vmem:[#allocation2 + $0xa8] sm:$0xff]
          %v1144 = vld [vmem:[#allocation2 + $0xb0] sm:$0xff]
          %v1145 = vld [vmem:[#allocation2 + $0xb8] sm:$0xff]
          %v1146 = vld [vmem:[#allocation2 + $0xc0] sm:$0xff]
          %v1147 = vld [vmem:[#allocation2 + $0xc8] sm:$0xff]
          %v1148 = vld [vmem:[#allocation2 + $0xd0] sm:$0xff]
          %v1149 = vld [vmem:[#allocation2 + $0xd8] sm:$0xff]
          %v1150 = vld [vmem:[#allocation2 + $0xe0] sm:$0xff]
          %v1151 = vld [vmem:[#allocation2 + $0xe8] sm:$0xff]
          %v1152 = vld [vmem:[#allocation2 + $0xf0] sm:$0xff]
          %v1153 = vld [vmem:[#allocation2 + $0xf8] sm:$0xff]
          %v1154 = vld [vmem:[#allocation2 + $0x100] sm:$0xff]
          %v1155 = vld [vmem:[#allocation2 + $0x108] sm:$0xff]
          %v1156 = vld [vmem:[#allocation2 + $0x110] sm:$0xff]
          %v1157 = vld [vmem:[#allocation2 + $0x118] sm:$0xff]
          %v1158 = vld [vmem:[#allocation2 + $0x120] sm:$0xff]
          %v1159 = vld [vmem:[#allocation2 + $0x128] sm:$0xff]
          %v1160 = vld [vmem:[#allocation2 + $0x130] sm:$0xff]
          %v1161 = vld [vmem:[#allocation2 + $0x138] sm:$0xff]
          %v1162 = vld [vmem:[#allocation2 + $0x140] sm:$0xff]
          %v1163 = vld [vmem:[#allocation2 + $0x148] sm:$0xff]
          %v1164 = vld [vmem:[#allocation2 + $0x150] sm:$0xff]
          %v1165 = vld [vmem:[#allocation2 + $0x158] sm:$0xff]
          %v1166 = vld [vmem:[#allocation2 + $0x160] sm:$0xff]
          %v1167 = vld [vmem:[#allocation2 + $0x168] sm:$0xff]
          %v1168 = vld [vmem:[#allocation2 + $0x170] sm:$0xff]
          %v1169 = vld [vmem:[#allocation2 + $0x178] sm:$0xff]
          %v1170 = vld [vmem:[%s2] sm:$0x7]
          %v1172 = vlaneseq
          %v1173 = vshrl.u32 %v1172, 7
          %v1174 = vsub.s32 0, %v1173
          %v1175 = vrot.slane %v1170, %v1174
          %v1176 = vlaneseq
          %v1177 = vshrl.u32 %v1176, 7
          %v1178 = vsub.s32 1, %v1177
          %v1179 = vrot.slane %v1170, %v1178
          %v1180 = vlaneseq
          %v1181 = vshrl.u32 %v1180, 7
          %v1182 = vsub.s32 2, %v1181
          %v1183 = vrot.slane %v1170, %v1182
          %v1187 = vadd.f32 %v1122, %v1175
          %v1188 = vadd.f32 %v1123, %v1179
          %v1189 = vadd.f32 %v1124, %v1183
          %v1190 = vadd.f32 %v1125, %v1175
          %v1191 = vadd.f32 %v1126, %v1179
          %v1192 = vadd.f32 %v1127, %v1183
          %v1193 = vadd.f32 %v1128, %v1175
          %v1194 = vadd.f32 %v1129, %v1179
          %v1195 = vadd.f32 %v1130, %v1183
          %v1196 = vadd.f32 %v1131, %v1175
          %v1197 = vadd.f32 %v1132, %v1179
          %v1198 = vadd.f32 %v1133, %v1183
          %v1199 = vadd.f32 %v1134, %v1175
          %v1200 = vadd.f32 %v1135, %v1179
          %v1201 = vadd.f32 %v1136, %v1183
          %v1202 = vadd.f32 %v1137, %v1175
          %v1203 = vadd.f32 %v1138, %v1179
          %v1204 = vadd.f32 %v1139, %v1183
          %v1205 = vadd.f32 %v1140, %v1175
          %v1206 = vadd.f32 %v1141, %v1179
          %v1207 = vadd.f32 %v1142, %v1183
          %v1208 = vadd.f32 %v1143, %v1175
          %v1209 = vadd.f32 %v1144, %v1179
          %v1210 = vadd.f32 %v1145, %v1183
          %v1211 = vadd.f32 %v1146, %v1175
          %v1212 = vadd.f32 %v1147, %v1179
          %v1213 = vadd.f32 %v1148, %v1183
          %v1214 = vadd.f32 %v1149, %v1175
          %v1215 = vadd.f32 %v1150, %v1179
          %v1216 = vadd.f32 %v1151, %v1183
          %v1217 = vadd.f32 %v1152, %v1175
          %v1218 = vadd.f32 %v1153, %v1179
          %v1219 = vadd.f32 %v1154, %v1183
          %v1220 = vadd.f32 %v1155, %v1175
          %v1221 = vadd.f32 %v1156, %v1179
          %v1222 = vadd.f32 %v1157, %v1183
          %v1223 = vadd.f32 %v1158, %v1175
          %v1224 = vadd.f32 %v1159, %v1179
          %v1225 = vadd.f32 %v1160, %v1183
          %v1226 = vadd.f32 %v1161, %v1175
          %v1227 = vadd.f32 %v1162, %v1179
          %v1228 = vadd.f32 %v1163, %v1183
          %v1229 = vadd.f32 %v1164, %v1175
          %v1230 = vadd.f32 %v1165, %v1179
          %v1231 = vadd.f32 %v1166, %v1183
          %v1232 = vadd.f32 %v1167, %v1175
          %v1233 = vadd.f32 %v1168, %v1179
          %v1234 = vadd.f32 %v1169, %v1183
          %v1235 = vmax.f32 %v1187, 0.0
          %v1236 = vmax.f32 %v1188, 0.0
          %v1237 = vmax.f32 %v1190, 0.0
          %v1238 = vmax.f32 %v1191, 0.0
          %v1239 = vmax.f32 %v1193, 0.0
          %v1240 = vmax.f32 %v1194, 0.0
          %v1241 = vmax.f32 %v1196, 0.0
          %v1242 = vmax.f32 %v1197, 0.0
          %v1243 = vmax.f32 %v1199, 0.0
          %v1244 = vmax.f32 %v1200, 0.0
          %v1245 = vmax.f32 %v1202, 0.0
          %v1246 = vmax.f32 %v1203, 0.0
          %v1247 = vmax.f32 %v1205, 0.0
          %v1248 = vmax.f32 %v1206, 0.0
          %v1249 = vmax.f32 %v1208, 0.0
          %v1250 = vmax.f32 %v1209, 0.0
          %v1251 = vmax.f32 %v1211, 0.0
          %v1252 = vmax.f32 %v1212, 0.0
          %v1253 = vmax.f32 %v1214, 0.0
          %v1254 = vmax.f32 %v1215, 0.0
          %v1255 = vmax.f32 %v1217, 0.0
          %v1256 = vmax.f32 %v1218, 0.0
          %v1257 = vmax.f32 %v1220, 0.0
          %v1258 = vmax.f32 %v1221, 0.0
          %v1259 = vmax.f32 %v1223, 0.0
          %v1260 = vmax.f32 %v1224, 0.0
          %v1261 = vmax.f32 %v1226, 0.0
          %v1262 = vmax.f32 %v1227, 0.0
          %v1263 = vmax.f32 %v1229, 0.0
          %v1264 = vmax.f32 %v1230, 0.0
          %v1265 = vmax.f32 %v1232, 0.0
          %v1266 = vmax.f32 %v1233, 0.0
          %1267 = vst [vmem:[%s450] sm:$0xff] %v1189
          %1268 = vst [vmem:[%s450 + $0x8] sm:$0xff] %v1192
          %1269 = vst [vmem:[%s450 + $0x10] sm:$0xff] %v1195
          %1270 = vst [vmem:[%s450 + $0x18] sm:$0xff] %v1198
          %1271 = vst [vmem:[%s450 + $0x20] sm:$0xff] %v1201
          %1272 = vst [vmem:[%s450 + $0x28] sm:$0xff] %v1204
          %1273 = vst [vmem:[%s450 + $0x30] sm:$0xff] %v1207
          %1274 = vst [vmem:[%s450 + $0x38] sm:$0xff] %v1210
          %1275 = vst [vmem:[%s450 + $0x40] sm:$0xff] %v1213
          %1276 = vst [vmem:[%s450 + $0x48] sm:$0xff] %v1216
          %1277 = vst [vmem:[%s450 + $0x50] sm:$0xff] %v1219
          %1278 = vst [vmem:[%s450 + $0x58] sm:$0xff] %v1222
          %1279 = vst [vmem:[%s450 + $0x60] sm:$0xff] %v1225
          %1280 = vst [vmem:[%s450 + $0x68] sm:$0xff] %v1228
          %1281 = vst [vmem:[%s450 + $0x70] sm:$0xff] %v1231
          %1282 = vst [vmem:[%s450 + $0x78] sm:$0xff] %v1234
          %v1283 = vpack.c.bf16 %v1237, %v1235
          %v1284 = vpack.c.bf16 %v1238, %v1236
          %v1285 = vpack.c.bf16 %v1241, %v1239
          %v1286 = vpack.c.bf16 %v1242, %v1240
          %v1287 = vpack.c.bf16 %v1245, %v1243
          %v1288 = vpack.c.bf16 %v1246, %v1244
          %v1289 = vpack.c.bf16 %v1249, %v1247
          %v1290 = vpack.c.bf16 %v1250, %v1248
          %v1291 = vpack.c.bf16 %v1253, %v1251
          %v1292 = vpack.c.bf16 %v1254, %v1252
          %v1293 = vpack.c.bf16 %v1257, %v1255
          %v1294 = vpack.c.bf16 %v1258, %v1256
          %v1295 = vpack.c.bf16 %v1261, %v1259
          %v1296 = vpack.c.bf16 %v1262, %v1260
          %v1297 = vpack.c.bf16 %v1265, %v1263
          %v1298 = vpack.c.bf16 %v1266, %v1264
          %v1299 = vld [vmem:[#allocation8] sm:$0xf]
          %v1300 = vld [vmem:[#allocation8 + $0x4] sm:$0xf]
          %v1301 = vld [vmem:[#allocation8 + $0x8] sm:$0xf]
          %v1302 = vld [vmem:[#allocation8 + $0xc] sm:$0xf]
          %v1303 = vld [vmem:[#allocation8 + $0x10] sm:$0xf]
          %v1304 = vld [vmem:[#allocation8 + $0x14] sm:$0xf]
          %v1305 = vld [vmem:[#allocation8 + $0x18] sm:$0xf]
          %v1306 = vld [vmem:[#allocation8 + $0x1c] sm:$0xf]
          %v1307 = vld [vmem:[#allocation8 + $0x20] sm:$0xf]
          %v1308 = vld [vmem:[#allocation8 + $0x24] sm:$0xf]
          %v1309 = vld [vmem:[#allocation8 + $0x28] sm:$0xf]
          %v1310 = vld [vmem:[#allocation8 + $0x2c] sm:$0xf]
          %v1311 = vld [vmem:[#allocation8 + $0x30] sm:$0xf]
          %v1312 = vld [vmem:[#allocation8 + $0x34] sm:$0xf]
          %v1313 = vld [vmem:[#allocation8 + $0x38] sm:$0xf]
          %v1314 = vld [vmem:[#allocation8 + $0x3c] sm:$0xf]
          %v1315 = vld [vmem:[#allocation8 + $0x40] sm:$0xf]
          %v1316 = vld [vmem:[#allocation8 + $0x44] sm:$0xf]
          %v1317 = vld [vmem:[#allocation8 + $0x48] sm:$0xf]
          %v1318 = vld [vmem:[#allocation8 + $0x4c] sm:$0xf]
          %v1319 = vld [vmem:[#allocation8 + $0x50] sm:$0xf]
          %v1320 = vld [vmem:[#allocation8 + $0x54] sm:$0xf]
          %v1321 = vld [vmem:[#allocation8 + $0x58] sm:$0xf]
          %v1322 = vld [vmem:[#allocation8 + $0x5c] sm:$0xf]
          %v1323 = vld [vmem:[#allocation8 + $0x60] sm:$0xf]
          %v1324 = vld [vmem:[#allocation8 + $0x64] sm:$0xf]
          %v1325 = vld [vmem:[#allocation8 + $0x68] sm:$0xf]
          %v1326 = vld [vmem:[#allocation8 + $0x6c] sm:$0xf]
          %v1327 = vld [vmem:[#allocation8 + $0x70] sm:$0xf]
          %v1328 = vld [vmem:[#allocation8 + $0x74] sm:$0xf]
          %v1329 = vld [vmem:[#allocation8 + $0x78] sm:$0xf]
          %v1330 = vld [vmem:[#allocation8 + $0x7c] sm:$0xf]
          %v1331 = vld [vmem:[%s4] sm:$0x1]
          %v1333 = vlaneseq
          %v1334 = vshrl.u32 %v1333, 7
          %v1335 = vsub.s32 0, %v1334
          %v1336 = vrot.slane %v1331, %v1335
          %v1370 = vunpack.c.l.b16 %v1299
          %v1371 = vunpack.c.l.b16 %v1300
          %v1372 = vunpack.c.l.b16 %v1301
          %v1373 = vunpack.c.l.b16 %v1302
          %v1374 = vunpack.c.l.b16 %v1303
          %v1375 = vunpack.c.l.b16 %v1304
          %v1376 = vunpack.c.l.b16 %v1305
          %v1377 = vunpack.c.l.b16 %v1306
          %v1378 = vunpack.c.l.b16 %v1307
          %v1379 = vunpack.c.l.b16 %v1308
          %v1380 = vunpack.c.l.b16 %v1309
          %v1381 = vunpack.c.l.b16 %v1310
          %v1382 = vunpack.c.l.b16 %v1311
          %v1383 = vunpack.c.l.b16 %v1312
          %v1384 = vunpack.c.l.b16 %v1313
          %v1385 = vunpack.c.l.b16 %v1314
          %v1386 = vunpack.c.l.b16 %v1315
          %v1387 = vunpack.c.l.b16 %v1316
          %v1388 = vunpack.c.l.b16 %v1317
          %v1389 = vunpack.c.l.b16 %v1318
          %v1390 = vunpack.c.l.b16 %v1319
          %v1391 = vunpack.c.l.b16 %v1320
          %v1392 = vunpack.c.l.b16 %v1321
          %v1393 = vunpack.c.l.b16 %v1322
          %v1394 = vunpack.c.l.b16 %v1323
          %v1395 = vunpack.c.l.b16 %v1324
          %v1396 = vunpack.c.l.b16 %v1325
          %v1397 = vunpack.c.l.b16 %v1326
          %v1398 = vunpack.c.l.b16 %v1327
          %v1399 = vunpack.c.l.b16 %v1328
          %v1400 = vunpack.c.l.b16 %v1329
          %v1401 = vunpack.c.l.b16 %v1330
          %v1402 = vpack.c.b16 %v1371, %v1370
          %v1403 = vpack.c.b16 %v1373, %v1372
          %v1404 = vpack.c.b16 %v1375, %v1374
          %v1405 = vpack.c.b16 %v1377, %v1376
          %v1406 = vpack.c.b16 %v1379, %v1378
          %v1407 = vpack.c.b16 %v1381, %v1380
          %v1408 = vpack.c.b16 %v1383, %v1382
          %v1409 = vpack.c.b16 %v1385, %v1384
          %v1410 = vpack.c.b16 %v1387, %v1386
          %v1411 = vpack.c.b16 %v1389, %v1388
          %v1412 = vpack.c.b16 %v1391, %v1390
          %v1413 = vpack.c.b16 %v1393, %v1392
          %v1414 = vpack.c.b16 %v1395, %v1394
          %v1415 = vpack.c.b16 %v1397, %v1396
          %v1416 = vpack.c.b16 %v1399, %v1398
          %v1417 = vpack.c.b16 %v1401, %v1400
          %1434 = vmatprep.subr.bf16.mxu0 0
          %1435 = vmatpush1.bf16.msra.mxu0 %v1402
          %1436 = vmatprep.subr.bf16.mxu0 0
          %1437 = vmatpush1.bf16.msra.mxu0 %v1403
          %1438 = vmatprep.subr.bf16.mxu0 0
          %1439 = vmatpush1.bf16.msra.mxu0 %v1404
          %1440 = vmatprep.subr.bf16.mxu0 0
          %1441 = vmatpush1.bf16.msra.mxu0 %v1405
          %1442 = vmatprep.subr.bf16.mxu0 0
          %1443 = vmatpush1.bf16.msra.mxu0 %v1406
          %1444 = vmatprep.subr.bf16.mxu0 0
          %1445 = vmatpush1.bf16.msra.mxu0 %v1407
          %1446 = vmatprep.subr.bf16.mxu0 0
          %1447 = vmatpush1.bf16.msra.mxu0 %v1408
          %1448 = vmatprep.subr.bf16.mxu0 0
          %1449 = vmatpush1.bf16.msra.mxu0 %v1409
          %1450 = vmatprep.subr.bf16.mxu0 0
          %1451 = vmatpush1.bf16.msra.mxu0 %v1410
          %1452 = vmatprep.subr.bf16.mxu0 0
          %1453 = vmatpush1.bf16.msra.mxu0 %v1411
          %1454 = vmatprep.subr.bf16.mxu0 0
          %1455 = vmatpush1.bf16.msra.mxu0 %v1412
          %1456 = vmatprep.subr.bf16.mxu0 0
          %1457 = vmatpush1.bf16.msra.mxu0 %v1413
          %1458 = vmatprep.subr.bf16.mxu0 0
          %1459 = vmatpush1.bf16.msra.mxu0 %v1414
          %1460 = vmatprep.subr.bf16.mxu0 0
          %1461 = vmatpush1.bf16.msra.mxu0 %v1415
          %1462 = vmatprep.subr.bf16.mxu0 0
          %1463 = vmatpush1.bf16.msra.mxu0 %v1416
          %1464 = vmatprep.subr.bf16.mxu0 0
          %1465 = vmatpush1.bf16.msra.mxu0 %v1417
          %1466 = vmatprep.mubr.bf16.mxu0 %v1284
          %1467 = vmatmul.mubr.bf16.gmra.mrb[0].mxu0 %v1283
          %v1468 = vpop.f32.mrb[0].mxu0
          %v1469 = vadd.f32 %v1336, %v1468
          %v1470 = vpop.f32.mrb[0].mxu0
          %v1471 = vpop.f32.mrb[0].mxu0
          %v1472 = vadd.f32 %v1336, %v1471
          %v1473 = vpop.f32.mrb[0].mxu0
          %1474 = vmatprep.mubr.bf16.mxu0 %v1286
          %1475 = vmatmul.mubr.bf16.gmra.mrb[0].mxu0 %v1285
          %v1476 = vpop.f32.mrb[0].mxu0
          %v1477 = vadd.f32 %v1336, %v1476
          %v1478 = vpop.f32.mrb[0].mxu0
          %v1479 = vpop.f32.mrb[0].mxu0
          %v1480 = vadd.f32 %v1336, %v1479
          %v1481 = vpop.f32.mrb[0].mxu0
          %1482 = vmatprep.mubr.bf16.mxu0 %v1288
          %1483 = vmatmul.mubr.bf16.gmra.mrb[0].mxu0 %v1287
          %v1484 = vpop.f32.mrb[0].mxu0
          %v1485 = vadd.f32 %v1336, %v1484
          %v1486 = vpop.f32.mrb[0].mxu0
          %v1487 = vpop.f32.mrb[0].mxu0
          %v1488 = vadd.f32 %v1336, %v1487
          %v1489 = vpop.f32.mrb[0].mxu0
          %1490 = vmatprep.mubr.bf16.mxu0 %v1290
          %1491 = vmatmul.mubr.bf16.gmra.mrb[0].mxu0 %v1289
          %v1492 = vpop.f32.mrb[0].mxu0
          %v1493 = vadd.f32 %v1336, %v1492
          %v1494 = vpop.f32.mrb[0].mxu0
          %v1495 = vpop.f32.mrb[0].mxu0
          %v1496 = vadd.f32 %v1336, %v1495
          %v1497 = vpop.f32.mrb[0].mxu0
          %1498 = vmatprep.mubr.bf16.mxu0 %v1292
          %1499 = vmatmul.mubr.bf16.gmra.mrb[0].mxu0 %v1291
          %v1500 = vpop.f32.mrb[0].mxu0
          %v1501 = vadd.f32 %v1336, %v1500
          %v1502 = vpop.f32.mrb[0].mxu0
          %v1503 = vpop.f32.mrb[0].mxu0
          %v1504 = vadd.f32 %v1336, %v1503
          %v1505 = vpop.f32.mrb[0].mxu0
          %1506 = vmatprep.mubr.bf16.mxu0 %v1294
          %1507 = vmatmul.mubr.bf16.gmra.mrb[0].mxu0 %v1293
          %v1508 = vpop.f32.mrb[0].mxu0
          %v1509 = vadd.f32 %v1336, %v1508
          %v1510 = vpop.f32.mrb[0].mxu0
          %v1511 = vpop.f32.mrb[0].mxu0
          %v1512 = vadd.f32 %v1336, %v1511
          %v1513 = vpop.f32.mrb[0].mxu0
          %1514 = vmatprep.mubr.bf16.mxu0 %v1296
          %1515 = vmatmul.mubr.bf16.gmra.mrb[0].mxu0 %v1295
          %v1516 = vpop.f32.mrb[0].mxu0
          %v1517 = vadd.f32 %v1336, %v1516
          %v1518 = vpop.f32.mrb[0].mxu0
          %v1519 = vpop.f32.mrb[0].mxu0
          %v1520 = vadd.f32 %v1336, %v1519
          %v1521 = vpop.f32.mrb[0].mxu0
          %1522 = vmatprep.mubr.bf16.mxu0 %v1298
          %1523 = vmatmul.mubr.bf16.gmra.mrb[0].mxu0 %v1297
          %v1524 = vpop.f32.mrb[0].mxu0
          %v1525 = vadd.f32 %v1336, %v1524
          %v1526 = vpop.f32.mrb[0].mxu0
          %v1527 = vpop.f32.mrb[0].mxu0
          %v1528 = vadd.f32 %v1336, %v1527
          %v1529 = vpop.f32.mrb[0].mxu0
          %1530 = vdwg.mxu0
          %1531 = vst [vmem:[%s443] sm:$0xff] %v1469
          %1532 = vst [vmem:[%s443 + $0x8] sm:$0xff] %v1472
          %1533 = vst [vmem:[%s443 + $0x10] sm:$0xff] %v1477
          %1534 = vst [vmem:[%s443 + $0x18] sm:$0xff] %v1480
          %1535 = vst [vmem:[%s443 + $0x20] sm:$0xff] %v1485
          %1536 = vst [vmem:[%s443 + $0x28] sm:$0xff] %v1488
          %1537 = vst [vmem:[%s443 + $0x30] sm:$0xff] %v1493
          %1538 = vst [vmem:[%s443 + $0x38] sm:$0xff] %v1496
          %1539 = vst [vmem:[%s443 + $0x40] sm:$0xff] %v1501
          %1540 = vst [vmem:[%s443 + $0x48] sm:$0xff] %v1504
          %1541 = vst [vmem:[%s443 + $0x50] sm:$0xff] %v1509
          %1542 = vst [vmem:[%s443 + $0x58] sm:$0xff] %v1512
          %1543 = vst [vmem:[%s443 + $0x60] sm:$0xff] %v1517
          %1544 = vst [vmem:[%s443 + $0x68] sm:$0xff] %v1520
          %1545 = vst [vmem:[%s443 + $0x70] sm:$0xff] %v1525
          %1546 = vst [vmem:[%s443 + $0x78] sm:$0xff] %v1528
          %v1547 = vld [vmem:[#allocation9] sm:$0xff]
          %v1548 = vlaneseq
          %v1549 = vand.u32 %v1548, 127
          %v1550 = vlaneseq
          %v1551 = vshrl.u32 %v1550, 7
          %v1552 = vsub.s32 0, %v1551
          %v1553 = vrot.slane %v1547, %v1552
          %v1554 = vsub.f32 %v1553, %v1469
          %v1555 = vsub.f32 %v1553, %v1472
          %v1556 = vsub.f32 %v1553, %v1477
          %v1557 = vsub.f32 %v1553, %v1480
          %v1558 = vsub.f32 %v1553, %v1485
          %v1559 = vsub.f32 %v1553, %v1488
          %v1560 = vsub.f32 %v1553, %v1493
          %v1561 = vsub.f32 %v1553, %v1496
          %v1562 = vsub.f32 %v1553, %v1501
          %v1563 = vsub.f32 %v1553, %v1504
          %v1564 = vsub.f32 %v1553, %v1509
          %v1565 = vsub.f32 %v1553, %v1512
          %v1566 = vsub.f32 %v1553, %v1517
          %v1567 = vsub.f32 %v1553, %v1520
          %v1568 = vsub.f32 %v1553, %v1525
          %v1569 = vsub.f32 %v1553, %v1528
          %v1570 = vmax.f32 %v1554, 0.0
          %v1571 = vmax.f32 %v1555, 0.0
          %v1572 = vmax.f32 %v1556, 0.0
          %v1573 = vmax.f32 %v1557, 0.0
          %v1574 = vmax.f32 %v1558, 0.0
          %v1575 = vmax.f32 %v1559, 0.0
          %v1576 = vmax.f32 %v1560, 0.0
          %v1577 = vmax.f32 %v1561, 0.0
          %v1578 = vmax.f32 %v1562, 0.0
          %v1579 = vmax.f32 %v1563, 0.0
          %v1580 = vmax.f32 %v1564, 0.0
          %v1581 = vmax.f32 %v1565, 0.0
          %v1582 = vmax.f32 %v1566, 0.0
          %v1583 = vmax.f32 %v1567, 0.0
          %v1584 = vmax.f32 %v1568, 0.0
          %v1585 = vmax.f32 %v1569, 0.0
          %v1586 = vmul.f32 %v1570, %v1570
          %v1587 = vmul.f32 %v1571, %v1571
          %v1588 = vmul.f32 %v1572, %v1572
          %v1589 = vmul.f32 %v1573, %v1573
          %v1590 = vmul.f32 %v1574, %v1574
          %v1591 = vmul.f32 %v1575, %v1575
          %v1592 = vmul.f32 %v1576, %v1576
          %v1593 = vmul.f32 %v1577, %v1577
          %v1594 = vmul.f32 %v1578, %v1578
          %v1595 = vmul.f32 %v1579, %v1579
          %v1596 = vmul.f32 %v1580, %v1580
          %v1597 = vmul.f32 %v1581, %v1581
          %v1598 = vmul.f32 %v1582, %v1582
          %v1599 = vmul.f32 %v1583, %v1583
          %v1600 = vmul.f32 %v1584, %v1584
          %v1601 = vmul.f32 %v1585, %v1585
          %1602 = vadd.xlane.f32.xlu0 %v1586
          %v1603 = vpop.xlane.xlu0 %1602
          %1604 = vadd.xlane.f32.xlu0 %v1587
          %v1605 = vpop.xlane.xlu0 %1604
          %1606 = vadd.xlane.f32.xlu0 %v1588
          %v1607 = vpop.xlane.xlu0 %1606
          %1608 = vadd.xlane.f32.xlu0 %v1589
          %v1609 = vpop.xlane.xlu0 %1608
          %1610 = vadd.xlane.f32.xlu0 %v1590
          %v1611 = vpop.xlane.xlu0 %1610
          %1612 = vadd.xlane.f32.xlu0 %v1591
          %v1613 = vpop.xlane.xlu0 %1612
          %1614 = vadd.xlane.f32.xlu0 %v1592
          %v1615 = vpop.xlane.xlu0 %1614
          %1616 = vadd.xlane.f32.xlu0 %v1593
          %v1617 = vpop.xlane.xlu0 %1616
          %1618 = vadd.xlane.f32.xlu0 %v1594
          %v1619 = vpop.xlane.xlu0 %1618
          %1620 = vadd.xlane.f32.xlu0 %v1595
          %v1621 = vpop.xlane.xlu0 %1620
          %1622 = vadd.xlane.f32.xlu0 %v1596
          %v1623 = vpop.xlane.xlu0 %1622
          %1624 = vadd.xlane.f32.xlu0 %v1597
          %v1625 = vpop.xlane.xlu0 %1624
          %1626 = vadd.xlane.f32.xlu0 %v1598
          %v1627 = vpop.xlane.xlu0 %1626
          %1628 = vadd.xlane.f32.xlu0 %v1599
          %v1629 = vpop.xlane.xlu0 %1628
          %1630 = vadd.xlane.f32.xlu0 %v1600
          %v1631 = vpop.xlane.xlu0 %1630
          %1632 = vadd.xlane.f32.xlu0 %v1601
          %v1633 = vpop.xlane.xlu0 %1632
          %v1634 = vrsqrt.pop %v1603
          %v1635 = vmul.f32 %v1603, %v1634
          %vm1636 = vcmp.eq.f32.partialorder %v1603, inf
          %v1637 = vsel %vm1636, %v1603, %v1635
          %vm1638 = vcmp.eq.f32.partialorder %v1603, 0.0
          %v1639 = vand.u32 %v1603, 2147483648
          %v1640 = vsel %vm1638, %v1639, %v1637
          %v1641 = vrsqrt.pop %v1605
          %v1642 = vmul.f32 %v1605, %v1641
          %vm1643 = vcmp.eq.f32.partialorder %v1605, inf
          %v1644 = vsel %vm1643, %v1605, %v1642
          %vm1645 = vcmp.eq.f32.partialorder %v1605, 0.0
          %v1646 = vand.u32 %v1605, 2147483648
          %v1647 = vsel %vm1645, %v1646, %v1644
          %v1648 = vrsqrt.pop %v1607
          %v1649 = vmul.f32 %v1607, %v1648
          %vm1650 = vcmp.eq.f32.partialorder %v1607, inf
          %v1651 = vsel %vm1650, %v1607, %v1649
          %vm1652 = vcmp.eq.f32.partialorder %v1607, 0.0
          %v1653 = vand.u32 %v1607, 2147483648
          %v1654 = vsel %vm1652, %v1653, %v1651
          %v1655 = vrsqrt.pop %v1609
          %v1656 = vmul.f32 %v1609, %v1655
          %vm1657 = vcmp.eq.f32.partialorder %v1609, inf
          %v1658 = vsel %vm1657, %v1609, %v1656
          %vm1659 = vcmp.eq.f32.partialorder %v1609, 0.0
          %v1660 = vand.u32 %v1609, 2147483648
          %v1661 = vsel %vm1659, %v1660, %v1658
          %v1662 = vrsqrt.pop %v1611
          %v1663 = vmul.f32 %v1611, %v1662
          %vm1664 = vcmp.eq.f32.partialorder %v1611, inf
          %v1665 = vsel %vm1664, %v1611, %v1663
          %vm1666 = vcmp.eq.f32.partialorder %v1611, 0.0
          %v1667 = vand.u32 %v1611, 2147483648
          %v1668 = vsel %vm1666, %v1667, %v1665
          %v1669 = vrsqrt.pop %v1613
          %v1670 = vmul.f32 %v1613, %v1669
          %vm1671 = vcmp.eq.f32.partialorder %v1613, inf
          %v1672 = vsel %vm1671, %v1613, %v1670
          %vm1673 = vcmp.eq.f32.partialorder %v1613, 0.0
          %v1674 = vand.u32 %v1613, 2147483648
          %v1675 = vsel %vm1673, %v1674, %v1672
          %v1676 = vrsqrt.pop %v1615
          %v1677 = vmul.f32 %v1615, %v1676
          %vm1678 = vcmp.eq.f32.partialorder %v1615, inf
          %v1679 = vsel %vm1678, %v1615, %v1677
          %vm1680 = vcmp.eq.f32.partialorder %v1615, 0.0
          %v1681 = vand.u32 %v1615, 2147483648
          %v1682 = vsel %vm1680, %v1681, %v1679
          %v1683 = vrsqrt.pop %v1617
          %v1684 = vmul.f32 %v1617, %v1683
          %vm1685 = vcmp.eq.f32.partialorder %v1617, inf
          %v1686 = vsel %vm1685, %v1617, %v1684
          %vm1687 = vcmp.eq.f32.partialorder %v1617, 0.0
          %v1688 = vand.u32 %v1617, 2147483648
          %v1689 = vsel %vm1687, %v1688, %v1686
          %v1690 = vrsqrt.pop %v1619
          %v1691 = vmul.f32 %v1619, %v1690
          %vm1692 = vcmp.eq.f32.partialorder %v1619, inf
          %v1693 = vsel %vm1692, %v1619, %v1691
          %vm1694 = vcmp.eq.f32.partialorder %v1619, 0.0
          %v1695 = vand.u32 %v1619, 2147483648
          %v1696 = vsel %vm1694, %v1695, %v1693
          %v1697 = vrsqrt.pop %v1621
          %v1698 = vmul.f32 %v1621, %v1697
          %vm1699 = vcmp.eq.f32.partialorder %v1621, inf
          %v1700 = vsel %vm1699, %v1621, %v1698
          %vm1701 = vcmp.eq.f32.partialorder %v1621, 0.0
          %v1702 = vand.u32 %v1621, 2147483648
          %v1703 = vsel %vm1701, %v1702, %v1700
          %v1704 = vrsqrt.pop %v1623
          %v1705 = vmul.f32 %v1623, %v1704
          %vm1706 = vcmp.eq.f32.partialorder %v1623, inf
          %v1707 = vsel %vm1706, %v1623, %v1705
          %vm1708 = vcmp.eq.f32.partialorder %v1623, 0.0
          %v1709 = vand.u32 %v1623, 2147483648
          %v1710 = vsel %vm1708, %v1709, %v1707
          %v1711 = vrsqrt.pop %v1625
          %v1712 = vmul.f32 %v1625, %v1711
          %vm1713 = vcmp.eq.f32.partialorder %v1625, inf
          %v1714 = vsel %vm1713, %v1625, %v1712
          %vm1715 = vcmp.eq.f32.partialorder %v1625, 0.0
          %v1716 = vand.u32 %v1625, 2147483648
          %v1717 = vsel %vm1715, %v1716, %v1714
          %v1718 = vrsqrt.pop %v1627
          %v1719 = vmul.f32 %v1627, %v1718
          %vm1720 = vcmp.eq.f32.partialorder %v1627, inf
          %v1721 = vsel %vm1720, %v1627, %v1719
          %vm1722 = vcmp.eq.f32.partialorder %v1627, 0.0
          %v1723 = vand.u32 %v1627, 2147483648
          %v1724 = vsel %vm1722, %v1723, %v1721
          %v1725 = vrsqrt.pop %v1629
          %v1726 = vmul.f32 %v1629, %v1725
          %vm1727 = vcmp.eq.f32.partialorder %v1629, inf
          %v1728 = vsel %vm1727, %v1629, %v1726
          %vm1729 = vcmp.eq.f32.partialorder %v1629, 0.0
          %v1730 = vand.u32 %v1629, 2147483648
          %v1731 = vsel %vm1729, %v1730, %v1728
          %v1732 = vrsqrt.pop %v1631
          %v1733 = vmul.f32 %v1631, %v1732
          %vm1734 = vcmp.eq.f32.partialorder %v1631, inf
          %v1735 = vsel %vm1734, %v1631, %v1733
          %vm1736 = vcmp.eq.f32.partialorder %v1631, 0.0
          %v1737 = vand.u32 %v1631, 2147483648
          %v1738 = vsel %vm1736, %v1737, %v1735
          %v1739 = vrsqrt.pop %v1633
          %v1740 = vmul.f32 %v1633, %v1739
          %vm1741 = vcmp.eq.f32.partialorder %v1633, inf
          %v1742 = vsel %vm1741, %v1633, %v1740
          %vm1743 = vcmp.eq.f32.partialorder %v1633, 0.0
          %v1744 = vand.u32 %v1633, 2147483648
          %v1745 = vsel %vm1743, %v1744, %v1742
          %vm1746 = vcmp.eq.s32.totalorder %v1549, 0
          %v1747 = vsub.f32 0.0, %v1640
          %v1748 = vsub.f32 0.0, %v1647
          %v1749 = vsub.f32 0.0, %v1654
          %v1750 = vsub.f32 0.0, %v1661
          %v1751 = vsub.f32 0.0, %v1668
          %v1752 = vsub.f32 0.0, %v1675
          %v1753 = vsub.f32 0.0, %v1682
          %v1754 = vsub.f32 0.0, %v1689
          %v1755 = vsub.f32 0.0, %v1696
          %v1756 = vsub.f32 0.0, %v1703
          %v1757 = vsub.f32 0.0, %v1710
          %v1758 = vsub.f32 0.0, %v1717
          %v1759 = vsub.f32 0.0, %v1724
          %v1760 = vsub.f32 0.0, %v1731
          %v1761 = vsub.f32 0.0, %v1738
          %v1762 = vsub.f32 0.0, %v1745
          %v1763 = vsel %vm1746, %v1747, -1e+30
          %v1764 = vsel %vm1746, %v1748, -1e+30
          %v1765 = vsel %vm1746, %v1749, -1e+30
          %v1766 = vsel %vm1746, %v1750, -1e+30
          %v1767 = vsel %vm1746, %v1751, -1e+30
          %v1768 = vsel %vm1746, %v1752, -1e+30
          %v1769 = vsel %vm1746, %v1753, -1e+30
          %v1770 = vsel %vm1746, %v1754, -1e+30
          %v1771 = vsel %vm1746, %v1755, -1e+30
          %v1772 = vsel %vm1746, %v1756, -1e+30
          %v1773 = vsel %vm1746, %v1757, -1e+30
          %v1774 = vsel %vm1746, %v1758, -1e+30
          %v1775 = vsel %vm1746, %v1759, -1e+30
          %v1776 = vsel %vm1746, %v1760, -1e+30
          %v1777 = vsel %vm1746, %v1761, -1e+30
          %v1778 = vsel %vm1746, %v1762, -1e+30
          %v1779 = vlaneseq
          %v1780 = vshrl.u32 %v1779, 7
          %v1781 = vsub.s32 1, %v1780
          %v1782 = vrot.slane %v1547, %v1781
          %v1783 = vsub.f32 %v1782, %v1469
          %v1784 = vsub.f32 %v1782, %v1472
          %v1785 = vsub.f32 %v1782, %v1477
          %v1786 = vsub.f32 %v1782, %v1480
          %v1787 = vsub.f32 %v1782, %v1485
          %v1788 = vsub.f32 %v1782, %v1488
          %v1789 = vsub.f32 %v1782, %v1493
          %v1790 = vsub.f32 %v1782, %v1496
          %v1791 = vsub.f32 %v1782, %v1501
          %v1792 = vsub.f32 %v1782, %v1504
          %v1793 = vsub.f32 %v1782, %v1509
          %v1794 = vsub.f32 %v1782, %v1512
          %v1795 = vsub.f32 %v1782, %v1517
          %v1796 = vsub.f32 %v1782, %v1520
          %v1797 = vsub.f32 %v1782, %v1525
          %v1798 = vsub.f32 %v1782, %v1528
          %v1799 = vmax.f32 %v1783, 0.0
          %v1800 = vmax.f32 %v1784, 0.0
          %v1801 = vmax.f32 %v1785, 0.0
          %v1802 = vmax.f32 %v1786, 0.0
          %v1803 = vmax.f32 %v1787, 0.0
          %v1804 = vmax.f32 %v1788, 0.0
          %v1805 = vmax.f32 %v1789, 0.0
          %v1806 = vmax.f32 %v1790, 0.0
          %v1807 = vmax.f32 %v1791, 0.0
          %v1808 = vmax.f32 %v1792, 0.0
          %v1809 = vmax.f32 %v1793, 0.0
          %v1810 = vmax.f32 %v1794, 0.0
          %v1811 = vmax.f32 %v1795, 0.0
          %v1812 = vmax.f32 %v1796, 0.0
          %v1813 = vmax.f32 %v1797, 0.0
          %v1814 = vmax.f32 %v1798, 0.0
          %v1815 = vmul.f32 %v1799, %v1799
          %v1816 = vmul.f32 %v1800, %v1800
          %v1817 = vmul.f32 %v1801, %v1801
          %v1818 = vmul.f32 %v1802, %v1802
          %v1819 = vmul.f32 %v1803, %v1803
          %v1820 = vmul.f32 %v1804, %v1804
          %v1821 = vmul.f32 %v1805, %v1805
          %v1822 = vmul.f32 %v1806, %v1806
          %v1823 = vmul.f32 %v1807, %v1807
          %v1824 = vmul.f32 %v1808, %v1808
          %v1825 = vmul.f32 %v1809, %v1809
          %v1826 = vmul.f32 %v1810, %v1810
          %v1827 = vmul.f32 %v1811, %v1811
          %v1828 = vmul.f32 %v1812, %v1812
          %v1829 = vmul.f32 %v1813, %v1813
          %v1830 = vmul.f32 %v1814, %v1814
          %1831 = vadd.xlane.f32.xlu0 %v1815
          %v1832 = vpop.xlane.xlu0 %1831
          %1833 = vadd.xlane.f32.xlu0 %v1816
          %v1834 = vpop.xlane.xlu0 %1833
          %1835 = vadd.xlane.f32.xlu0 %v1817
          %v1836 = vpop.xlane.xlu0 %1835
          %1837 = vadd.xlane.f32.xlu0 %v1818
          %v1838 = vpop.xlane.xlu0 %1837
          %1839 = vadd.xlane.f32.xlu0 %v1819
          %v1840 = vpop.xlane.xlu0 %1839
          %1841 = vadd.xlane.f32.xlu0 %v1820
          %v1842 = vpop.xlane.xlu0 %1841
          %1843 = vadd.xlane.f32.xlu0 %v1821
          %v1844 = vpop.xlane.xlu0 %1843
          %1845 = vadd.xlane.f32.xlu0 %v1822
          %v1846 = vpop.xlane.xlu0 %1845
          %1847 = vadd.xlane.f32.xlu0 %v1823
          %v1848 = vpop.xlane.xlu0 %1847
          %1849 = vadd.xlane.f32.xlu0 %v1824
          %v1850 = vpop.xlane.xlu0 %1849
          %1851 = vadd.xlane.f32.xlu0 %v1825
          %v1852 = vpop.xlane.xlu0 %1851
          %1853 = vadd.xlane.f32.xlu0 %v1826
          %v1854 = vpop.xlane.xlu0 %1853
          %1855 = vadd.xlane.f32.xlu0 %v1827
          %v1856 = vpop.xlane.xlu0 %1855
          %1857 = vadd.xlane.f32.xlu0 %v1828
          %v1858 = vpop.xlane.xlu0 %1857
          %1859 = vadd.xlane.f32.xlu0 %v1829
          %v1860 = vpop.xlane.xlu0 %1859
          %1861 = vadd.xlane.f32.xlu0 %v1830
          %v1862 = vpop.xlane.xlu0 %1861
          %v1863 = vrsqrt.pop %v1832
          %v1864 = vmul.f32 %v1832, %v1863
          %vm1865 = vcmp.eq.f32.partialorder %v1832, inf
          %v1866 = vsel %vm1865, %v1832, %v1864
          %vm1867 = vcmp.eq.f32.partialorder %v1832, 0.0
          %v1868 = vand.u32 %v1832, 2147483648
          %v1869 = vsel %vm1867, %v1868, %v1866
          %v1870 = vrsqrt.pop %v1834
          %v1871 = vmul.f32 %v1834, %v1870
          %vm1872 = vcmp.eq.f32.partialorder %v1834, inf
          %v1873 = vsel %vm1872, %v1834, %v1871
          %vm1874 = vcmp.eq.f32.partialorder %v1834, 0.0
          %v1875 = vand.u32 %v1834, 2147483648
          %v1876 = vsel %vm1874, %v1875, %v1873
          %v1877 = vrsqrt.pop %v1836
          %v1878 = vmul.f32 %v1836, %v1877
          %vm1879 = vcmp.eq.f32.partialorder %v1836, inf
          %v1880 = vsel %vm1879, %v1836, %v1878
          %vm1881 = vcmp.eq.f32.partialorder %v1836, 0.0
          %v1882 = vand.u32 %v1836, 2147483648
          %v1883 = vsel %vm1881, %v1882, %v1880
          %v1884 = vrsqrt.pop %v1838
          %v1885 = vmul.f32 %v1838, %v1884
          %vm1886 = vcmp.eq.f32.partialorder %v1838, inf
          %v1887 = vsel %vm1886, %v1838, %v1885
          %vm1888 = vcmp.eq.f32.partialorder %v1838, 0.0
          %v1889 = vand.u32 %v1838, 2147483648
          %v1890 = vsel %vm1888, %v1889, %v1887
          %v1891 = vrsqrt.pop %v1840
          %v1892 = vmul.f32 %v1840, %v1891
          %vm1893 = vcmp.eq.f32.partialorder %v1840, inf
          %v1894 = vsel %vm1893, %v1840, %v1892
          %vm1895 = vcmp.eq.f32.partialorder %v1840, 0.0
          %v1896 = vand.u32 %v1840, 2147483648
          %v1897 = vsel %vm1895, %v1896, %v1894
          %v1898 = vrsqrt.pop %v1842
          %v1899 = vmul.f32 %v1842, %v1898
          %vm1900 = vcmp.eq.f32.partialorder %v1842, inf
          %v1901 = vsel %vm1900, %v1842, %v1899
          %vm1902 = vcmp.eq.f32.partialorder %v1842, 0.0
          %v1903 = vand.u32 %v1842, 2147483648
          %v1904 = vsel %vm1902, %v1903, %v1901
          %v1905 = vrsqrt.pop %v1844
          %v1906 = vmul.f32 %v1844, %v1905
          %vm1907 = vcmp.eq.f32.partialorder %v1844, inf
          %v1908 = vsel %vm1907, %v1844, %v1906
          %vm1909 = vcmp.eq.f32.partialorder %v1844, 0.0
          %v1910 = vand.u32 %v1844, 2147483648
          %v1911 = vsel %vm1909, %v1910, %v1908
          %v1912 = vrsqrt.pop %v1846
          %v1913 = vmul.f32 %v1846, %v1912
          %vm1914 = vcmp.eq.f32.partialorder %v1846, inf
          %v1915 = vsel %vm1914, %v1846, %v1913
          %vm1916 = vcmp.eq.f32.partialorder %v1846, 0.0
          %v1917 = vand.u32 %v1846, 2147483648
          %v1918 = vsel %vm1916, %v1917, %v1915
          %v1919 = vrsqrt.pop %v1848
          %v1920 = vmul.f32 %v1848, %v1919
          %vm1921 = vcmp.eq.f32.partialorder %v1848, inf
          %v1922 = vsel %vm1921, %v1848, %v1920
          %vm1923 = vcmp.eq.f32.partialorder %v1848, 0.0
          %v1924 = vand.u32 %v1848, 2147483648
          %v1925 = vsel %vm1923, %v1924, %v1922
          %v1926 = vrsqrt.pop %v1850
          %v1927 = vmul.f32 %v1850, %v1926
          %vm1928 = vcmp.eq.f32.partialorder %v1850, inf
          %v1929 = vsel %vm1928, %v1850, %v1927
          %vm1930 = vcmp.eq.f32.partialorder %v1850, 0.0
          %v1931 = vand.u32 %v1850, 2147483648
          %v1932 = vsel %vm1930, %v1931, %v1929
          %v1933 = vrsqrt.pop %v1852
          %v1934 = vmul.f32 %v1852, %v1933
          %vm1935 = vcmp.eq.f32.partialorder %v1852, inf
          %v1936 = vsel %vm1935, %v1852, %v1934
          %vm1937 = vcmp.eq.f32.partialorder %v1852, 0.0
          %v1938 = vand.u32 %v1852, 2147483648
          %v1939 = vsel %vm1937, %v1938, %v1936
          %v1940 = vrsqrt.pop %v1854
          %v1941 = vmul.f32 %v1854, %v1940
          %vm1942 = vcmp.eq.f32.partialorder %v1854, inf
          %v1943 = vsel %vm1942, %v1854, %v1941
          %vm1944 = vcmp.eq.f32.partialorder %v1854, 0.0
          %v1945 = vand.u32 %v1854, 2147483648
          %v1946 = vsel %vm1944, %v1945, %v1943
          %v1947 = vrsqrt.pop %v1856
          %v1948 = vmul.f32 %v1856, %v1947
          %vm1949 = vcmp.eq.f32.partialorder %v1856, inf
          %v1950 = vsel %vm1949, %v1856, %v1948
          %vm1951 = vcmp.eq.f32.partialorder %v1856, 0.0
          %v1952 = vand.u32 %v1856, 2147483648
          %v1953 = vsel %vm1951, %v1952, %v1950
          %v1954 = vrsqrt.pop %v1858
          %v1955 = vmul.f32 %v1858, %v1954
          %vm1956 = vcmp.eq.f32.partialorder %v1858, inf
          %v1957 = vsel %vm1956, %v1858, %v1955
          %vm1958 = vcmp.eq.f32.partialorder %v1858, 0.0
          %v1959 = vand.u32 %v1858, 2147483648
          %v1960 = vsel %vm1958, %v1959, %v1957
          %v1961 = vrsqrt.pop %v1860
          %v1962 = vmul.f32 %v1860, %v1961
          %vm1963 = vcmp.eq.f32.partialorder %v1860, inf
          %v1964 = vsel %vm1963, %v1860, %v1962
          %vm1965 = vcmp.eq.f32.partialorder %v1860, 0.0
          %v1966 = vand.u32 %v1860, 2147483648
          %v1967 = vsel %vm1965, %v1966, %v1964
          %v1968 = vrsqrt.pop %v1862
          %v1969 = vmul.f32 %v1862, %v1968
          %vm1970 = vcmp.eq.f32.partialorder %v1862, inf
          %v1971 = vsel %vm1970, %v1862, %v1969
          %vm1972 = vcmp.eq.f32.partialorder %v1862, 0.0
          %v1973 = vand.u32 %v1862, 2147483648
          %v1974 = vsel %vm1972, %v1973, %v1971
          %vm1975 = vcmp.eq.s32.totalorder %v1549, 1
          %v1976 = vsub.f32 0.0, %v1869
          %v1977 = vsub.f32 0.0, %v1876
          %v1978 = vsub.f32 0.0, %v1883
          %v1979 = vsub.f32 0.0, %v1890
          %v1980 = vsub.f32 0.0, %v1897
          %v1981 = vsub.f32 0.0, %v1904
          %v1982 = vsub.f32 0.0, %v1911
          %v1983 = vsub.f32 0.0, %v1918
          %v1984 = vsub.f32 0.0, %v1925
          %v1985 = vsub.f32 0.0, %v1932
          %v1986 = vsub.f32 0.0, %v1939
          %v1987 = vsub.f32 0.0, %v1946
          %v1988 = vsub.f32 0.0, %v1953
          %v1989 = vsub.f32 0.0, %v1960
          %v1990 = vsub.f32 0.0, %v1967
          %v1991 = vsub.f32 0.0, %v1974
          %v1992 = vsel %vm1975, %v1976, %v1763
          %v1993 = vsel %vm1975, %v1977, %v1764
          %v1994 = vsel %vm1975, %v1978, %v1765
          %v1995 = vsel %vm1975, %v1979, %v1766
          %v1996 = vsel %vm1975, %v1980, %v1767
          %v1997 = vsel %vm1975, %v1981, %v1768
          %v1998 = vsel %vm1975, %v1982, %v1769
          %v1999 = vsel %vm1975, %v1983, %v1770
          %v2000 = vsel %vm1975, %v1984, %v1771
          %v2001 = vsel %vm1975, %v1985, %v1772
          %v2002 = vsel %vm1975, %v1986, %v1773
          %v2003 = vsel %vm1975, %v1987, %v1774
          %v2004 = vsel %vm1975, %v1988, %v1775
          %v2005 = vsel %vm1975, %v1989, %v1776
          %v2006 = vsel %vm1975, %v1990, %v1777
          %v2007 = vsel %vm1975, %v1991, %v1778
          %v2008 = vlaneseq
          %v2009 = vshrl.u32 %v2008, 7
          %v2010 = vsub.s32 2, %v2009
          %v2011 = vrot.slane %v1547, %v2010
          %v2012 = vsub.f32 %v2011, %v1469
          %v2013 = vsub.f32 %v2011, %v1472
          %v2014 = vsub.f32 %v2011, %v1477
          %v2015 = vsub.f32 %v2011, %v1480
          %v2016 = vsub.f32 %v2011, %v1485
          %v2017 = vsub.f32 %v2011, %v1488
          %v2018 = vsub.f32 %v2011, %v1493
          %v2019 = vsub.f32 %v2011, %v1496
          %v2020 = vsub.f32 %v2011, %v1501
          %v2021 = vsub.f32 %v2011, %v1504
          %v2022 = vsub.f32 %v2011, %v1509
          %v2023 = vsub.f32 %v2011, %v1512
          %v2024 = vsub.f32 %v2011, %v1517
          %v2025 = vsub.f32 %v2011, %v1520
          %v2026 = vsub.f32 %v2011, %v1525
          %v2027 = vsub.f32 %v2011, %v1528
          %v2028 = vmax.f32 %v2012, 0.0
          %v2029 = vmax.f32 %v2013, 0.0
          %v2030 = vmax.f32 %v2014, 0.0
          %v2031 = vmax.f32 %v2015, 0.0
          %v2032 = vmax.f32 %v2016, 0.0
          %v2033 = vmax.f32 %v2017, 0.0
          %v2034 = vmax.f32 %v2018, 0.0
          %v2035 = vmax.f32 %v2019, 0.0
          %v2036 = vmax.f32 %v2020, 0.0
          %v2037 = vmax.f32 %v2021, 0.0
          %v2038 = vmax.f32 %v2022, 0.0
          %v2039 = vmax.f32 %v2023, 0.0
          %v2040 = vmax.f32 %v2024, 0.0
          %v2041 = vmax.f32 %v2025, 0.0
          %v2042 = vmax.f32 %v2026, 0.0
          %v2043 = vmax.f32 %v2027, 0.0
          %v2044 = vmul.f32 %v2028, %v2028
          %v2045 = vmul.f32 %v2029, %v2029
          %v2046 = vmul.f32 %v2030, %v2030
          %v2047 = vmul.f32 %v2031, %v2031
          %v2048 = vmul.f32 %v2032, %v2032
          %v2049 = vmul.f32 %v2033, %v2033
          %v2050 = vmul.f32 %v2034, %v2034
          %v2051 = vmul.f32 %v2035, %v2035
          %v2052 = vmul.f32 %v2036, %v2036
          %v2053 = vmul.f32 %v2037, %v2037
          %v2054 = vmul.f32 %v2038, %v2038
          %v2055 = vmul.f32 %v2039, %v2039
          %v2056 = vmul.f32 %v2040, %v2040
          %v2057 = vmul.f32 %v2041, %v2041
          %v2058 = vmul.f32 %v2042, %v2042
          %v2059 = vmul.f32 %v2043, %v2043
          %2060 = vadd.xlane.f32.xlu0 %v2044
          %v2061 = vpop.xlane.xlu0 %2060
          %2062 = vadd.xlane.f32.xlu0 %v2045
          %v2063 = vpop.xlane.xlu0 %2062
          %2064 = vadd.xlane.f32.xlu0 %v2046
          %v2065 = vpop.xlane.xlu0 %2064
          %2066 = vadd.xlane.f32.xlu0 %v2047
          %v2067 = vpop.xlane.xlu0 %2066
          %2068 = vadd.xlane.f32.xlu0 %v2048
          %v2069 = vpop.xlane.xlu0 %2068
          %2070 = vadd.xlane.f32.xlu0 %v2049
          %v2071 = vpop.xlane.xlu0 %2070
          %2072 = vadd.xlane.f32.xlu0 %v2050
          %v2073 = vpop.xlane.xlu0 %2072
          %2074 = vadd.xlane.f32.xlu0 %v2051
          %v2075 = vpop.xlane.xlu0 %2074
          %2076 = vadd.xlane.f32.xlu0 %v2052
          %v2077 = vpop.xlane.xlu0 %2076
          %2078 = vadd.xlane.f32.xlu0 %v2053
          %v2079 = vpop.xlane.xlu0 %2078
          %2080 = vadd.xlane.f32.xlu0 %v2054
          %v2081 = vpop.xlane.xlu0 %2080
          %2082 = vadd.xlane.f32.xlu0 %v2055
          %v2083 = vpop.xlane.xlu0 %2082
          %2084 = vadd.xlane.f32.xlu0 %v2056
          %v2085 = vpop.xlane.xlu0 %2084
          %2086 = vadd.xlane.f32.xlu0 %v2057
          %v2087 = vpop.xlane.xlu0 %2086
          %2088 = vadd.xlane.f32.xlu0 %v2058
          %v2089 = vpop.xlane.xlu0 %2088
          %2090 = vadd.xlane.f32.xlu0 %v2059
          %v2091 = vpop.xlane.xlu0 %2090
          %v2092 = vrsqrt.pop %v2061
          %v2093 = vmul.f32 %v2061, %v2092
          %vm2094 = vcmp.eq.f32.partialorder %v2061, inf
          %v2095 = vsel %vm2094, %v2061, %v2093
          %vm2096 = vcmp.eq.f32.partialorder %v2061, 0.0
          %v2097 = vand.u32 %v2061, 2147483648
          %v2098 = vsel %vm2096, %v2097, %v2095
          %v2099 = vrsqrt.pop %v2063
          %v2100 = vmul.f32 %v2063, %v2099
          %vm2101 = vcmp.eq.f32.partialorder %v2063, inf
          %v2102 = vsel %vm2101, %v2063, %v2100
          %vm2103 = vcmp.eq.f32.partialorder %v2063, 0.0
          %v2104 = vand.u32 %v2063, 2147483648
          %v2105 = vsel %vm2103, %v2104, %v2102
          %v2106 = vrsqrt.pop %v2065
          %v2107 = vmul.f32 %v2065, %v2106
          %vm2108 = vcmp.eq.f32.partialorder %v2065, inf
          %v2109 = vsel %vm2108, %v2065, %v2107
          %vm2110 = vcmp.eq.f32.partialorder %v2065, 0.0
          %v2111 = vand.u32 %v2065, 2147483648
          %v2112 = vsel %vm2110, %v2111, %v2109
          %v2113 = vrsqrt.pop %v2067
          %v2114 = vmul.f32 %v2067, %v2113
          %vm2115 = vcmp.eq.f32.partialorder %v2067, inf
          %v2116 = vsel %vm2115, %v2067, %v2114
          %vm2117 = vcmp.eq.f32.partialorder %v2067, 0.0
          %v2118 = vand.u32 %v2067, 2147483648
          %v2119 = vsel %vm2117, %v2118, %v2116
          %v2120 = vrsqrt.pop %v2069
          %v2121 = vmul.f32 %v2069, %v2120
          %vm2122 = vcmp.eq.f32.partialorder %v2069, inf
          %v2123 = vsel %vm2122, %v2069, %v2121
          %vm2124 = vcmp.eq.f32.partialorder %v2069, 0.0
          %v2125 = vand.u32 %v2069, 2147483648
          %v2126 = vsel %vm2124, %v2125, %v2123
          %v2127 = vrsqrt.pop %v2071
          %v2128 = vmul.f32 %v2071, %v2127
          %vm2129 = vcmp.eq.f32.partialorder %v2071, inf
          %v2130 = vsel %vm2129, %v2071, %v2128
          %vm2131 = vcmp.eq.f32.partialorder %v2071, 0.0
          %v2132 = vand.u32 %v2071, 2147483648
          %v2133 = vsel %vm2131, %v2132, %v2130
          %v2134 = vrsqrt.pop %v2073
          %v2135 = vmul.f32 %v2073, %v2134
          %vm2136 = vcmp.eq.f32.partialorder %v2073, inf
          %v2137 = vsel %vm2136, %v2073, %v2135
          %vm2138 = vcmp.eq.f32.partialorder %v2073, 0.0
          %v2139 = vand.u32 %v2073, 2147483648
          %v2140 = vsel %vm2138, %v2139, %v2137
          %v2141 = vrsqrt.pop %v2075
          %v2142 = vmul.f32 %v2075, %v2141
          %vm2143 = vcmp.eq.f32.partialorder %v2075, inf
          %v2144 = vsel %vm2143, %v2075, %v2142
          %vm2145 = vcmp.eq.f32.partialorder %v2075, 0.0
          %v2146 = vand.u32 %v2075, 2147483648
          %v2147 = vsel %vm2145, %v2146, %v2144
          %v2148 = vrsqrt.pop %v2077
          %v2149 = vmul.f32 %v2077, %v2148
          %vm2150 = vcmp.eq.f32.partialorder %v2077, inf
          %v2151 = vsel %vm2150, %v2077, %v2149
          %vm2152 = vcmp.eq.f32.partialorder %v2077, 0.0
          %v2153 = vand.u32 %v2077, 2147483648
          %v2154 = vsel %vm2152, %v2153, %v2151
          %v2155 = vrsqrt.pop %v2079
          %v2156 = vmul.f32 %v2079, %v2155
          %vm2157 = vcmp.eq.f32.partialorder %v2079, inf
          %v2158 = vsel %vm2157, %v2079, %v2156
          %vm2159 = vcmp.eq.f32.partialorder %v2079, 0.0
          %v2160 = vand.u32 %v2079, 2147483648
          %v2161 = vsel %vm2159, %v2160, %v2158
          %v2162 = vrsqrt.pop %v2081
          %v2163 = vmul.f32 %v2081, %v2162
          %vm2164 = vcmp.eq.f32.partialorder %v2081, inf
          %v2165 = vsel %vm2164, %v2081, %v2163
          %vm2166 = vcmp.eq.f32.partialorder %v2081, 0.0
          %v2167 = vand.u32 %v2081, 2147483648
          %v2168 = vsel %vm2166, %v2167, %v2165
          %v2169 = vrsqrt.pop %v2083
          %v2170 = vmul.f32 %v2083, %v2169
          %vm2171 = vcmp.eq.f32.partialorder %v2083, inf
          %v2172 = vsel %vm2171, %v2083, %v2170
          %vm2173 = vcmp.eq.f32.partialorder %v2083, 0.0
          %v2174 = vand.u32 %v2083, 2147483648
          %v2175 = vsel %vm2173, %v2174, %v2172
          %v2176 = vrsqrt.pop %v2085
          %v2177 = vmul.f32 %v2085, %v2176
          %vm2178 = vcmp.eq.f32.partialorder %v2085, inf
          %v2179 = vsel %vm2178, %v2085, %v2177
          %vm2180 = vcmp.eq.f32.partialorder %v2085, 0.0
          %v2181 = vand.u32 %v2085, 2147483648
          %v2182 = vsel %vm2180, %v2181, %v2179
          %v2183 = vrsqrt.pop %v2087
          %v2184 = vmul.f32 %v2087, %v2183
          %vm2185 = vcmp.eq.f32.partialorder %v2087, inf
          %v2186 = vsel %vm2185, %v2087, %v2184
          %vm2187 = vcmp.eq.f32.partialorder %v2087, 0.0
          %v2188 = vand.u32 %v2087, 2147483648
          %v2189 = vsel %vm2187, %v2188, %v2186
          %v2190 = vrsqrt.pop %v2089
          %v2191 = vmul.f32 %v2089, %v2190
          %vm2192 = vcmp.eq.f32.partialorder %v2089, inf
          %v2193 = vsel %vm2192, %v2089, %v2191
          %vm2194 = vcmp.eq.f32.partialorder %v2089, 0.0
          %v2195 = vand.u32 %v2089, 2147483648
          %v2196 = vsel %vm2194, %v2195, %v2193
          %v2197 = vrsqrt.pop %v2091
          %v2198 = vmul.f32 %v2091, %v2197
          %vm2199 = vcmp.eq.f32.partialorder %v2091, inf
          %v2200 = vsel %vm2199, %v2091, %v2198
          %vm2201 = vcmp.eq.f32.partialorder %v2091, 0.0
          %v2202 = vand.u32 %v2091, 2147483648
          %v2203 = vsel %vm2201, %v2202, %v2200
          %vm2204 = vcmp.eq.s32.totalorder %v1549, 2
          %v2205 = vsub.f32 0.0, %v2098
          %v2206 = vsub.f32 0.0, %v2105
          %v2207 = vsub.f32 0.0, %v2112
          %v2208 = vsub.f32 0.0, %v2119
          %v2209 = vsub.f32 0.0, %v2126
          %v2210 = vsub.f32 0.0, %v2133
          %v2211 = vsub.f32 0.0, %v2140
          %v2212 = vsub.f32 0.0, %v2147
          %v2213 = vsub.f32 0.0, %v2154
          %v2214 = vsub.f32 0.0, %v2161
          %v2215 = vsub.f32 0.0, %v2168
          %v2216 = vsub.f32 0.0, %v2175
          %v2217 = vsub.f32 0.0, %v2182
          %v2218 = vsub.f32 0.0, %v2189
          %v2219 = vsub.f32 0.0, %v2196
          %v2220 = vsub.f32 0.0, %v2203
          %v2221 = vsel %vm2204, %v2205, %v1992
          %v2222 = vsel %vm2204, %v2206, %v1993
          %v2223 = vsel %vm2204, %v2207, %v1994
          %v2224 = vsel %vm2204, %v2208, %v1995
          %v2225 = vsel %vm2204, %v2209, %v1996
          %v2226 = vsel %vm2204, %v2210, %v1997
          %v2227 = vsel %vm2204, %v2211, %v1998
          %v2228 = vsel %vm2204, %v2212, %v1999
          %v2229 = vsel %vm2204, %v2213, %v2000
          %v2230 = vsel %vm2204, %v2214, %v2001
          %v2231 = vsel %vm2204, %v2215, %v2002
          %v2232 = vsel %vm2204, %v2216, %v2003
          %v2233 = vsel %vm2204, %v2217, %v2004
          %v2234 = vsel %vm2204, %v2218, %v2005
          %v2235 = vsel %vm2204, %v2219, %v2006
          %v2236 = vsel %vm2204, %v2220, %v2007
          %v2237 = vlaneseq
          %v2238 = vshrl.u32 %v2237, 7
          %v2239 = vsub.s32 3, %v2238
          %v2240 = vrot.slane %v1547, %v2239
          %v2241 = vsub.f32 %v2240, %v1469
          %v2242 = vsub.f32 %v2240, %v1472
          %v2243 = vsub.f32 %v2240, %v1477
          %v2244 = vsub.f32 %v2240, %v1480
          %v2245 = vsub.f32 %v2240, %v1485
          %v2246 = vsub.f32 %v2240, %v1488
          %v2247 = vsub.f32 %v2240, %v1493
          %v2248 = vsub.f32 %v2240, %v1496
          %v2249 = vsub.f32 %v2240, %v1501
          %v2250 = vsub.f32 %v2240, %v1504
          %v2251 = vsub.f32 %v2240, %v1509
          %v2252 = vsub.f32 %v2240, %v1512
          %v2253 = vsub.f32 %v2240, %v1517
          %v2254 = vsub.f32 %v2240, %v1520
          %v2255 = vsub.f32 %v2240, %v1525
          %v2256 = vsub.f32 %v2240, %v1528
          %v2257 = vmax.f32 %v2241, 0.0
          %v2258 = vmax.f32 %v2242, 0.0
          %v2259 = vmax.f32 %v2243, 0.0
          %v2260 = vmax.f32 %v2244, 0.0
          %v2261 = vmax.f32 %v2245, 0.0
          %v2262 = vmax.f32 %v2246, 0.0
          %v2263 = vmax.f32 %v2247, 0.0
          %v2264 = vmax.f32 %v2248, 0.0
          %v2265 = vmax.f32 %v2249, 0.0
          %v2266 = vmax.f32 %v2250, 0.0
          %v2267 = vmax.f32 %v2251, 0.0
          %v2268 = vmax.f32 %v2252, 0.0
          %v2269 = vmax.f32 %v2253, 0.0
          %v2270 = vmax.f32 %v2254, 0.0
          %v2271 = vmax.f32 %v2255, 0.0
          %v2272 = vmax.f32 %v2256, 0.0
          %v2273 = vmul.f32 %v2257, %v2257
          %v2274 = vmul.f32 %v2258, %v2258
          %v2275 = vmul.f32 %v2259, %v2259
          %v2276 = vmul.f32 %v2260, %v2260
          %v2277 = vmul.f32 %v2261, %v2261
          %v2278 = vmul.f32 %v2262, %v2262
          %v2279 = vmul.f32 %v2263, %v2263
          %v2280 = vmul.f32 %v2264, %v2264
          %v2281 = vmul.f32 %v2265, %v2265
          %v2282 = vmul.f32 %v2266, %v2266
          %v2283 = vmul.f32 %v2267, %v2267
          %v2284 = vmul.f32 %v2268, %v2268
          %v2285 = vmul.f32 %v2269, %v2269
          %v2286 = vmul.f32 %v2270, %v2270
          %v2287 = vmul.f32 %v2271, %v2271
          %v2288 = vmul.f32 %v2272, %v2272
          %2289 = vadd.xlane.f32.xlu0 %v2273
          %v2290 = vpop.xlane.xlu0 %2289
          %2291 = vadd.xlane.f32.xlu0 %v2274
          %v2292 = vpop.xlane.xlu0 %2291
          %2293 = vadd.xlane.f32.xlu0 %v2275
          %v2294 = vpop.xlane.xlu0 %2293
          %2295 = vadd.xlane.f32.xlu0 %v2276
          %v2296 = vpop.xlane.xlu0 %2295
          %2297 = vadd.xlane.f32.xlu0 %v2277
          %v2298 = vpop.xlane.xlu0 %2297
          %2299 = vadd.xlane.f32.xlu0 %v2278
          %v2300 = vpop.xlane.xlu0 %2299
          %2301 = vadd.xlane.f32.xlu0 %v2279
          %v2302 = vpop.xlane.xlu0 %2301
          %2303 = vadd.xlane.f32.xlu0 %v2280
          %v2304 = vpop.xlane.xlu0 %2303
          %2305 = vadd.xlane.f32.xlu0 %v2281
          %v2306 = vpop.xlane.xlu0 %2305
          %2307 = vadd.xlane.f32.xlu0 %v2282
          %v2308 = vpop.xlane.xlu0 %2307
          %2309 = vadd.xlane.f32.xlu0 %v2283
          %v2310 = vpop.xlane.xlu0 %2309
          %2311 = vadd.xlane.f32.xlu0 %v2284
          %v2312 = vpop.xlane.xlu0 %2311
          %2313 = vadd.xlane.f32.xlu0 %v2285
          %v2314 = vpop.xlane.xlu0 %2313
          %2315 = vadd.xlane.f32.xlu0 %v2286
          %v2316 = vpop.xlane.xlu0 %2315
          %2317 = vadd.xlane.f32.xlu0 %v2287
          %v2318 = vpop.xlane.xlu0 %2317
          %2319 = vadd.xlane.f32.xlu0 %v2288
          %v2320 = vpop.xlane.xlu0 %2319
          %v2321 = vrsqrt.pop %v2290
          %v2322 = vmul.f32 %v2290, %v2321
          %vm2323 = vcmp.eq.f32.partialorder %v2290, inf
          %v2324 = vsel %vm2323, %v2290, %v2322
          %vm2325 = vcmp.eq.f32.partialorder %v2290, 0.0
          %v2326 = vand.u32 %v2290, 2147483648
          %v2327 = vsel %vm2325, %v2326, %v2324
          %v2328 = vrsqrt.pop %v2292
          %v2329 = vmul.f32 %v2292, %v2328
          %vm2330 = vcmp.eq.f32.partialorder %v2292, inf
          %v2331 = vsel %vm2330, %v2292, %v2329
          %vm2332 = vcmp.eq.f32.partialorder %v2292, 0.0
          %v2333 = vand.u32 %v2292, 2147483648
          %v2334 = vsel %vm2332, %v2333, %v2331
          %v2335 = vrsqrt.pop %v2294
          %v2336 = vmul.f32 %v2294, %v2335
          %vm2337 = vcmp.eq.f32.partialorder %v2294, inf
          %v2338 = vsel %vm2337, %v2294, %v2336
          %vm2339 = vcmp.eq.f32.partialorder %v2294, 0.0
          %v2340 = vand.u32 %v2294, 2147483648
          %v2341 = vsel %vm2339, %v2340, %v2338
          %v2342 = vrsqrt.pop %v2296
          %v2343 = vmul.f32 %v2296, %v2342
          %vm2344 = vcmp.eq.f32.partialorder %v2296, inf
          %v2345 = vsel %vm2344, %v2296, %v2343
          %vm2346 = vcmp.eq.f32.partialorder %v2296, 0.0
          %v2347 = vand.u32 %v2296, 2147483648
          %v2348 = vsel %vm2346, %v2347, %v2345
          %v2349 = vrsqrt.pop %v2298
          %v2350 = vmul.f32 %v2298, %v2349
          %vm2351 = vcmp.eq.f32.partialorder %v2298, inf
          %v2352 = vsel %vm2351, %v2298, %v2350
          %vm2353 = vcmp.eq.f32.partialorder %v2298, 0.0
          %v2354 = vand.u32 %v2298, 2147483648
          %v2355 = vsel %vm2353, %v2354, %v2352
          %v2356 = vrsqrt.pop %v2300
          %v2357 = vmul.f32 %v2300, %v2356
          %vm2358 = vcmp.eq.f32.partialorder %v2300, inf
          %v2359 = vsel %vm2358, %v2300, %v2357
          %vm2360 = vcmp.eq.f32.partialorder %v2300, 0.0
          %v2361 = vand.u32 %v2300, 2147483648
          %v2362 = vsel %vm2360, %v2361, %v2359
          %v2363 = vrsqrt.pop %v2302
          %v2364 = vmul.f32 %v2302, %v2363
          %vm2365 = vcmp.eq.f32.partialorder %v2302, inf
          %v2366 = vsel %vm2365, %v2302, %v2364
          %vm2367 = vcmp.eq.f32.partialorder %v2302, 0.0
          %v2368 = vand.u32 %v2302, 2147483648
          %v2369 = vsel %vm2367, %v2368, %v2366
          %v2370 = vrsqrt.pop %v2304
          %v2371 = vmul.f32 %v2304, %v2370
          %vm2372 = vcmp.eq.f32.partialorder %v2304, inf
          %v2373 = vsel %vm2372, %v2304, %v2371
          %vm2374 = vcmp.eq.f32.partialorder %v2304, 0.0
          %v2375 = vand.u32 %v2304, 2147483648
          %v2376 = vsel %vm2374, %v2375, %v2373
          %v2377 = vrsqrt.pop %v2306
          %v2378 = vmul.f32 %v2306, %v2377
          %vm2379 = vcmp.eq.f32.partialorder %v2306, inf
          %v2380 = vsel %vm2379, %v2306, %v2378
          %vm2381 = vcmp.eq.f32.partialorder %v2306, 0.0
          %v2382 = vand.u32 %v2306, 2147483648
          %v2383 = vsel %vm2381, %v2382, %v2380
          %v2384 = vrsqrt.pop %v2308
          %v2385 = vmul.f32 %v2308, %v2384
          %vm2386 = vcmp.eq.f32.partialorder %v2308, inf
          %v2387 = vsel %vm2386, %v2308, %v2385
          %vm2388 = vcmp.eq.f32.partialorder %v2308, 0.0
          %v2389 = vand.u32 %v2308, 2147483648
          %v2390 = vsel %vm2388, %v2389, %v2387
          %v2391 = vrsqrt.pop %v2310
          %v2392 = vmul.f32 %v2310, %v2391
          %vm2393 = vcmp.eq.f32.partialorder %v2310, inf
          %v2394 = vsel %vm2393, %v2310, %v2392
          %vm2395 = vcmp.eq.f32.partialorder %v2310, 0.0
          %v2396 = vand.u32 %v2310, 2147483648
          %v2397 = vsel %vm2395, %v2396, %v2394
          %v2398 = vrsqrt.pop %v2312
          %v2399 = vmul.f32 %v2312, %v2398
          %vm2400 = vcmp.eq.f32.partialorder %v2312, inf
          %v2401 = vsel %vm2400, %v2312, %v2399
          %vm2402 = vcmp.eq.f32.partialorder %v2312, 0.0
          %v2403 = vand.u32 %v2312, 2147483648
          %v2404 = vsel %vm2402, %v2403, %v2401
          %v2405 = vrsqrt.pop %v2314
          %v2406 = vmul.f32 %v2314, %v2405
          %vm2407 = vcmp.eq.f32.partialorder %v2314, inf
          %v2408 = vsel %vm2407, %v2314, %v2406
          %vm2409 = vcmp.eq.f32.partialorder %v2314, 0.0
          %v2410 = vand.u32 %v2314, 2147483648
          %v2411 = vsel %vm2409, %v2410, %v2408
          %v2412 = vrsqrt.pop %v2316
          %v2413 = vmul.f32 %v2316, %v2412
          %vm2414 = vcmp.eq.f32.partialorder %v2316, inf
          %v2415 = vsel %vm2414, %v2316, %v2413
          %vm2416 = vcmp.eq.f32.partialorder %v2316, 0.0
          %v2417 = vand.u32 %v2316, 2147483648
          %v2418 = vsel %vm2416, %v2417, %v2415
          %v2419 = vrsqrt.pop %v2318
          %v2420 = vmul.f32 %v2318, %v2419
          %vm2421 = vcmp.eq.f32.partialorder %v2318, inf
          %v2422 = vsel %vm2421, %v2318, %v2420
          %vm2423 = vcmp.eq.f32.partialorder %v2318, 0.0
          %v2424 = vand.u32 %v2318, 2147483648
          %v2425 = vsel %vm2423, %v2424, %v2422
          %v2426 = vrsqrt.pop %v2320
          %v2427 = vmul.f32 %v2320, %v2426
          %vm2428 = vcmp.eq.f32.partialorder %v2320, inf
          %v2429 = vsel %vm2428, %v2320, %v2427
          %vm2430 = vcmp.eq.f32.partialorder %v2320, 0.0
          %v2431 = vand.u32 %v2320, 2147483648
          %v2432 = vsel %vm2430, %v2431, %v2429
          %vm2433 = vcmp.eq.s32.totalorder %v1549, 3
          %v2434 = vsub.f32 0.0, %v2327
          %v2435 = vsub.f32 0.0, %v2334
          %v2436 = vsub.f32 0.0, %v2341
          %v2437 = vsub.f32 0.0, %v2348
          %v2438 = vsub.f32 0.0, %v2355
          %v2439 = vsub.f32 0.0, %v2362
          %v2440 = vsub.f32 0.0, %v2369
          %v2441 = vsub.f32 0.0, %v2376
          %v2442 = vsub.f32 0.0, %v2383
          %v2443 = vsub.f32 0.0, %v2390
          %v2444 = vsub.f32 0.0, %v2397
          %v2445 = vsub.f32 0.0, %v2404
          %v2446 = vsub.f32 0.0, %v2411
          %v2447 = vsub.f32 0.0, %v2418
          %v2448 = vsub.f32 0.0, %v2425
          %v2449 = vsub.f32 0.0, %v2432
          %v2450 = vsel %vm2433, %v2434, %v2221
          %v2451 = vsel %vm2433, %v2435, %v2222
          %v2452 = vsel %vm2433, %v2436, %v2223
          %v2453 = vsel %vm2433, %v2437, %v2224
          %v2454 = vsel %vm2433, %v2438, %v2225
          %v2455 = vsel %vm2433, %v2439, %v2226
          %v2456 = vsel %vm2433, %v2440, %v2227
          %v2457 = vsel %vm2433, %v2441, %v2228
          %v2458 = vsel %vm2433, %v2442, %v2229
          %v2459 = vsel %vm2433, %v2443, %v2230
          %v2460 = vsel %vm2433, %v2444, %v2231
          %v2461 = vsel %vm2433, %v2445, %v2232
          %v2462 = vsel %vm2433, %v2446, %v2233
          %v2463 = vsel %vm2433, %v2447, %v2234
          %v2464 = vsel %vm2433, %v2448, %v2235
          %v2465 = vsel %vm2433, %v2449, %v2236
          %v2466 = vlaneseq
          %v2467 = vshrl.u32 %v2466, 7
          %v2468 = vsub.s32 4, %v2467
          %v2469 = vrot.slane %v1547, %v2468
          %v2470 = vsub.f32 %v2469, %v1469
          %v2471 = vsub.f32 %v2469, %v1472
          %v2472 = vsub.f32 %v2469, %v1477
          %v2473 = vsub.f32 %v2469, %v1480
          %v2474 = vsub.f32 %v2469, %v1485
          %v2475 = vsub.f32 %v2469, %v1488
          %v2476 = vsub.f32 %v2469, %v1493
          %v2477 = vsub.f32 %v2469, %v1496
          %v2478 = vsub.f32 %v2469, %v1501
          %v2479 = vsub.f32 %v2469, %v1504
          %v2480 = vsub.f32 %v2469, %v1509
          %v2481 = vsub.f32 %v2469, %v1512
          %v2482 = vsub.f32 %v2469, %v1517
          %v2483 = vsub.f32 %v2469, %v1520
          %v2484 = vsub.f32 %v2469, %v1525
          %v2485 = vsub.f32 %v2469, %v1528
          %v2486 = vmax.f32 %v2470, 0.0
          %v2487 = vmax.f32 %v2471, 0.0
          %v2488 = vmax.f32 %v2472, 0.0
          %v2489 = vmax.f32 %v2473, 0.0
          %v2490 = vmax.f32 %v2474, 0.0
          %v2491 = vmax.f32 %v2475, 0.0
          %v2492 = vmax.f32 %v2476, 0.0
          %v2493 = vmax.f32 %v2477, 0.0
          %v2494 = vmax.f32 %v2478, 0.0
          %v2495 = vmax.f32 %v2479, 0.0
          %v2496 = vmax.f32 %v2480, 0.0
          %v2497 = vmax.f32 %v2481, 0.0
          %v2498 = vmax.f32 %v2482, 0.0
          %v2499 = vmax.f32 %v2483, 0.0
          %v2500 = vmax.f32 %v2484, 0.0
          %v2501 = vmax.f32 %v2485, 0.0
          %v2502 = vmul.f32 %v2486, %v2486
          %v2503 = vmul.f32 %v2487, %v2487
          %v2504 = vmul.f32 %v2488, %v2488
          %v2505 = vmul.f32 %v2489, %v2489
          %v2506 = vmul.f32 %v2490, %v2490
          %v2507 = vmul.f32 %v2491, %v2491
          %v2508 = vmul.f32 %v2492, %v2492
          %v2509 = vmul.f32 %v2493, %v2493
          %v2510 = vmul.f32 %v2494, %v2494
          %v2511 = vmul.f32 %v2495, %v2495
          %v2512 = vmul.f32 %v2496, %v2496
          %v2513 = vmul.f32 %v2497, %v2497
          %v2514 = vmul.f32 %v2498, %v2498
          %v2515 = vmul.f32 %v2499, %v2499
          %v2516 = vmul.f32 %v2500, %v2500
          %v2517 = vmul.f32 %v2501, %v2501
          %2518 = vadd.xlane.f32.xlu0 %v2502
          %v2519 = vpop.xlane.xlu0 %2518
          %2520 = vadd.xlane.f32.xlu0 %v2503
          %v2521 = vpop.xlane.xlu0 %2520
          %2522 = vadd.xlane.f32.xlu0 %v2504
          %v2523 = vpop.xlane.xlu0 %2522
          %2524 = vadd.xlane.f32.xlu0 %v2505
          %v2525 = vpop.xlane.xlu0 %2524
          %2526 = vadd.xlane.f32.xlu0 %v2506
          %v2527 = vpop.xlane.xlu0 %2526
          %2528 = vadd.xlane.f32.xlu0 %v2507
          %v2529 = vpop.xlane.xlu0 %2528
          %2530 = vadd.xlane.f32.xlu0 %v2508
          %v2531 = vpop.xlane.xlu0 %2530
          %2532 = vadd.xlane.f32.xlu0 %v2509
          %v2533 = vpop.xlane.xlu0 %2532
          %2534 = vadd.xlane.f32.xlu0 %v2510
          %v2535 = vpop.xlane.xlu0 %2534
          %2536 = vadd.xlane.f32.xlu0 %v2511
          %v2537 = vpop.xlane.xlu0 %2536
          %2538 = vadd.xlane.f32.xlu0 %v2512
          %v2539 = vpop.xlane.xlu0 %2538
          %2540 = vadd.xlane.f32.xlu0 %v2513
          %v2541 = vpop.xlane.xlu0 %2540
          %2542 = vadd.xlane.f32.xlu0 %v2514
          %v2543 = vpop.xlane.xlu0 %2542
          %2544 = vadd.xlane.f32.xlu0 %v2515
          %v2545 = vpop.xlane.xlu0 %2544
          %2546 = vadd.xlane.f32.xlu0 %v2516
          %v2547 = vpop.xlane.xlu0 %2546
          %2548 = vadd.xlane.f32.xlu0 %v2517
          %v2549 = vpop.xlane.xlu0 %2548
          %v2550 = vrsqrt.pop %v2519
          %v2551 = vmul.f32 %v2519, %v2550
          %vm2552 = vcmp.eq.f32.partialorder %v2519, inf
          %v2553 = vsel %vm2552, %v2519, %v2551
          %vm2554 = vcmp.eq.f32.partialorder %v2519, 0.0
          %v2555 = vand.u32 %v2519, 2147483648
          %v2556 = vsel %vm2554, %v2555, %v2553
          %v2557 = vrsqrt.pop %v2521
          %v2558 = vmul.f32 %v2521, %v2557
          %vm2559 = vcmp.eq.f32.partialorder %v2521, inf
          %v2560 = vsel %vm2559, %v2521, %v2558
          %vm2561 = vcmp.eq.f32.partialorder %v2521, 0.0
          %v2562 = vand.u32 %v2521, 2147483648
          %v2563 = vsel %vm2561, %v2562, %v2560
          %v2564 = vrsqrt.pop %v2523
          %v2565 = vmul.f32 %v2523, %v2564
          %vm2566 = vcmp.eq.f32.partialorder %v2523, inf
          %v2567 = vsel %vm2566, %v2523, %v2565
          %vm2568 = vcmp.eq.f32.partialorder %v2523, 0.0
          %v2569 = vand.u32 %v2523, 2147483648
          %v2570 = vsel %vm2568, %v2569, %v2567
          %v2571 = vrsqrt.pop %v2525
          %v2572 = vmul.f32 %v2525, %v2571
          %vm2573 = vcmp.eq.f32.partialorder %v2525, inf
          %v2574 = vsel %vm2573, %v2525, %v2572
          %vm2575 = vcmp.eq.f32.partialorder %v2525, 0.0
          %v2576 = vand.u32 %v2525, 2147483648
          %v2577 = vsel %vm2575, %v2576, %v2574
          %v2578 = vrsqrt.pop %v2527
          %v2579 = vmul.f32 %v2527, %v2578
          %vm2580 = vcmp.eq.f32.partialorder %v2527, inf
          %v2581 = vsel %vm2580, %v2527, %v2579
          %vm2582 = vcmp.eq.f32.partialorder %v2527, 0.0
          %v2583 = vand.u32 %v2527, 2147483648
          %v2584 = vsel %vm2582, %v2583, %v2581
          %v2585 = vrsqrt.pop %v2529
          %v2586 = vmul.f32 %v2529, %v2585
          %vm2587 = vcmp.eq.f32.partialorder %v2529, inf
          %v2588 = vsel %vm2587, %v2529, %v2586
          %vm2589 = vcmp.eq.f32.partialorder %v2529, 0.0
          %v2590 = vand.u32 %v2529, 2147483648
          %v2591 = vsel %vm2589, %v2590, %v2588
          %v2592 = vrsqrt.pop %v2531
          %v2593 = vmul.f32 %v2531, %v2592
          %vm2594 = vcmp.eq.f32.partialorder %v2531, inf
          %v2595 = vsel %vm2594, %v2531, %v2593
          %vm2596 = vcmp.eq.f32.partialorder %v2531, 0.0
          %v2597 = vand.u32 %v2531, 2147483648
          %v2598 = vsel %vm2596, %v2597, %v2595
          %v2599 = vrsqrt.pop %v2533
          %v2600 = vmul.f32 %v2533, %v2599
          %vm2601 = vcmp.eq.f32.partialorder %v2533, inf
          %v2602 = vsel %vm2601, %v2533, %v2600
          %vm2603 = vcmp.eq.f32.partialorder %v2533, 0.0
          %v2604 = vand.u32 %v2533, 2147483648
          %v2605 = vsel %vm2603, %v2604, %v2602
          %v2606 = vrsqrt.pop %v2535
          %v2607 = vmul.f32 %v2535, %v2606
          %vm2608 = vcmp.eq.f32.partialorder %v2535, inf
          %v2609 = vsel %vm2608, %v2535, %v2607
          %vm2610 = vcmp.eq.f32.partialorder %v2535, 0.0
          %v2611 = vand.u32 %v2535, 2147483648
          %v2612 = vsel %vm2610, %v2611, %v2609
          %v2613 = vrsqrt.pop %v2537
          %v2614 = vmul.f32 %v2537, %v2613
          %vm2615 = vcmp.eq.f32.partialorder %v2537, inf
          %v2616 = vsel %vm2615, %v2537, %v2614
          %vm2617 = vcmp.eq.f32.partialorder %v2537, 0.0
          %v2618 = vand.u32 %v2537, 2147483648
          %v2619 = vsel %vm2617, %v2618, %v2616
          %v2620 = vrsqrt.pop %v2539
          %v2621 = vmul.f32 %v2539, %v2620
          %vm2622 = vcmp.eq.f32.partialorder %v2539, inf
          %v2623 = vsel %vm2622, %v2539, %v2621
          %vm2624 = vcmp.eq.f32.partialorder %v2539, 0.0
          %v2625 = vand.u32 %v2539, 2147483648
          %v2626 = vsel %vm2624, %v2625, %v2623
          %v2627 = vrsqrt.pop %v2541
          %v2628 = vmul.f32 %v2541, %v2627
          %vm2629 = vcmp.eq.f32.partialorder %v2541, inf
          %v2630 = vsel %vm2629, %v2541, %v2628
          %vm2631 = vcmp.eq.f32.partialorder %v2541, 0.0
          %v2632 = vand.u32 %v2541, 2147483648
          %v2633 = vsel %vm2631, %v2632, %v2630
          %v2634 = vrsqrt.pop %v2543
          %v2635 = vmul.f32 %v2543, %v2634
          %vm2636 = vcmp.eq.f32.partialorder %v2543, inf
          %v2637 = vsel %vm2636, %v2543, %v2635
          %vm2638 = vcmp.eq.f32.partialorder %v2543, 0.0
          %v2639 = vand.u32 %v2543, 2147483648
          %v2640 = vsel %vm2638, %v2639, %v2637
          %v2641 = vrsqrt.pop %v2545
          %v2642 = vmul.f32 %v2545, %v2641
          %vm2643 = vcmp.eq.f32.partialorder %v2545, inf
          %v2644 = vsel %vm2643, %v2545, %v2642
          %vm2645 = vcmp.eq.f32.partialorder %v2545, 0.0
          %v2646 = vand.u32 %v2545, 2147483648
          %v2647 = vsel %vm2645, %v2646, %v2644
          %v2648 = vrsqrt.pop %v2547
          %v2649 = vmul.f32 %v2547, %v2648
          %vm2650 = vcmp.eq.f32.partialorder %v2547, inf
          %v2651 = vsel %vm2650, %v2547, %v2649
          %vm2652 = vcmp.eq.f32.partialorder %v2547, 0.0
          %v2653 = vand.u32 %v2547, 2147483648
          %v2654 = vsel %vm2652, %v2653, %v2651
          %v2655 = vrsqrt.pop %v2549
          %v2656 = vmul.f32 %v2549, %v2655
          %vm2657 = vcmp.eq.f32.partialorder %v2549, inf
          %v2658 = vsel %vm2657, %v2549, %v2656
          %vm2659 = vcmp.eq.f32.partialorder %v2549, 0.0
          %v2660 = vand.u32 %v2549, 2147483648
          %v2661 = vsel %vm2659, %v2660, %v2658
          %vm2662 = vcmp.eq.s32.totalorder %v1549, 4
          %v2663 = vsub.f32 0.0, %v2556
          %v2664 = vsub.f32 0.0, %v2563
          %v2665 = vsub.f32 0.0, %v2570
          %v2666 = vsub.f32 0.0, %v2577
          %v2667 = vsub.f32 0.0, %v2584
          %v2668 = vsub.f32 0.0, %v2591
          %v2669 = vsub.f32 0.0, %v2598
          %v2670 = vsub.f32 0.0, %v2605
          %v2671 = vsub.f32 0.0, %v2612
          %v2672 = vsub.f32 0.0, %v2619
          %v2673 = vsub.f32 0.0, %v2626
          %v2674 = vsub.f32 0.0, %v2633
          %v2675 = vsub.f32 0.0, %v2640
          %v2676 = vsub.f32 0.0, %v2647
          %v2677 = vsub.f32 0.0, %v2654
          %v2678 = vsub.f32 0.0, %v2661
          %v2679 = vsel %vm2662, %v2663, %v2450
          %v2680 = vsel %vm2662, %v2664, %v2451
          %v2681 = vsel %vm2662, %v2665, %v2452
          %v2682 = vsel %vm2662, %v2666, %v2453
          %v2683 = vsel %vm2662, %v2667, %v2454
          %v2684 = vsel %vm2662, %v2668, %v2455
          %v2685 = vsel %vm2662, %v2669, %v2456
          %v2686 = vsel %vm2662, %v2670, %v2457
          %v2687 = vsel %vm2662, %v2671, %v2458
          %v2688 = vsel %vm2662, %v2672, %v2459
          %v2689 = vsel %vm2662, %v2673, %v2460
          %v2690 = vsel %vm2662, %v2674, %v2461
          %v2691 = vsel %vm2662, %v2675, %v2462
          %v2692 = vsel %vm2662, %v2676, %v2463
          %v2693 = vsel %vm2662, %v2677, %v2464
          %v2694 = vsel %vm2662, %v2678, %v2465
          %v2695 = vlaneseq
          %v2696 = vshrl.u32 %v2695, 7
          %v2697 = vsub.s32 5, %v2696
          %v2698 = vrot.slane %v1547, %v2697
          %v2699 = vsub.f32 %v2698, %v1469
          %v2700 = vsub.f32 %v2698, %v1472
          %v2701 = vsub.f32 %v2698, %v1477
          %v2702 = vsub.f32 %v2698, %v1480
          %v2703 = vsub.f32 %v2698, %v1485
          %v2704 = vsub.f32 %v2698, %v1488
          %v2705 = vsub.f32 %v2698, %v1493
          %v2706 = vsub.f32 %v2698, %v1496
          %v2707 = vsub.f32 %v2698, %v1501
          %v2708 = vsub.f32 %v2698, %v1504
          %v2709 = vsub.f32 %v2698, %v1509
          %v2710 = vsub.f32 %v2698, %v1512
          %v2711 = vsub.f32 %v2698, %v1517
          %v2712 = vsub.f32 %v2698, %v1520
          %v2713 = vsub.f32 %v2698, %v1525
          %v2714 = vsub.f32 %v2698, %v1528
          %v2715 = vmax.f32 %v2699, 0.0
          %v2716 = vmax.f32 %v2700, 0.0
          %v2717 = vmax.f32 %v2701, 0.0
          %v2718 = vmax.f32 %v2702, 0.0
          %v2719 = vmax.f32 %v2703, 0.0
          %v2720 = vmax.f32 %v2704, 0.0
          %v2721 = vmax.f32 %v2705, 0.0
          %v2722 = vmax.f32 %v2706, 0.0
          %v2723 = vmax.f32 %v2707, 0.0
          %v2724 = vmax.f32 %v2708, 0.0
          %v2725 = vmax.f32 %v2709, 0.0
          %v2726 = vmax.f32 %v2710, 0.0
          %v2727 = vmax.f32 %v2711, 0.0
          %v2728 = vmax.f32 %v2712, 0.0
          %v2729 = vmax.f32 %v2713, 0.0
          %v2730 = vmax.f32 %v2714, 0.0
          %v2731 = vmul.f32 %v2715, %v2715
          %v2732 = vmul.f32 %v2716, %v2716
          %v2733 = vmul.f32 %v2717, %v2717
          %v2734 = vmul.f32 %v2718, %v2718
          %v2735 = vmul.f32 %v2719, %v2719
          %v2736 = vmul.f32 %v2720, %v2720
          %v2737 = vmul.f32 %v2721, %v2721
          %v2738 = vmul.f32 %v2722, %v2722
          %v2739 = vmul.f32 %v2723, %v2723
          %v2740 = vmul.f32 %v2724, %v2724
          %v2741 = vmul.f32 %v2725, %v2725
          %v2742 = vmul.f32 %v2726, %v2726
          %v2743 = vmul.f32 %v2727, %v2727
          %v2744 = vmul.f32 %v2728, %v2728
          %v2745 = vmul.f32 %v2729, %v2729
          %v2746 = vmul.f32 %v2730, %v2730
          %2747 = vadd.xlane.f32.xlu0 %v2731
          %v2748 = vpop.xlane.xlu0 %2747
          %2749 = vadd.xlane.f32.xlu0 %v2732
          %v2750 = vpop.xlane.xlu0 %2749
          %2751 = vadd.xlane.f32.xlu0 %v2733
          %v2752 = vpop.xlane.xlu0 %2751
          %2753 = vadd.xlane.f32.xlu0 %v2734
          %v2754 = vpop.xlane.xlu0 %2753
          %2755 = vadd.xlane.f32.xlu0 %v2735
          %v2756 = vpop.xlane.xlu0 %2755
          %2757 = vadd.xlane.f32.xlu0 %v2736
          %v2758 = vpop.xlane.xlu0 %2757
          %2759 = vadd.xlane.f32.xlu0 %v2737
          %v2760 = vpop.xlane.xlu0 %2759
          %2761 = vadd.xlane.f32.xlu0 %v2738
          %v2762 = vpop.xlane.xlu0 %2761
          %2763 = vadd.xlane.f32.xlu0 %v2739
          %v2764 = vpop.xlane.xlu0 %2763
          %2765 = vadd.xlane.f32.xlu0 %v2740
          %v2766 = vpop.xlane.xlu0 %2765
          %2767 = vadd.xlane.f32.xlu0 %v2741
          %v2768 = vpop.xlane.xlu0 %2767
          %2769 = vadd.xlane.f32.xlu0 %v2742
          %v2770 = vpop.xlane.xlu0 %2769
          %2771 = vadd.xlane.f32.xlu0 %v2743
          %v2772 = vpop.xlane.xlu0 %2771
          %2773 = vadd.xlane.f32.xlu0 %v2744
          %v2774 = vpop.xlane.xlu0 %2773
          %2775 = vadd.xlane.f32.xlu0 %v2745
          %v2776 = vpop.xlane.xlu0 %2775
          %2777 = vadd.xlane.f32.xlu0 %v2746
          %v2778 = vpop.xlane.xlu0 %2777
          %v2779 = vrsqrt.pop %v2748
          %v2780 = vmul.f32 %v2748, %v2779
          %vm2781 = vcmp.eq.f32.partialorder %v2748, inf
          %v2782 = vsel %vm2781, %v2748, %v2780
          %vm2783 = vcmp.eq.f32.partialorder %v2748, 0.0
          %v2784 = vand.u32 %v2748, 2147483648
          %v2785 = vsel %vm2783, %v2784, %v2782
          %v2786 = vrsqrt.pop %v2750
          %v2787 = vmul.f32 %v2750, %v2786
          %vm2788 = vcmp.eq.f32.partialorder %v2750, inf
          %v2789 = vsel %vm2788, %v2750, %v2787
          %vm2790 = vcmp.eq.f32.partialorder %v2750, 0.0
          %v2791 = vand.u32 %v2750, 2147483648
          %v2792 = vsel %vm2790, %v2791, %v2789
          %v2793 = vrsqrt.pop %v2752
          %v2794 = vmul.f32 %v2752, %v2793
          %vm2795 = vcmp.eq.f32.partialorder %v2752, inf
          %v2796 = vsel %vm2795, %v2752, %v2794
          %vm2797 = vcmp.eq.f32.partialorder %v2752, 0.0
          %v2798 = vand.u32 %v2752, 2147483648
          %v2799 = vsel %vm2797, %v2798, %v2796
          %v2800 = vrsqrt.pop %v2754
          %v2801 = vmul.f32 %v2754, %v2800
          %vm2802 = vcmp.eq.f32.partialorder %v2754, inf
          %v2803 = vsel %vm2802, %v2754, %v2801
          %vm2804 = vcmp.eq.f32.partialorder %v2754, 0.0
          %v2805 = vand.u32 %v2754, 2147483648
          %v2806 = vsel %vm2804, %v2805, %v2803
          %v2807 = vrsqrt.pop %v2756
          %v2808 = vmul.f32 %v2756, %v2807
          %vm2809 = vcmp.eq.f32.partialorder %v2756, inf
          %v2810 = vsel %vm2809, %v2756, %v2808
          %vm2811 = vcmp.eq.f32.partialorder %v2756, 0.0
          %v2812 = vand.u32 %v2756, 2147483648
          %v2813 = vsel %vm2811, %v2812, %v2810
          %v2814 = vrsqrt.pop %v2758
          %v2815 = vmul.f32 %v2758, %v2814
          %vm2816 = vcmp.eq.f32.partialorder %v2758, inf
          %v2817 = vsel %vm2816, %v2758, %v2815
          %vm2818 = vcmp.eq.f32.partialorder %v2758, 0.0
          %v2819 = vand.u32 %v2758, 2147483648
          %v2820 = vsel %vm2818, %v2819, %v2817
          %v2821 = vrsqrt.pop %v2760
          %v2822 = vmul.f32 %v2760, %v2821
          %vm2823 = vcmp.eq.f32.partialorder %v2760, inf
          %v2824 = vsel %vm2823, %v2760, %v2822
          %vm2825 = vcmp.eq.f32.partialorder %v2760, 0.0
          %v2826 = vand.u32 %v2760, 2147483648
          %v2827 = vsel %vm2825, %v2826, %v2824
          %v2828 = vrsqrt.pop %v2762
          %v2829 = vmul.f32 %v2762, %v2828
          %vm2830 = vcmp.eq.f32.partialorder %v2762, inf
          %v2831 = vsel %vm2830, %v2762, %v2829
          %vm2832 = vcmp.eq.f32.partialorder %v2762, 0.0
          %v2833 = vand.u32 %v2762, 2147483648
          %v2834 = vsel %vm2832, %v2833, %v2831
          %v2835 = vrsqrt.pop %v2764
          %v2836 = vmul.f32 %v2764, %v2835
          %vm2837 = vcmp.eq.f32.partialorder %v2764, inf
          %v2838 = vsel %vm2837, %v2764, %v2836
          %vm2839 = vcmp.eq.f32.partialorder %v2764, 0.0
          %v2840 = vand.u32 %v2764, 2147483648
          %v2841 = vsel %vm2839, %v2840, %v2838
          %v2842 = vrsqrt.pop %v2766
          %v2843 = vmul.f32 %v2766, %v2842
          %vm2844 = vcmp.eq.f32.partialorder %v2766, inf
          %v2845 = vsel %vm2844, %v2766, %v2843
          %vm2846 = vcmp.eq.f32.partialorder %v2766, 0.0
          %v2847 = vand.u32 %v2766, 2147483648
          %v2848 = vsel %vm2846, %v2847, %v2845
          %v2849 = vrsqrt.pop %v2768
          %v2850 = vmul.f32 %v2768, %v2849
          %vm2851 = vcmp.eq.f32.partialorder %v2768, inf
          %v2852 = vsel %vm2851, %v2768, %v2850
          %vm2853 = vcmp.eq.f32.partialorder %v2768, 0.0
          %v2854 = vand.u32 %v2768, 2147483648
          %v2855 = vsel %vm2853, %v2854, %v2852
          %v2856 = vrsqrt.pop %v2770
          %v2857 = vmul.f32 %v2770, %v2856
          %vm2858 = vcmp.eq.f32.partialorder %v2770, inf
          %v2859 = vsel %vm2858, %v2770, %v2857
          %vm2860 = vcmp.eq.f32.partialorder %v2770, 0.0
          %v2861 = vand.u32 %v2770, 2147483648
          %v2862 = vsel %vm2860, %v2861, %v2859
          %v2863 = vrsqrt.pop %v2772
          %v2864 = vmul.f32 %v2772, %v2863
          %vm2865 = vcmp.eq.f32.partialorder %v2772, inf
          %v2866 = vsel %vm2865, %v2772, %v2864
          %vm2867 = vcmp.eq.f32.partialorder %v2772, 0.0
          %v2868 = vand.u32 %v2772, 2147483648
          %v2869 = vsel %vm2867, %v2868, %v2866
          %v2870 = vrsqrt.pop %v2774
          %v2871 = vmul.f32 %v2774, %v2870
          %vm2872 = vcmp.eq.f32.partialorder %v2774, inf
          %v2873 = vsel %vm2872, %v2774, %v2871
          %vm2874 = vcmp.eq.f32.partialorder %v2774, 0.0
          %v2875 = vand.u32 %v2774, 2147483648
          %v2876 = vsel %vm2874, %v2875, %v2873
          %v2877 = vrsqrt.pop %v2776
          %v2878 = vmul.f32 %v2776, %v2877
          %vm2879 = vcmp.eq.f32.partialorder %v2776, inf
          %v2880 = vsel %vm2879, %v2776, %v2878
          %vm2881 = vcmp.eq.f32.partialorder %v2776, 0.0
          %v2882 = vand.u32 %v2776, 2147483648
          %v2883 = vsel %vm2881, %v2882, %v2880
          %v2884 = vrsqrt.pop %v2778
          %v2885 = vmul.f32 %v2778, %v2884
          %vm2886 = vcmp.eq.f32.partialorder %v2778, inf
          %v2887 = vsel %vm2886, %v2778, %v2885
          %vm2888 = vcmp.eq.f32.partialorder %v2778, 0.0
          %v2889 = vand.u32 %v2778, 2147483648
          %v2890 = vsel %vm2888, %v2889, %v2887
          %vm2891 = vcmp.eq.s32.totalorder %v1549, 5
          %v2892 = vsub.f32 0.0, %v2785
          %v2893 = vsub.f32 0.0, %v2792
          %v2894 = vsub.f32 0.0, %v2799
          %v2895 = vsub.f32 0.0, %v2806
          %v2896 = vsub.f32 0.0, %v2813
          %v2897 = vsub.f32 0.0, %v2820
          %v2898 = vsub.f32 0.0, %v2827
          %v2899 = vsub.f32 0.0, %v2834
          %v2900 = vsub.f32 0.0, %v2841
          %v2901 = vsub.f32 0.0, %v2848
          %v2902 = vsub.f32 0.0, %v2855
          %v2903 = vsub.f32 0.0, %v2862
          %v2904 = vsub.f32 0.0, %v2869
          %v2905 = vsub.f32 0.0, %v2876
          %v2906 = vsub.f32 0.0, %v2883
          %v2907 = vsub.f32 0.0, %v2890
          %v2908 = vsel %vm2891, %v2892, %v2679
          %v2909 = vsel %vm2891, %v2893, %v2680
          %v2910 = vsel %vm2891, %v2894, %v2681
          %v2911 = vsel %vm2891, %v2895, %v2682
          %v2912 = vsel %vm2891, %v2896, %v2683
          %v2913 = vsel %vm2891, %v2897, %v2684
          %v2914 = vsel %vm2891, %v2898, %v2685
          %v2915 = vsel %vm2891, %v2899, %v2686
          %v2916 = vsel %vm2891, %v2900, %v2687
          %v2917 = vsel %vm2891, %v2901, %v2688
          %v2918 = vsel %vm2891, %v2902, %v2689
          %v2919 = vsel %vm2891, %v2903, %v2690
          %v2920 = vsel %vm2891, %v2904, %v2691
          %v2921 = vsel %vm2891, %v2905, %v2692
          %v2922 = vsel %vm2891, %v2906, %v2693
          %v2923 = vsel %vm2891, %v2907, %v2694
          %v2924 = vlaneseq
          %v2925 = vshrl.u32 %v2924, 7
          %v2926 = vsub.s32 6, %v2925
          %v2927 = vrot.slane %v1547, %v2926
          %v2928 = vsub.f32 %v2927, %v1469
          %v2929 = vsub.f32 %v2927, %v1472
          %v2930 = vsub.f32 %v2927, %v1477
          %v2931 = vsub.f32 %v2927, %v1480
          %v2932 = vsub.f32 %v2927, %v1485
          %v2933 = vsub.f32 %v2927, %v1488
          %v2934 = vsub.f32 %v2927, %v1493
          %v2935 = vsub.f32 %v2927, %v1496
          %v2936 = vsub.f32 %v2927, %v1501
          %v2937 = vsub.f32 %v2927, %v1504
          %v2938 = vsub.f32 %v2927, %v1509
          %v2939 = vsub.f32 %v2927, %v1512
          %v2940 = vsub.f32 %v2927, %v1517
          %v2941 = vsub.f32 %v2927, %v1520
          %v2942 = vsub.f32 %v2927, %v1525
          %v2943 = vsub.f32 %v2927, %v1528
          %v2944 = vmax.f32 %v2928, 0.0
          %v2945 = vmax.f32 %v2929, 0.0
          %v2946 = vmax.f32 %v2930, 0.0
          %v2947 = vmax.f32 %v2931, 0.0
          %v2948 = vmax.f32 %v2932, 0.0
          %v2949 = vmax.f32 %v2933, 0.0
          %v2950 = vmax.f32 %v2934, 0.0
          %v2951 = vmax.f32 %v2935, 0.0
          %v2952 = vmax.f32 %v2936, 0.0
          %v2953 = vmax.f32 %v2937, 0.0
          %v2954 = vmax.f32 %v2938, 0.0
          %v2955 = vmax.f32 %v2939, 0.0
          %v2956 = vmax.f32 %v2940, 0.0
          %v2957 = vmax.f32 %v2941, 0.0
          %v2958 = vmax.f32 %v2942, 0.0
          %v2959 = vmax.f32 %v2943, 0.0
          %v2960 = vmul.f32 %v2944, %v2944
          %v2961 = vmul.f32 %v2945, %v2945
          %v2962 = vmul.f32 %v2946, %v2946
          %v2963 = vmul.f32 %v2947, %v2947
          %v2964 = vmul.f32 %v2948, %v2948
          %v2965 = vmul.f32 %v2949, %v2949
          %v2966 = vmul.f32 %v2950, %v2950
          %v2967 = vmul.f32 %v2951, %v2951
          %v2968 = vmul.f32 %v2952, %v2952
          %v2969 = vmul.f32 %v2953, %v2953
          %v2970 = vmul.f32 %v2954, %v2954
          %v2971 = vmul.f32 %v2955, %v2955
          %v2972 = vmul.f32 %v2956, %v2956
          %v2973 = vmul.f32 %v2957, %v2957
          %v2974 = vmul.f32 %v2958, %v2958
          %v2975 = vmul.f32 %v2959, %v2959
          %2976 = vadd.xlane.f32.xlu0 %v2960
          %v2977 = vpop.xlane.xlu0 %2976
          %2978 = vadd.xlane.f32.xlu0 %v2961
          %v2979 = vpop.xlane.xlu0 %2978
          %2980 = vadd.xlane.f32.xlu0 %v2962
          %v2981 = vpop.xlane.xlu0 %2980
          %2982 = vadd.xlane.f32.xlu0 %v2963
          %v2983 = vpop.xlane.xlu0 %2982
          %2984 = vadd.xlane.f32.xlu0 %v2964
          %v2985 = vpop.xlane.xlu0 %2984
          %2986 = vadd.xlane.f32.xlu0 %v2965
          %v2987 = vpop.xlane.xlu0 %2986
          %2988 = vadd.xlane.f32.xlu0 %v2966
          %v2989 = vpop.xlane.xlu0 %2988
          %2990 = vadd.xlane.f32.xlu0 %v2967
          %v2991 = vpop.xlane.xlu0 %2990
          %2992 = vadd.xlane.f32.xlu0 %v2968
          %v2993 = vpop.xlane.xlu0 %2992
          %2994 = vadd.xlane.f32.xlu0 %v2969
          %v2995 = vpop.xlane.xlu0 %2994
          %2996 = vadd.xlane.f32.xlu0 %v2970
          %v2997 = vpop.xlane.xlu0 %2996
          %2998 = vadd.xlane.f32.xlu0 %v2971
          %v2999 = vpop.xlane.xlu0 %2998
          %3000 = vadd.xlane.f32.xlu0 %v2972
          %v3001 = vpop.xlane.xlu0 %3000
          %3002 = vadd.xlane.f32.xlu0 %v2973
          %v3003 = vpop.xlane.xlu0 %3002
          %3004 = vadd.xlane.f32.xlu0 %v2974
          %v3005 = vpop.xlane.xlu0 %3004
          %3006 = vadd.xlane.f32.xlu0 %v2975
          %v3007 = vpop.xlane.xlu0 %3006
          %v3008 = vrsqrt.pop %v2977
          %v3009 = vmul.f32 %v2977, %v3008
          %vm3010 = vcmp.eq.f32.partialorder %v2977, inf
          %v3011 = vsel %vm3010, %v2977, %v3009
          %vm3012 = vcmp.eq.f32.partialorder %v2977, 0.0
          %v3013 = vand.u32 %v2977, 2147483648
          %v3014 = vsel %vm3012, %v3013, %v3011
          %v3015 = vrsqrt.pop %v2979
          %v3016 = vmul.f32 %v2979, %v3015
          %vm3017 = vcmp.eq.f32.partialorder %v2979, inf
          %v3018 = vsel %vm3017, %v2979, %v3016
          %vm3019 = vcmp.eq.f32.partialorder %v2979, 0.0
          %v3020 = vand.u32 %v2979, 2147483648
          %v3021 = vsel %vm3019, %v3020, %v3018
          %v3022 = vrsqrt.pop %v2981
          %v3023 = vmul.f32 %v2981, %v3022
          %vm3024 = vcmp.eq.f32.partialorder %v2981, inf
          %v3025 = vsel %vm3024, %v2981, %v3023
          %vm3026 = vcmp.eq.f32.partialorder %v2981, 0.0
          %v3027 = vand.u32 %v2981, 2147483648
          %v3028 = vsel %vm3026, %v3027, %v3025
          %v3029 = vrsqrt.pop %v2983
          %v3030 = vmul.f32 %v2983, %v3029
          %vm3031 = vcmp.eq.f32.partialorder %v2983, inf
          %v3032 = vsel %vm3031, %v2983, %v3030
          %vm3033 = vcmp.eq.f32.partialorder %v2983, 0.0
          %v3034 = vand.u32 %v2983, 2147483648
          %v3035 = vsel %vm3033, %v3034, %v3032
          %v3036 = vrsqrt.pop %v2985
          %v3037 = vmul.f32 %v2985, %v3036
          %vm3038 = vcmp.eq.f32.partialorder %v2985, inf
          %v3039 = vsel %vm3038, %v2985, %v3037
          %vm3040 = vcmp.eq.f32.partialorder %v2985, 0.0
          %v3041 = vand.u32 %v2985, 2147483648
          %v3042 = vsel %vm3040, %v3041, %v3039
          %v3043 = vrsqrt.pop %v2987
          %v3044 = vmul.f32 %v2987, %v3043
          %vm3045 = vcmp.eq.f32.partialorder %v2987, inf
          %v3046 = vsel %vm3045, %v2987, %v3044
          %vm3047 = vcmp.eq.f32.partialorder %v2987, 0.0
          %v3048 = vand.u32 %v2987, 2147483648
          %v3049 = vsel %vm3047, %v3048, %v3046
          %v3050 = vrsqrt.pop %v2989
          %v3051 = vmul.f32 %v2989, %v3050
          %vm3052 = vcmp.eq.f32.partialorder %v2989, inf
          %v3053 = vsel %vm3052, %v2989, %v3051
          %vm3054 = vcmp.eq.f32.partialorder %v2989, 0.0
          %v3055 = vand.u32 %v2989, 2147483648
          %v3056 = vsel %vm3054, %v3055, %v3053
          %v3057 = vrsqrt.pop %v2991
          %v3058 = vmul.f32 %v2991, %v3057
          %vm3059 = vcmp.eq.f32.partialorder %v2991, inf
          %v3060 = vsel %vm3059, %v2991, %v3058
          %vm3061 = vcmp.eq.f32.partialorder %v2991, 0.0
          %v3062 = vand.u32 %v2991, 2147483648
          %v3063 = vsel %vm3061, %v3062, %v3060
          %v3064 = vrsqrt.pop %v2993
          %v3065 = vmul.f32 %v2993, %v3064
          %vm3066 = vcmp.eq.f32.partialorder %v2993, inf
          %v3067 = vsel %vm3066, %v2993, %v3065
          %vm3068 = vcmp.eq.f32.partialorder %v2993, 0.0
          %v3069 = vand.u32 %v2993, 2147483648
          %v3070 = vsel %vm3068, %v3069, %v3067
          %v3071 = vrsqrt.pop %v2995
          %v3072 = vmul.f32 %v2995, %v3071
          %vm3073 = vcmp.eq.f32.partialorder %v2995, inf
          %v3074 = vsel %vm3073, %v2995, %v3072
          %vm3075 = vcmp.eq.f32.partialorder %v2995, 0.0
          %v3076 = vand.u32 %v2995, 2147483648
          %v3077 = vsel %vm3075, %v3076, %v3074
          %v3078 = vrsqrt.pop %v2997
          %v3079 = vmul.f32 %v2997, %v3078
          %vm3080 = vcmp.eq.f32.partialorder %v2997, inf
          %v3081 = vsel %vm3080, %v2997, %v3079
          %vm3082 = vcmp.eq.f32.partialorder %v2997, 0.0
          %v3083 = vand.u32 %v2997, 2147483648
          %v3084 = vsel %vm3082, %v3083, %v3081
          %v3085 = vrsqrt.pop %v2999
          %v3086 = vmul.f32 %v2999, %v3085
          %vm3087 = vcmp.eq.f32.partialorder %v2999, inf
          %v3088 = vsel %vm3087, %v2999, %v3086
          %vm3089 = vcmp.eq.f32.partialorder %v2999, 0.0
          %v3090 = vand.u32 %v2999, 2147483648
          %v3091 = vsel %vm3089, %v3090, %v3088
          %v3092 = vrsqrt.pop %v3001
          %v3093 = vmul.f32 %v3001, %v3092
          %vm3094 = vcmp.eq.f32.partialorder %v3001, inf
          %v3095 = vsel %vm3094, %v3001, %v3093
          %vm3096 = vcmp.eq.f32.partialorder %v3001, 0.0
          %v3097 = vand.u32 %v3001, 2147483648
          %v3098 = vsel %vm3096, %v3097, %v3095
          %v3099 = vrsqrt.pop %v3003
          %v3100 = vmul.f32 %v3003, %v3099
          %vm3101 = vcmp.eq.f32.partialorder %v3003, inf
          %v3102 = vsel %vm3101, %v3003, %v3100
          %vm3103 = vcmp.eq.f32.partialorder %v3003, 0.0
          %v3104 = vand.u32 %v3003, 2147483648
          %v3105 = vsel %vm3103, %v3104, %v3102
          %v3106 = vrsqrt.pop %v3005
          %v3107 = vmul.f32 %v3005, %v3106
          %vm3108 = vcmp.eq.f32.partialorder %v3005, inf
          %v3109 = vsel %vm3108, %v3005, %v3107
          %vm3110 = vcmp.eq.f32.partialorder %v3005, 0.0
          %v3111 = vand.u32 %v3005, 2147483648
          %v3112 = vsel %vm3110, %v3111, %v3109
          %v3113 = vrsqrt.pop %v3007
          %v3114 = vmul.f32 %v3007, %v3113
          %vm3115 = vcmp.eq.f32.partialorder %v3007, inf
          %v3116 = vsel %vm3115, %v3007, %v3114
          %vm3117 = vcmp.eq.f32.partialorder %v3007, 0.0
          %v3118 = vand.u32 %v3007, 2147483648
          %v3119 = vsel %vm3117, %v3118, %v3116
          %vm3120 = vcmp.eq.s32.totalorder %v1549, 6
          %v3121 = vsub.f32 0.0, %v3014
          %v3122 = vsub.f32 0.0, %v3021
          %v3123 = vsub.f32 0.0, %v3028
          %v3124 = vsub.f32 0.0, %v3035
          %v3125 = vsub.f32 0.0, %v3042
          %v3126 = vsub.f32 0.0, %v3049
          %v3127 = vsub.f32 0.0, %v3056
          %v3128 = vsub.f32 0.0, %v3063
          %v3129 = vsub.f32 0.0, %v3070
          %v3130 = vsub.f32 0.0, %v3077
          %v3131 = vsub.f32 0.0, %v3084
          %v3132 = vsub.f32 0.0, %v3091
          %v3133 = vsub.f32 0.0, %v3098
          %v3134 = vsub.f32 0.0, %v3105
          %v3135 = vsub.f32 0.0, %v3112
          %v3136 = vsub.f32 0.0, %v3119
          %v3137 = vsel %vm3120, %v3121, %v2908
          %v3138 = vsel %vm3120, %v3122, %v2909
          %v3139 = vsel %vm3120, %v3123, %v2910
          %v3140 = vsel %vm3120, %v3124, %v2911
          %v3141 = vsel %vm3120, %v3125, %v2912
          %v3142 = vsel %vm3120, %v3126, %v2913
          %v3143 = vsel %vm3120, %v3127, %v2914
          %v3144 = vsel %vm3120, %v3128, %v2915
          %v3145 = vsel %vm3120, %v3129, %v2916
          %v3146 = vsel %vm3120, %v3130, %v2917
          %v3147 = vsel %vm3120, %v3131, %v2918
          %v3148 = vsel %vm3120, %v3132, %v2919
          %v3149 = vsel %vm3120, %v3133, %v2920
          %v3150 = vsel %vm3120, %v3134, %v2921
          %v3151 = vsel %vm3120, %v3135, %v2922
          %v3152 = vsel %vm3120, %v3136, %v2923
          %v3153 = vlaneseq
          %v3154 = vshrl.u32 %v3153, 7
          %v3155 = vsub.s32 7, %v3154
          %v3156 = vrot.slane %v1547, %v3155
          %v3157 = vsub.f32 %v3156, %v1469
          %v3158 = vsub.f32 %v3156, %v1472
          %v3159 = vsub.f32 %v3156, %v1477
          %v3160 = vsub.f32 %v3156, %v1480
          %v3161 = vsub.f32 %v3156, %v1485
          %v3162 = vsub.f32 %v3156, %v1488
          %v3163 = vsub.f32 %v3156, %v1493
          %v3164 = vsub.f32 %v3156, %v1496
          %v3165 = vsub.f32 %v3156, %v1501
          %v3166 = vsub.f32 %v3156, %v1504
          %v3167 = vsub.f32 %v3156, %v1509
          %v3168 = vsub.f32 %v3156, %v1512
          %v3169 = vsub.f32 %v3156, %v1517
          %v3170 = vsub.f32 %v3156, %v1520
          %v3171 = vsub.f32 %v3156, %v1525
          %v3172 = vsub.f32 %v3156, %v1528
          %v3173 = vmax.f32 %v3157, 0.0
          %v3174 = vmax.f32 %v3158, 0.0
          %v3175 = vmax.f32 %v3159, 0.0
          %v3176 = vmax.f32 %v3160, 0.0
          %v3177 = vmax.f32 %v3161, 0.0
          %v3178 = vmax.f32 %v3162, 0.0
          %v3179 = vmax.f32 %v3163, 0.0
          %v3180 = vmax.f32 %v3164, 0.0
          %v3181 = vmax.f32 %v3165, 0.0
          %v3182 = vmax.f32 %v3166, 0.0
          %v3183 = vmax.f32 %v3167, 0.0
          %v3184 = vmax.f32 %v3168, 0.0
          %v3185 = vmax.f32 %v3169, 0.0
          %v3186 = vmax.f32 %v3170, 0.0
          %v3187 = vmax.f32 %v3171, 0.0
          %v3188 = vmax.f32 %v3172, 0.0
          %v3189 = vmul.f32 %v3173, %v3173
          %v3190 = vmul.f32 %v3174, %v3174
          %v3191 = vmul.f32 %v3175, %v3175
          %v3192 = vmul.f32 %v3176, %v3176
          %v3193 = vmul.f32 %v3177, %v3177
          %v3194 = vmul.f32 %v3178, %v3178
          %v3195 = vmul.f32 %v3179, %v3179
          %v3196 = vmul.f32 %v3180, %v3180
          %v3197 = vmul.f32 %v3181, %v3181
          %v3198 = vmul.f32 %v3182, %v3182
          %v3199 = vmul.f32 %v3183, %v3183
          %v3200 = vmul.f32 %v3184, %v3184
          %v3201 = vmul.f32 %v3185, %v3185
          %v3202 = vmul.f32 %v3186, %v3186
          %v3203 = vmul.f32 %v3187, %v3187
          %v3204 = vmul.f32 %v3188, %v3188
          %3205 = vadd.xlane.f32.xlu0 %v3189
          %v3206 = vpop.xlane.xlu0 %3205
          %3207 = vadd.xlane.f32.xlu0 %v3190
          %v3208 = vpop.xlane.xlu0 %3207
          %3209 = vadd.xlane.f32.xlu0 %v3191
          %v3210 = vpop.xlane.xlu0 %3209
          %3211 = vadd.xlane.f32.xlu0 %v3192
          %v3212 = vpop.xlane.xlu0 %3211
          %3213 = vadd.xlane.f32.xlu0 %v3193
          %v3214 = vpop.xlane.xlu0 %3213
          %3215 = vadd.xlane.f32.xlu0 %v3194
          %v3216 = vpop.xlane.xlu0 %3215
          %3217 = vadd.xlane.f32.xlu0 %v3195
          %v3218 = vpop.xlane.xlu0 %3217
          %3219 = vadd.xlane.f32.xlu0 %v3196
          %v3220 = vpop.xlane.xlu0 %3219
          %3221 = vadd.xlane.f32.xlu0 %v3197
          %v3222 = vpop.xlane.xlu0 %3221
          %3223 = vadd.xlane.f32.xlu0 %v3198
          %v3224 = vpop.xlane.xlu0 %3223
          %3225 = vadd.xlane.f32.xlu0 %v3199
          %v3226 = vpop.xlane.xlu0 %3225
          %3227 = vadd.xlane.f32.xlu0 %v3200
          %v3228 = vpop.xlane.xlu0 %3227
          %3229 = vadd.xlane.f32.xlu0 %v3201
          %v3230 = vpop.xlane.xlu0 %3229
          %3231 = vadd.xlane.f32.xlu0 %v3202
          %v3232 = vpop.xlane.xlu0 %3231
          %3233 = vadd.xlane.f32.xlu0 %v3203
          %v3234 = vpop.xlane.xlu0 %3233
          %3235 = vadd.xlane.f32.xlu0 %v3204
          %v3236 = vpop.xlane.xlu0 %3235
          %v3237 = vrsqrt.pop %v3206
          %v3238 = vmul.f32 %v3206, %v3237
          %vm3239 = vcmp.eq.f32.partialorder %v3206, inf
          %v3240 = vsel %vm3239, %v3206, %v3238
          %vm3241 = vcmp.eq.f32.partialorder %v3206, 0.0
          %v3242 = vand.u32 %v3206, 2147483648
          %v3243 = vsel %vm3241, %v3242, %v3240
          %v3244 = vrsqrt.pop %v3208
          %v3245 = vmul.f32 %v3208, %v3244
          %vm3246 = vcmp.eq.f32.partialorder %v3208, inf
          %v3247 = vsel %vm3246, %v3208, %v3245
          %vm3248 = vcmp.eq.f32.partialorder %v3208, 0.0
          %v3249 = vand.u32 %v3208, 2147483648
          %v3250 = vsel %vm3248, %v3249, %v3247
          %v3251 = vrsqrt.pop %v3210
          %v3252 = vmul.f32 %v3210, %v3251
          %vm3253 = vcmp.eq.f32.partialorder %v3210, inf
          %v3254 = vsel %vm3253, %v3210, %v3252
          %vm3255 = vcmp.eq.f32.partialorder %v3210, 0.0
          %v3256 = vand.u32 %v3210, 2147483648
          %v3257 = vsel %vm3255, %v3256, %v3254
          %v3258 = vrsqrt.pop %v3212
          %v3259 = vmul.f32 %v3212, %v3258
          %vm3260 = vcmp.eq.f32.partialorder %v3212, inf
          %v3261 = vsel %vm3260, %v3212, %v3259
          %vm3262 = vcmp.eq.f32.partialorder %v3212, 0.0
          %v3263 = vand.u32 %v3212, 2147483648
          %v3264 = vsel %vm3262, %v3263, %v3261
          %v3265 = vrsqrt.pop %v3214
          %v3266 = vmul.f32 %v3214, %v3265
          %vm3267 = vcmp.eq.f32.partialorder %v3214, inf
          %v3268 = vsel %vm3267, %v3214, %v3266
          %vm3269 = vcmp.eq.f32.partialorder %v3214, 0.0
          %v3270 = vand.u32 %v3214, 2147483648
          %v3271 = vsel %vm3269, %v3270, %v3268
          %v3272 = vrsqrt.pop %v3216
          %v3273 = vmul.f32 %v3216, %v3272
          %vm3274 = vcmp.eq.f32.partialorder %v3216, inf
          %v3275 = vsel %vm3274, %v3216, %v3273
          %vm3276 = vcmp.eq.f32.partialorder %v3216, 0.0
          %v3277 = vand.u32 %v3216, 2147483648
          %v3278 = vsel %vm3276, %v3277, %v3275
          %v3279 = vrsqrt.pop %v3218
          %v3280 = vmul.f32 %v3218, %v3279
          %vm3281 = vcmp.eq.f32.partialorder %v3218, inf
          %v3282 = vsel %vm3281, %v3218, %v3280
          %vm3283 = vcmp.eq.f32.partialorder %v3218, 0.0
          %v3284 = vand.u32 %v3218, 2147483648
          %v3285 = vsel %vm3283, %v3284, %v3282
          %v3286 = vrsqrt.pop %v3220
          %v3287 = vmul.f32 %v3220, %v3286
          %vm3288 = vcmp.eq.f32.partialorder %v3220, inf
          %v3289 = vsel %vm3288, %v3220, %v3287
          %vm3290 = vcmp.eq.f32.partialorder %v3220, 0.0
          %v3291 = vand.u32 %v3220, 2147483648
          %v3292 = vsel %vm3290, %v3291, %v3289
          %v3293 = vrsqrt.pop %v3222
          %v3294 = vmul.f32 %v3222, %v3293
          %vm3295 = vcmp.eq.f32.partialorder %v3222, inf
          %v3296 = vsel %vm3295, %v3222, %v3294
          %vm3297 = vcmp.eq.f32.partialorder %v3222, 0.0
          %v3298 = vand.u32 %v3222, 2147483648
          %v3299 = vsel %vm3297, %v3298, %v3296
          %v3300 = vrsqrt.pop %v3224
          %v3301 = vmul.f32 %v3224, %v3300
          %vm3302 = vcmp.eq.f32.partialorder %v3224, inf
          %v3303 = vsel %vm3302, %v3224, %v3301
          %vm3304 = vcmp.eq.f32.partialorder %v3224, 0.0
          %v3305 = vand.u32 %v3224, 2147483648
          %v3306 = vsel %vm3304, %v3305, %v3303
          %v3307 = vrsqrt.pop %v3226
          %v3308 = vmul.f32 %v3226, %v3307
          %vm3309 = vcmp.eq.f32.partialorder %v3226, inf
          %v3310 = vsel %vm3309, %v3226, %v3308
          %vm3311 = vcmp.eq.f32.partialorder %v3226, 0.0
          %v3312 = vand.u32 %v3226, 2147483648
          %v3313 = vsel %vm3311, %v3312, %v3310
          %v3314 = vrsqrt.pop %v3228
          %v3315 = vmul.f32 %v3228, %v3314
          %vm3316 = vcmp.eq.f32.partialorder %v3228, inf
          %v3317 = vsel %vm3316, %v3228, %v3315
          %vm3318 = vcmp.eq.f32.partialorder %v3228, 0.0
          %v3319 = vand.u32 %v3228, 2147483648
          %v3320 = vsel %vm3318, %v3319, %v3317
          %v3321 = vrsqrt.pop %v3230
          %v3322 = vmul.f32 %v3230, %v3321
          %vm3323 = vcmp.eq.f32.partialorder %v3230, inf
          %v3324 = vsel %vm3323, %v3230, %v3322
          %vm3325 = vcmp.eq.f32.partialorder %v3230, 0.0
          %v3326 = vand.u32 %v3230, 2147483648
          %v3327 = vsel %vm3325, %v3326, %v3324
          %v3328 = vrsqrt.pop %v3232
          %v3329 = vmul.f32 %v3232, %v3328
          %vm3330 = vcmp.eq.f32.partialorder %v3232, inf
          %v3331 = vsel %vm3330, %v3232, %v3329
          %vm3332 = vcmp.eq.f32.partialorder %v3232, 0.0
          %v3333 = vand.u32 %v3232, 2147483648
          %v3334 = vsel %vm3332, %v3333, %v3331
          %v3335 = vrsqrt.pop %v3234
          %v3336 = vmul.f32 %v3234, %v3335
          %vm3337 = vcmp.eq.f32.partialorder %v3234, inf
          %v3338 = vsel %vm3337, %v3234, %v3336
          %vm3339 = vcmp.eq.f32.partialorder %v3234, 0.0
          %v3340 = vand.u32 %v3234, 2147483648
          %v3341 = vsel %vm3339, %v3340, %v3338
          %v3342 = vrsqrt.pop %v3236
          %v3343 = vmul.f32 %v3236, %v3342
          %vm3344 = vcmp.eq.f32.partialorder %v3236, inf
          %v3345 = vsel %vm3344, %v3236, %v3343
          %vm3346 = vcmp.eq.f32.partialorder %v3236, 0.0
          %v3347 = vand.u32 %v3236, 2147483648
          %v3348 = vsel %vm3346, %v3347, %v3345
          %vm3349 = vcmp.eq.s32.totalorder %v1549, 7
          %v3350 = vsub.f32 0.0, %v3243
          %v3351 = vsub.f32 0.0, %v3250
          %v3352 = vsub.f32 0.0, %v3257
          %v3353 = vsub.f32 0.0, %v3264
          %v3354 = vsub.f32 0.0, %v3271
          %v3355 = vsub.f32 0.0, %v3278
          %v3356 = vsub.f32 0.0, %v3285
          %v3357 = vsub.f32 0.0, %v3292
          %v3358 = vsub.f32 0.0, %v3299
          %v3359 = vsub.f32 0.0, %v3306
          %v3360 = vsub.f32 0.0, %v3313
          %v3361 = vsub.f32 0.0, %v3320
          %v3362 = vsub.f32 0.0, %v3327
          %v3363 = vsub.f32 0.0, %v3334
          %v3364 = vsub.f32 0.0, %v3341
          %v3365 = vsub.f32 0.0, %v3348
          %v3366 = vsel %vm3349, %v3350, %v3137
          %v3367 = vsel %vm3349, %v3351, %v3138
          %v3368 = vsel %vm3349, %v3352, %v3139
          %v3369 = vsel %vm3349, %v3353, %v3140
          %v3370 = vsel %vm3349, %v3354, %v3141
          %v3371 = vsel %vm3349, %v3355, %v3142
          %v3372 = vsel %vm3349, %v3356, %v3143
          %v3373 = vsel %vm3349, %v3357, %v3144
          %v3374 = vsel %vm3349, %v3358, %v3145
          %v3375 = vsel %vm3349, %v3359, %v3146
          %v3376 = vsel %vm3349, %v3360, %v3147
          %v3377 = vsel %vm3349, %v3361, %v3148
          %v3378 = vsel %vm3349, %v3362, %v3149
          %v3379 = vsel %vm3349, %v3363, %v3150
          %v3380 = vsel %vm3349, %v3364, %v3151
          %v3381 = vsel %vm3349, %v3365, %v3152
          %3382 = vst [vmem:[%s457] sm:$0xff] %v3366
          %3383 = vst [vmem:[%s457 + $0x8] sm:$0xff] %v3367
          %3384 = vst [vmem:[%s457 + $0x10] sm:$0xff] %v3368
          %3385 = vst [vmem:[%s457 + $0x18] sm:$0xff] %v3369
          %3386 = vst [vmem:[%s457 + $0x20] sm:$0xff] %v3370
          %3387 = vst [vmem:[%s457 + $0x28] sm:$0xff] %v3371
          %3388 = vst [vmem:[%s457 + $0x30] sm:$0xff] %v3372
          %3389 = vst [vmem:[%s457 + $0x38] sm:$0xff] %v3373
          %3390 = vst [vmem:[%s457 + $0x40] sm:$0xff] %v3374
          %3391 = vst [vmem:[%s457 + $0x48] sm:$0xff] %v3375
          %3392 = vst [vmem:[%s457 + $0x50] sm:$0xff] %v3376
          %3393 = vst [vmem:[%s457 + $0x58] sm:$0xff] %v3377
          %3394 = vst [vmem:[%s457 + $0x60] sm:$0xff] %v3378
          %3395 = vst [vmem:[%s457 + $0x68] sm:$0xff] %v3379
          %3396 = vst [vmem:[%s457 + $0x70] sm:$0xff] %v3380
          %3397 = vst [vmem:[%s457 + $0x78] sm:$0xff] %v3381
          %3398 = vmax.xlane.f32.xlu0 %v3366
          %v3399 = vpop.xlane.xlu0 %3398
          %3400 = vmax.xlane.f32.xlu0 %v3367
          %v3401 = vpop.xlane.xlu0 %3400
          %3402 = vmax.xlane.f32.xlu0 %v3368
          %v3403 = vpop.xlane.xlu0 %3402
          %3404 = vmax.xlane.f32.xlu0 %v3369
          %v3405 = vpop.xlane.xlu0 %3404
          %3406 = vmax.xlane.f32.xlu0 %v3370
          %v3407 = vpop.xlane.xlu0 %3406
          %3408 = vmax.xlane.f32.xlu0 %v3371
          %v3409 = vpop.xlane.xlu0 %3408
          %3410 = vmax.xlane.f32.xlu0 %v3372
          %v3411 = vpop.xlane.xlu0 %3410
          %3412 = vmax.xlane.f32.xlu0 %v3373
          %v3413 = vpop.xlane.xlu0 %3412
          %3414 = vmax.xlane.f32.xlu0 %v3374
          %v3415 = vpop.xlane.xlu0 %3414
          %3416 = vmax.xlane.f32.xlu0 %v3375
          %v3417 = vpop.xlane.xlu0 %3416
          %3418 = vmax.xlane.f32.xlu0 %v3376
          %v3419 = vpop.xlane.xlu0 %3418
          %3420 = vmax.xlane.f32.xlu0 %v3377
          %v3421 = vpop.xlane.xlu0 %3420
          %3422 = vmax.xlane.f32.xlu0 %v3378
          %v3423 = vpop.xlane.xlu0 %3422
          %3424 = vmax.xlane.f32.xlu0 %v3379
          %v3425 = vpop.xlane.xlu0 %3424
          %3426 = vmax.xlane.f32.xlu0 %v3380
          %v3427 = vpop.xlane.xlu0 %3426
          %3428 = vmax.xlane.f32.xlu0 %v3381
          %v3429 = vpop.xlane.xlu0 %3428
          %v3430 = vsub.f32 %v3366, %v3399
          %v3431 = vsub.f32 %v3367, %v3401
          %v3432 = vsub.f32 %v3368, %v3403
          %v3433 = vsub.f32 %v3369, %v3405
          %v3434 = vsub.f32 %v3370, %v3407
          %v3435 = vsub.f32 %v3371, %v3409
          %v3436 = vsub.f32 %v3372, %v3411
          %v3437 = vsub.f32 %v3373, %v3413
          %v3438 = vsub.f32 %v3374, %v3415
          %v3439 = vsub.f32 %v3375, %v3417
          %v3440 = vsub.f32 %v3376, %v3419
          %v3441 = vsub.f32 %v3377, %v3421
          %v3442 = vsub.f32 %v3378, %v3423
          %v3443 = vsub.f32 %v3379, %v3425
          %v3444 = vsub.f32 %v3380, %v3427
          %v3445 = vsub.f32 %v3381, %v3429
          %v3446 = vmul.f32 %v3430, 1.442695
          %v3447 = vpow.pop %v3446
          %v3448 = vmul.f32 %v3431, 1.442695
          %v3449 = vpow.pop %v3448
          %v3450 = vmul.f32 %v3432, 1.442695
          %v3451 = vpow.pop %v3450
          %v3452 = vmul.f32 %v3433, 1.442695
          %v3453 = vpow.pop %v3452
          %v3454 = vmul.f32 %v3434, 1.442695
          %v3455 = vpow.pop %v3454
          %v3456 = vmul.f32 %v3435, 1.442695
          %v3457 = vpow.pop %v3456
          %v3458 = vmul.f32 %v3436, 1.442695
          %v3459 = vpow.pop %v3458
          %v3460 = vmul.f32 %v3437, 1.442695
          %v3461 = vpow.pop %v3460
          %v3462 = vmul.f32 %v3438, 1.442695
          %v3463 = vpow.pop %v3462
          %v3464 = vmul.f32 %v3439, 1.442695
          %v3465 = vpow.pop %v3464
          %v3466 = vmul.f32 %v3440, 1.442695
          %v3467 = vpow.pop %v3466
          %v3468 = vmul.f32 %v3441, 1.442695
          %v3469 = vpow.pop %v3468
          %v3470 = vmul.f32 %v3442, 1.442695
          %v3471 = vpow.pop %v3470
          %v3472 = vmul.f32 %v3443, 1.442695
          %v3473 = vpow.pop %v3472
          %v3474 = vmul.f32 %v3444, 1.442695
          %v3475 = vpow.pop %v3474
          %v3476 = vmul.f32 %v3445, 1.442695
          %v3477 = vpow.pop %v3476
          %3478 = vadd.xlane.f32.xlu0 %v3447
          %v3479 = vpop.xlane.xlu0 %3478
          %3480 = vadd.xlane.f32.xlu0 %v3449
          %v3481 = vpop.xlane.xlu0 %3480
          %3482 = vadd.xlane.f32.xlu0 %v3451
          %v3483 = vpop.xlane.xlu0 %3482
          %3484 = vadd.xlane.f32.xlu0 %v3453
          %v3485 = vpop.xlane.xlu0 %3484
          %3486 = vadd.xlane.f32.xlu0 %v3455
          %v3487 = vpop.xlane.xlu0 %3486
          %3488 = vadd.xlane.f32.xlu0 %v3457
          %v3489 = vpop.xlane.xlu0 %3488
          %3490 = vadd.xlane.f32.xlu0 %v3459
          %v3491 = vpop.xlane.xlu0 %3490
          %3492 = vadd.xlane.f32.xlu0 %v3461
          %v3493 = vpop.xlane.xlu0 %3492
          %3494 = vadd.xlane.f32.xlu0 %v3463
          %v3495 = vpop.xlane.xlu0 %3494
          %3496 = vadd.xlane.f32.xlu0 %v3465
          %v3497 = vpop.xlane.xlu0 %3496
          %3498 = vadd.xlane.f32.xlu0 %v3467
          %v3499 = vpop.xlane.xlu0 %3498
          %3500 = vadd.xlane.f32.xlu0 %v3469
          %v3501 = vpop.xlane.xlu0 %3500
          %3502 = vadd.xlane.f32.xlu0 %v3471
          %v3503 = vpop.xlane.xlu0 %3502
          %3504 = vadd.xlane.f32.xlu0 %v3473
          %v3505 = vpop.xlane.xlu0 %3504
          %3506 = vadd.xlane.f32.xlu0 %v3475
          %v3507 = vpop.xlane.xlu0 %3506
          %3508 = vadd.xlane.f32.xlu0 %v3477
          %v3509 = vpop.xlane.xlu0 %3508
          %v3510 = vrcp.pop %v3479
          %v3511 = vmul.f32 %v3447, %v3510
          %v3512 = vrcp.pop %v3481
          %v3513 = vmul.f32 %v3449, %v3512
          %v3514 = vrcp.pop %v3483
          %v3515 = vmul.f32 %v3451, %v3514
          %v3516 = vrcp.pop %v3485
          %v3517 = vmul.f32 %v3453, %v3516
          %v3518 = vrcp.pop %v3487
          %v3519 = vmul.f32 %v3455, %v3518
          %v3520 = vrcp.pop %v3489
          %v3521 = vmul.f32 %v3457, %v3520
          %v3522 = vrcp.pop %v3491
          %v3523 = vmul.f32 %v3459, %v3522
          %v3524 = vrcp.pop %v3493
          %v3525 = vmul.f32 %v3461, %v3524
          %v3526 = vrcp.pop %v3495
          %v3527 = vmul.f32 %v3463, %v3526
          %v3528 = vrcp.pop %v3497
          %v3529 = vmul.f32 %v3465, %v3528
          %v3530 = vrcp.pop %v3499
          %v3531 = vmul.f32 %v3467, %v3530
          %v3532 = vrcp.pop %v3501
          %v3533 = vmul.f32 %v3469, %v3532
          %v3534 = vrcp.pop %v3503
          %v3535 = vmul.f32 %v3471, %v3534
          %v3536 = vrcp.pop %v3505
          %v3537 = vmul.f32 %v3473, %v3536
          %v3538 = vrcp.pop %v3507
          %v3539 = vmul.f32 %v3475, %v3538
          %v3540 = vrcp.pop %v3509
          %v3541 = vmul.f32 %v3477, %v3540
          %3542 = vst [vmem:[%s464] sm:$0xff] %v3511
          %3543 = vst [vmem:[%s464 + $0x8] sm:$0xff] %v3513
          %3544 = vst [vmem:[%s464 + $0x10] sm:$0xff] %v3515
          %3545 = vst [vmem:[%s464 + $0x18] sm:$0xff] %v3517
          %3546 = vst [vmem:[%s464 + $0x20] sm:$0xff] %v3519
          %3547 = vst [vmem:[%s464 + $0x28] sm:$0xff] %v3521
          %3548 = vst [vmem:[%s464 + $0x30] sm:$0xff] %v3523
          %3549 = vst [vmem:[%s464 + $0x38] sm:$0xff] %v3525
          %3550 = vst [vmem:[%s464 + $0x40] sm:$0xff] %v3527
          %3551 = vst [vmem:[%s464 + $0x48] sm:$0xff] %v3529
          %3552 = vst [vmem:[%s464 + $0x50] sm:$0xff] %v3531
          %3553 = vst [vmem:[%s464 + $0x58] sm:$0xff] %v3533
          %3554 = vst [vmem:[%s464 + $0x60] sm:$0xff] %v3535
          %3555 = vst [vmem:[%s464 + $0x68] sm:$0xff] %v3537
          %3556 = vst [vmem:[%s464 + $0x70] sm:$0xff] %v3539
          %3557 = vst [vmem:[%s464 + $0x78] sm:$0xff] %v3541
        $region68: #{tpu_custom_call.1} parent=43 // pred_fallthru
          _
        %s3558 = sand.u32 %s195, 1
        %s3559 = scalar_lea.sflag [#allocation5], %s3558
        %s3560 = sand.u32 %s195, 1
        %s3561 = smul.addr %s3560, 128
        %s3562 = scalar_lea.vmem [#allocation11], %s3561
        %s3563 = sand.u32 %s37, 1
        %s3564 = scalar_lea.sflag [#allocation13], %s3563
        %s3565 = sand.u32 %s221, 1
        %s3566 = smul.addr %s3565, 128
        %s3567 = scalar_lea.vmem [#allocation12], %s3566
        %s3568 = sand.u32 %s37, 1
        %s3569 = scalar_lea.sflag [#allocation13], %s3568
        %s3570 = sand.u32 %s247, 1
        %s3571 = smul.addr %s3570, 128
        %s3572 = scalar_lea.vmem [#allocation14], %s3571
        %s3573 = sand.u32 %s273, 1
        %s3574 = scalar_lea.sflag [#allocation16], %s3573
        %s3575 = sand.u32 %s273, 1
        %s3576 = smul.addr %s3575, 128
        %s3577 = scalar_lea.vmem [#allocation15], %s3576
        // Predicated region
        $region69: #{tpu_custom_call.1} parent=43 // pred_check
          %p3578 = pneg %p205
        $region70: #{tpu_custom_call.1} parent=43 // pred_check_branch
          %3580 = sbr.rel (%p3578) target = $region72
        $region71: #{tpu_custom_call.1} parent=43 // pred_region
          %s3581 = smul.u32 16, %s41
          %s3583 = ssub.s32 2048, 2048
          %3584 = vsyncadd %s3559, %s3583
          %s3585 = smul.addr %s3581, 128
          %s3586 = scalar_lea.hbm %s6, %s3585
          %s3587 = sshll.u32 %s3562, 4
          %s3588 = int_to_ptr.vmem [resolvable:$true] %s3587
          %3593 = dma.vmem_to_hbm [thread:$0]  %s3588, 2048, %s3586, %s3559, 128, 128, 8
        $region72: #{tpu_custom_call.1} parent=43 // pred_fallthru
          _
        // Predicated region
        $region73: #{tpu_custom_call.1} parent=43 // pred_check
          %p3594 = pneg %p231
        $region74: #{tpu_custom_call.1} parent=43 // pred_check_branch
          %3596 = sbr.rel (%p3594) target = $region76
        $region75: #{tpu_custom_call.1} parent=43 // pred_region
          %s3597 = smul.u32 16, %s41
          %s3599 = ssub.s32 2048, 2048
          %3600 = vsyncadd %s3564, %s3599
          %s3601 = smul.addr %s3597, 128
          %s3602 = scalar_lea.hbm %s7, %s3601
          %s3603 = sshll.u32 %s3567, 4
          %s3604 = int_to_ptr.vmem [resolvable:$true] %s3603
          %3609 = dma.vmem_to_hbm [thread:$0]  %s3604, 2048, %s3602, %s3564, 128, 128, 8
        $region76: #{tpu_custom_call.1} parent=43 // pred_fallthru
          _
        // Predicated region
        $region77: #{tpu_custom_call.1} parent=43 // pred_check
          %p3610 = pneg %p257
        $region78: #{tpu_custom_call.1} parent=43 // pred_check_branch
          %3612 = sbr.rel (%p3610) target = $region80
        $region79: #{tpu_custom_call.1} parent=43 // pred_region
          %s3613 = smul.u32 16, %s41
          %s3615 = ssub.s32 2048, 2048
          %3616 = vsyncadd %s3569, %s3615
          %s3617 = smul.addr %s3613, 128
          %s3618 = scalar_lea.hbm %s8, %s3617
          %s3619 = sshll.u32 %s3572, 4
          %s3620 = int_to_ptr.vmem [resolvable:$true] %s3619
          %3625 = dma.vmem_to_hbm [thread:$0]  %s3620, 2048, %s3618, %s3569, 128, 128, 8
        $region80: #{tpu_custom_call.1} parent=43 // pred_fallthru
          _
        // Predicated region
        $region81: #{tpu_custom_call.1} parent=43 // pred_check
          %p3626 = pneg %p283
        $region82: #{tpu_custom_call.1} parent=43 // pred_check_branch
          %3628 = sbr.rel (%p3626) target = $region84
        $region83: #{tpu_custom_call.1} parent=43 // pred_region
          %s3629 = smul.u32 16, %s41
          %s3631 = ssub.s32 2048, 2048
          %3632 = vsyncadd %s3574, %s3631
          %s3633 = smul.addr %s3629, 128
          %s3634 = scalar_lea.hbm %s9, %s3633
          %s3635 = sshll.u32 %s3577, 4
          %s3636 = int_to_ptr.vmem [resolvable:$true] %s3635
          %3641 = dma.vmem_to_hbm [thread:$0]  %s3636, 2048, %s3634, %s3574, 128, 128, 8
        $region84: #{tpu_custom_call.1} parent=43 // pred_fallthru
          _
      $region44: #{tpu_custom_call.1} parent=5 // pred_fallthru
        _
      %p3642 = scmp.le.s32.totalorder 2, %s32
      // Predicated region
      $region85: #{tpu_custom_call.1} parent=5 // pred_check
        %p3643 = pneg %p3642
      $region86: #{tpu_custom_call.1} parent=5 // pred_check_branch
        %3645 = sbr.rel (%p3643) target = $region88
      $region87: #{tpu_custom_call.1} parent=5 // pred_region
        %s3646 = ssub.s32 %s32, 2
        // Predicated region
        $region89: #{tpu_custom_call.1} parent=87 // pred_check
          %p3647 = pneg %p211
        $region90: #{tpu_custom_call.1} parent=87 // pred_check_branch
          %3649 = sbr.rel (%p3647) target = $region92
        $region91: #{tpu_custom_call.1} parent=87 // pred_region
          %s3650 = sand.u32 %s196, 1
          %s3651 = scalar_lea.sflag [#allocation5], %s3650
          %s3652 = sand.u32 %s196, 1
          %s3653 = smul.addr %s3652, 128
          %s3654 = scalar_lea.vmem [#allocation11], %s3653
          %3655 = dma.done %s3651, 2048
        $region92: #{tpu_custom_call.1} parent=87 // pred_fallthru
          _
        // Predicated region
        $region93: #{tpu_custom_call.1} parent=87 // pred_check
          %p3656 = pneg %p237
        $region94: #{tpu_custom_call.1} parent=87 // pred_check_branch
          %3658 = sbr.rel (%p3656) target = $region96
        $region95: #{tpu_custom_call.1} parent=87 // pred_region
          %s3659 = sand.u32 %s38, 1
          %s3660 = scalar_lea.sflag [#allocation13], %s3659
          %s3661 = sand.u32 %s222, 1
          %s3662 = smul.addr %s3661, 128
          %s3663 = scalar_lea.vmem [#allocation12], %s3662
          %3664 = dma.done %s3660, 2048
        $region96: #{tpu_custom_call.1} parent=87 // pred_fallthru
          _
        // Predicated region
        $region97: #{tpu_custom_call.1} parent=87 // pred_check
          %p3665 = pneg %p263
        $region98: #{tpu_custom_call.1} parent=87 // pred_check_branch
          %3667 = sbr.rel (%p3665) target = $region100
        $region99: #{tpu_custom_call.1} parent=87 // pred_region
          %s3668 = sand.u32 %s38, 1
          %s3669 = scalar_lea.sflag [#allocation13], %s3668
          %s3670 = sand.u32 %s248, 1
          %s3671 = smul.addr %s3670, 128
          %s3672 = scalar_lea.vmem [#allocation14], %s3671
          %3673 = dma.done %s3669, 2048
        $region100: #{tpu_custom_call.1} parent=87 // pred_fallthru
          _
        // Predicated region
        $region101: #{tpu_custom_call.1} parent=87 // pred_check
          %p3674 = pneg %p289
        $region102: #{tpu_custom_call.1} parent=87 // pred_check_branch
          %3676 = sbr.rel (%p3674) target = $region104
        $region103: #{tpu_custom_call.1} parent=87 // pred_region
          %s3677 = sand.u32 %s274, 1
          %s3678 = scalar_lea.sflag [#allocation16], %s3677
          %s3679 = sand.u32 %s274, 1
          %s3680 = smul.addr %s3679, 128
          %s3681 = scalar_lea.vmem [#allocation15], %s3680
          %3682 = dma.done %s3678, 2048
        $region104: #{tpu_custom_call.1} parent=87 // pred_fallthru
          _
      $region88: #{tpu_custom_call.1} parent=5 // pred_fallthru
        _
    $region6: #{tpu_custom_call.1} parent=1 // loop_footer
      %s36 = sadd.s32 1, %s32
    $region7: #{tpu_custom_call.1} parent=1 // loop_footer_branch
      %31 = sbr.rel target = $region3
    $region8: #{tpu_custom_call.1} parent=1 // loop_exit
      _
    %3683 = vsyncpa [#allocation4], 1
    %s3684 = scalar_lea.sflag [#allocation4], 1
    %3685 = vsyncpa %s3684, 1
    %3686 = vsyncpa [#allocation7], 1
    %s3687 = scalar_lea.sflag [#allocation7], 1
    %3688 = vsyncpa %s3687, 1
    %3689 = vsyncpa [#allocation10], 1
    %3690 = vsyncpa [#allocation5], 1
    %s3691 = scalar_lea.sflag [#allocation5], 1
    %3692 = vsyncpa %s3691, 1
    %3693 = vsyncpa [#allocation13], 1
    %s3694 = scalar_lea.sflag [#allocation13], 1
    %3695 = vsyncpa %s3694, 1
    %3696 = vsyncpa [#allocation16], 1
    %s3697 = scalar_lea.sflag [#allocation16], 1
    %3698 = vsyncpa %s3697, 1

</llo_original>
